<compile_context>
chip_gen: v7x
topology: tpu7x:2x2x1
jax: 0.10.0
libtpu: 0.0.40
codegen_flags: <defaults>
</compile_context>

<pallas_src>
import functools

import jax
import jax.numpy as jnp
from jax.experimental import pallas as pl
from jax.experimental.pallas import tpu as pltpu


def _round_up(n, m):
    return ((n + m - 1) // m) * m


# ----------------------------- fused kernel ----------------------------------
def _make_fused_kernel(num_layers, T, Bp, Hp):
    """Kernel over refs:
       [x2d, (wih, whh, b) * num_layers, wfc, bfc, out, xproj_scr, hseq_scr]

       x2d       : (T*Bp, D_in)   time-major, batch-padded input
       wih       : (D_in_p, 4*Hp) W_ih^T, gate-blocks lane-padded
       whh       : (Hp, 4*Hp)     W_hh^T
       b         : (1, 4*Hp)      b_ih + b_hh
       wfc       : (Hp, Op)       W_fc^T
       bfc       : (1, Op)
       out       : (Bp, Op)
       xproj_scr : (T*Bp, 4*Hp)   hoisted input projection (VMEM)
       hseq_scr  : (T*Bp, Hp)     inter-layer hidden sequence (VMEM)
    """

    def kernel(*refs):
        x_ref = refs[0]
        layer_refs = refs[1:1 + 3 * num_layers]
        wfc_ref = refs[1 + 3 * num_layers]
        bfc_ref = refs[2 + 3 * num_layers]
        out_ref = refs[3 + 3 * num_layers]
        xproj_ref = refs[4 + 3 * num_layers]
        hseq_ref = refs[5 + 3 * num_layers]

        h_last = None
        for layer in range(num_layers):
            wih_ref = layer_refs[3 * layer + 0]
            whh_ref = layer_refs[3 * layer + 1]
            b_ref = layer_refs[3 * layer + 2]

            # Hoisted input projection for ALL timesteps: one tall MXU matmul,
            # bias folded in.  Only h @ W_hh remains on the serial path below.
            x_in = x_ref[...] if layer == 0 else hseq_ref[...]
            xproj_ref[...] = (
                jnp.dot(x_in, wih_ref[...], preferred_element_type=jnp.float32)
                + b_ref[...]
            )

            write_seq = layer < num_layers - 1

            def step(t, carry):
                h, c = carry
                row = t * Bp  # 8-sublane aligned row block for timestep t
                gates = xproj_ref[pl.ds(row, Bp), :] + jnp.dot(
                    h, whh_ref[...], preferred_element_type=jnp.float32
                )  # (Bp, 4*Hp), gate order i,f,g,o; each gate is 128-lane aligned
                i_g = jax.nn.sigmoid(gates[:, 0 * Hp:1 * Hp])
                f_g = jax.nn.sigmoid(gates[:, 1 * Hp:2 * Hp])
                g_g = jnp.tanh(gates[:, 2 * Hp:3 * Hp])
                o_g = jax.nn.sigmoid(gates[:, 3 * Hp:4 * Hp])
                c_new = f_g * c + i_g * g_g
                h_new = o_g * jnp.tanh(c_new)
                if write_seq:  # next layer's input stays in VMEM scratch
                    hseq_ref[pl.ds(row, Bp), :] = h_new
                return (h_new, c_new)

            init = (jnp.zeros((Bp, Hp), jnp.float32),
                    jnp.zeros((Bp, Hp), jnp.float32))
            h_last, _ = jax.lax.fori_loop(0, T, step, init, unroll=True)

        # Fused final Linear on the last timestep of the top layer.
        out_ref[...] = (
            jnp.dot(h_last, wfc_ref[...], preferred_element_type=jnp.float32)
            + bfc_ref[...]
        )

    return kernel


def _fused_forward(x2d, kparams, *, T, Bp, Hp, Op, num_layers):
    G = 4 * Hp
    D_in = x2d.shape[1]

    flat_inputs = [x2d]
    in_specs = [pl.BlockSpec((T * Bp, D_in), lambda i: (0, 0))]
    for (wih, whh, b) in kparams["lstm"]:
        flat_inputs += [wih, whh, b]
        in_specs += [
            pl.BlockSpec(wih.shape, lambda i: (0, 0)),
            pl.BlockSpec(whh.shape, lambda i: (0, 0)),
            pl.BlockSpec(b.shape, lambda i: (0, 0)),
        ]
    wfc, bfc = kparams["fc"]
    flat_inputs += [wfc, bfc]
    in_specs += [
        pl.BlockSpec(wfc.shape, lambda i: (0, 0)),
        pl.BlockSpec(bfc.shape, lambda i: (0, 0)),
    ]

    return pl.pallas_call(
        _make_fused_kernel(num_layers, T, Bp, Hp),
        out_shape=jax.ShapeDtypeStruct((Bp, Op), jnp.float32),
        grid_spec=pltpu.PrefetchScalarGridSpec(
            num_scalar_prefetch=0,
            grid=(1,),
            in_specs=in_specs,
            out_specs=pl.BlockSpec((Bp, Op), lambda i: (0, 0)),
            scratch_shapes=[
                pltpu.VMEM((T * Bp, G), jnp.float32),   # hoisted input projections
                pltpu.VMEM((T * Bp, Hp), jnp.float32),  # inter-layer hidden sequence
            ],
        ),
        compiler_params=pltpu.CompilerParams(
            dimension_semantics=("arbitrary",),
        ),
    )(*flat_inputs)


# ------------------------- parameter preparation ------------------------------
def _pad_gate_axis(w, H, Hp):
    """Zero-pad each of the 4 gate blocks on the last axis from H to Hp."""
    lead = w.shape[:-1]
    w4 = w.reshape(lead + (4, H))
    w4 = jnp.pad(w4, [(0, 0)] * (len(lead) + 1) + [(0, Hp - H)])
    return w4.reshape(lead + (4 * Hp,))


def prepare_params(params, input_size, hidden_size, output_size):
    """Transpose / combine / lane-pad the PyTorch-layout params once."""
    Hp = _round_up(hidden_size, 128)   # lane-align gate blocks and hidden state
    Op = _round_up(output_size, 128)   # lane-dense final store

    lstm = []
    for li, (w_ih, w_hh, b_ih, b_hh) in enumerate(params["lstm"]):
        d_in = input_size if li == 0 else hidden_size
        d_in_p = d_in if li == 0 else Hp
        wih_t = _pad_gate_axis(w_ih.T, hidden_size, Hp)          # (d_in, 4Hp)
        wih_t = jnp.pad(wih_t, ((0, d_in_p - d_in), (0, 0)))     # (d_in_p, 4Hp)
        whh_t = _pad_gate_axis(w_hh.T, hidden_size, Hp)          # (H, 4Hp)
        whh_t = jnp.pad(whh_t, ((0, Hp - hidden_size), (0, 0)))  # (Hp, 4Hp)
        bias = _pad_gate_axis((b_ih + b_hh).reshape(1, -1), hidden_size, Hp)
        lstm.append((wih_t, whh_t, bias))

    w_fc, b_fc = params["fc"]
    wfc_t = jnp.pad(w_fc.T, ((0, Hp - hidden_size), (0, Op - output_size)))
    bfc = jnp.pad(b_fc, (0, Op - output_size)).reshape(1, Op)
    return {"lstm": lstm, "fc": (wfc_t, bfc)}


def init_params(key, input_size, hidden_size, num_layers, output_size):
    """Deterministic synthetic params, PyTorch nn.LSTM / nn.Linear shapes."""
    params = {"lstm": [], "fc": None}
    k = 1.0 / jnp.sqrt(hidden_size)
    for layer in range(num_layers):
        d_in = input_size if layer == 0 else hidden_size
        key, k1, k2, k3, k4 = jax.random.split(key, 5)
        w_ih = jax.random.uniform(k1, (4 * hidden_size, d_in), jnp.float32, -k, k)
        w_hh = jax.random.uniform(k2, (4 * hidden_size, hidden_size), jnp.float32, -k, k)
        b_ih = jax.random.uniform(k3, (4 * hidden_size,), jnp.float32, -k, k)
        b_hh = jax.random.uniform(k4, (4 * hidden_size,), jnp.float32, -k, k)
        params["lstm"].append((w_ih, w_hh, b_ih, b_hh))
    key, k1, k2 = jax.random.split(key, 3)
    w_fc = jax.random.uniform(k1, (output_size, hidden_size), jnp.float32, -k, k)
    b_fc = jax.random.uniform(k2, (output_size,), jnp.float32, -k, k)
    params["fc"] = (w_fc, b_fc)
    return params


# ------------------------------- forward --------------------------------------
@functools.partial(jax.jit, static_argnames=("output_size",))
def lstm_model_forward(x, kparams, *, output_size):
    """x: (B, input_size, T) — same convention as the PyTorch module input."""
    B, D_in, T = x.shape
    Hp = kparams["lstm"][0][1].shape[0]
    Op = kparams["fc"][1].shape[1]
    Bp = _round_up(max(B, 8), 8)

    # permute(0,2,1) then time-major, fused into a single transpose; pad batch
    # to a sublane multiple (padded rows are independent and discarded).
    x_t = jnp.transpose(x, (2, 0, 1)).astype(jnp.float32)        # (T, B, D_in)
    x_t = jnp.pad(x_t, ((0, 0), (0, Bp - B), (0, 0)))            # (T, Bp, D_in)
    x2d = x_t.reshape(T * Bp, D_in)

    out_pad = _fused_forward(
        x2d, kparams, T=T, Bp=Bp, Hp=Hp, Op=Op, num_layers=len(kparams["lstm"])
    )
    return out_pad[:B, :output_size]


# --------------------------- pure-JAX reference --------------------------------
def reference_forward(x, params):
    x_btd = jnp.transpose(x, (0, 2, 1)).astype(jnp.float32)      # (B, T, D)
    H = params["lstm"][0][1].shape[1]
    h_seq = x_btd
    for (w_ih, w_hh, b_ih, b_hh) in params["lstm"]:
        B = h_seq.shape[0]

        def cell(carry, x_t):
            h, c = carry
            gates = x_t @ w_ih.T + b_ih + h @ w_hh.T + b_hh
            i, f, g, o = jnp.split(gates, 4, axis=-1)
            c = jax.nn.sigmoid(f) * c + jax.nn.sigmoid(i) * jnp.tanh(g)
            h = jax.nn.sigmoid(o) * jnp.tanh(c)
            return (h, c), h

        init = (jnp.zeros((B, H), jnp.float32), jnp.zeros((B, H), jnp.float32))
        _, hs = jax.lax.scan(cell, init, jnp.swapaxes(h_seq, 0, 1))
        h_seq = jnp.swapaxes(hs, 0, 1)
    w_fc, b_fc = params["fc"]
    return h_seq[:, -1, :] @ w_fc.T + b_fc


if __name__ == "__main__":
    B, INPUT_SIZE, SEQ, HIDDEN, LAYERS, OUT = 2, 4, 8, 32, 2, 3

    key = jax.random.PRNGKey(0)
    key, kx, kp = jax.random.split(key, 3)
    x = jax.random.normal(kx, (B, INPUT_SIZE, SEQ), dtype=jnp.float32)
    params = init_params(kp, INPUT_SIZE, HIDDEN, LAYERS, OUT)
    kparams = prepare_params(params, INPUT_SIZE, HIDDEN, OUT)

    out = lstm_model_forward(x, kparams, output_size=OUT)
    jax.block_until_ready(out)
    assert out.shape == (B, OUT), out.shape

    ref = reference_forward(x, params)
    assert jnp.allclose(out, ref, rtol=5e-3, atol=5e-3), (out, ref)

    print("KERNEL_OK")
</pallas_src>

<mosaic_0001>
module attributes {stable_mosaic.version = 11 : i64} {
  func.func @kernel(%arg0: i32, %arg1: memref<64x4xf32, #tpu.memory_space<vmem>>, %arg2: memref<4x512xf32, #tpu.memory_space<vmem>>, %arg3: memref<128x512xf32, #tpu.memory_space<vmem>>, %arg4: memref<1x512xf32, #tpu.memory_space<vmem>>, %arg5: memref<128x512xf32, #tpu.memory_space<vmem>>, %arg6: memref<128x512xf32, #tpu.memory_space<vmem>>, %arg7: memref<1x512xf32, #tpu.memory_space<vmem>>, %arg8: memref<128x128xf32, #tpu.memory_space<vmem>>, %arg9: memref<1x128xf32, #tpu.memory_space<vmem>>, %arg10: memref<8x128xf32, #tpu.memory_space<vmem>>, %arg11: memref<64x512xf32, #tpu.memory_space<vmem>>, %arg12: memref<64x128xf32, #tpu.memory_space<vmem>>) attributes {dimension_semantics = [#tpu.dimension_semantics<arbitrary>], iteration_bounds = array<i64: 1>, scalar_prefetch = 0 : i64, scratch_operands = 2 : i64, tpu.core_type = #tpu.core_type<tc>, window_params = [{pipeline_mode = #tpu.pipeline_mode<synchronous>, transform_indices = @transform_0, window_bounds = array<i64: 64, 4>}, {pipeline_mode = #tpu.pipeline_mode<synchronous>, transform_indices = @transform_1, window_bounds = array<i64: 4, 512>}, {pipeline_mode = #tpu.pipeline_mode<synchronous>, transform_indices = @transform_2, window_bounds = array<i64: 128, 512>}, {pipeline_mode = #tpu.pipeline_mode<synchronous>, transform_indices = @transform_3, window_bounds = array<i64: 1, 512>}, {pipeline_mode = #tpu.pipeline_mode<synchronous>, transform_indices = @transform_4, window_bounds = array<i64: 128, 512>}, {pipeline_mode = #tpu.pipeline_mode<synchronous>, transform_indices = @transform_5, window_bounds = array<i64: 128, 512>}, {pipeline_mode = #tpu.pipeline_mode<synchronous>, transform_indices = @transform_6, window_bounds = array<i64: 1, 512>}, {pipeline_mode = #tpu.pipeline_mode<synchronous>, transform_indices = @transform_7, window_bounds = array<i64: 128, 128>}, {pipeline_mode = #tpu.pipeline_mode<synchronous>, transform_indices = @transform_8, window_bounds = array<i64: 1, 128>}, {pipeline_mode = #tpu.pipeline_mode<synchronous>, transform_indices = @transform_9, window_bounds = array<i64: 8, 128>}]} {
    %c0 = arith.constant 0 : index
    %c0_0 = arith.constant 0 : index
    %0 = vector.load %arg1[%c0, %c0_0] : memref<64x4xf32, #tpu.memory_space<vmem>>, vector<64x4xf32>
    %c0_1 = arith.constant 0 : index
    %c0_2 = arith.constant 0 : index
    %1 = vector.load %arg2[%c0_1, %c0_2] : memref<4x512xf32, #tpu.memory_space<vmem>>, vector<4x512xf32>
    %cst = arith.constant dense<0.000000e+00> : vector<64x512xf32>
    %2 = tpu.matmul %0, %1, %cst {dimension_numbers = #tpu.dot_dimension_numbers<[1], [0], [0], [1], [0, 0, 1, 1], [], []>} : vector<64x4xf32>, vector<4x512xf32>, vector<64x512xf32> -> vector<64x512xf32>
    %c0_3 = arith.constant 0 : index
    %c0_4 = arith.constant 0 : index
    %3 = vector.load %arg4[%c0_3, %c0_4] : memref<1x512xf32, #tpu.memory_space<vmem>>, vector<1x512xf32>
    %4 = vector.broadcast %3 : vector<1x512xf32> to vector<64x512xf32>
    %5 = arith.addf %2, %4 : vector<64x512xf32>
    %c0_5 = arith.constant 0 : index
    %c0_6 = arith.constant 0 : index
    %6 = vector.load %arg11[%c0_5, %c0_6] : memref<64x512xf32, #tpu.memory_space<vmem>>, vector<64x512xf32>
    tpu.vector_store %arg11[%c0_5, %c0_6], %5 {strides = array<i32>} : memref<64x512xf32, #tpu.memory_space<vmem>>, vector<64x512xf32>,
    %cst_7 = arith.constant 0.000000e+00 : f32
    %7 = vector.broadcast %cst_7 : f32 to vector<8x128xf32>
    %cst_8 = arith.constant 0.000000e+00 : f32
    %8 = vector.broadcast %cst_8 : f32 to vector<8x128xf32>
    %c0_i32 = arith.constant 0 : i32
    %c8_i32 = arith.constant 8 : i32
    %9 = arith.muli %c0_i32, %c8_i32 : i32
    %10 = arith.index_cast %9 : i32 to index
    %c0_9 = arith.constant 0 : index
    %11 = vector.load %arg11[%10, %c0_9] : memref<64x512xf32, #tpu.memory_space<vmem>>, vector<8x512xf32>
    %c0_10 = arith.constant 0 : index
    %c0_11 = arith.constant 0 : index
    %12 = vector.load %arg3[%c0_10, %c0_11] : memref<128x512xf32, #tpu.memory_space<vmem>>, vector<128x512xf32>
    %cst_12 = arith.constant dense<0.000000e+00> : vector<8x512xf32>
    %13 = tpu.matmul %7, %12, %cst_12 {dimension_numbers = #tpu.dot_dimension_numbers<[1], [0], [0], [1], [0, 0, 1, 1], [], []>} : vector<8x128xf32>, vector<128x512xf32>, vector<8x512xf32> -> vector<8x512xf32>
    %14 = arith.addf %11, %13 : vector<8x512xf32>
    %15 = vector.extract_strided_slice %14 {offsets = [0, 0], sizes = [8, 128], strides = [1, 1]} : vector<8x512xf32> to vector<8x128xf32>
    %16 = arith.negf %15 : vector<8x128xf32>
    %17 = math.exp %16 : vector<8x128xf32>
    %cst_13 = arith.constant 1.000000e+00 : f32
    %18 = vector.broadcast %cst_13 : f32 to vector<8x128xf32>
    %19 = arith.addf %18, %17 : vector<8x128xf32>
    %20 = arith.divf %18, %19 : vector<8x128xf32>
    %21 = vector.extract_strided_slice %14 {offsets = [0, 128], sizes = [8, 128], strides = [1, 1]} : vector<8x512xf32> to vector<8x128xf32>
    %22 = arith.negf %21 : vector<8x128xf32>
    %23 = math.exp %22 : vector<8x128xf32>
    %cst_14 = arith.constant 1.000000e+00 : f32
    %24 = vector.broadcast %cst_14 : f32 to vector<8x128xf32>
    %25 = arith.addf %24, %23 : vector<8x128xf32>
    %26 = arith.divf %24, %25 : vector<8x128xf32>
    %27 = vector.extract_strided_slice %14 {offsets = [0, 256], sizes = [8, 128], strides = [1, 1]} : vector<8x512xf32> to vector<8x128xf32>
    %28 = math.tanh %27 : vector<8x128xf32>
    %29 = vector.extract_strided_slice %14 {offsets = [0, 384], sizes = [8, 128], strides = [1, 1]} : vector<8x512xf32> to vector<8x128xf32>
    %30 = arith.negf %29 : vector<8x128xf32>
    %31 = math.exp %30 : vector<8x128xf32>
    %cst_15 = arith.constant 1.000000e+00 : f32
    %32 = vector.broadcast %cst_15 : f32 to vector<8x128xf32>
    %33 = arith.addf %32, %31 : vector<8x128xf32>
    %34 = arith.divf %32, %33 : vector<8x128xf32>
    %35 = arith.mulf %26, %8 : vector<8x128xf32>
    %36 = arith.mulf %20, %28 : vector<8x128xf32>
    %37 = arith.addf %35, %36 : vector<8x128xf32>
    %38 = math.tanh %37 : vector<8x128xf32>
    %39 = arith.mulf %34, %38 : vector<8x128xf32>
    %40 = arith.index_cast %9 : i32 to index
    %c0_16 = arith.constant 0 : index
    %41 = vector.load %arg12[%40, %c0_16] : memref<64x128xf32, #tpu.memory_space<vmem>>, vector<8x128xf32>
    tpu.vector_store %arg12[%40, %c0_16], %39 {strides = array<i32>} : memref<64x128xf32, #tpu.memory_space<vmem>>, vector<8x128xf32>,
    %c1_i32 = arith.constant 1 : i32
    %c8_i32_17 = arith.constant 8 : i32
    %42 = arith.muli %c1_i32, %c8_i32_17 : i32
    %43 = arith.index_cast %42 : i32 to index
    %c0_18 = arith.constant 0 : index
    %44 = vector.load %arg11[%43, %c0_18] : memref<64x512xf32, #tpu.memory_space<vmem>>, vector<8x512xf32>
    %c0_19 = arith.constant 0 : index
    %c0_20 = arith.constant 0 : index
    %45 = vector.load %arg3[%c0_19, %c0_20] : memref<128x512xf32, #tpu.memory_space<vmem>>, vector<128x512xf32>
    %cst_21 = arith.constant dense<0.000000e+00> : vector<8x512xf32>
    %46 = tpu.matmul %39, %45, %cst_21 {dimension_numbers = #tpu.dot_dimension_numbers<[1], [0], [0], [1], [0, 0, 1, 1], [], []>} : vector<8x128xf32>, vector<128x512xf32>, vector<8x512xf32> -> vector<8x512xf32>
    %47 = arith.addf %44, %46 : vector<8x512xf32>
    %48 = vector.extract_strided_slice %47 {offsets = [0, 0], sizes = [8, 128], strides = [1, 1]} : vector<8x512xf32> to vector<8x128xf32>
    %49 = arith.negf %48 : vector<8x128xf32>
    %50 = math.exp %49 : vector<8x128xf32>
    %cst_22 = arith.constant 1.000000e+00 : f32
    %51 = vector.broadcast %cst_22 : f32 to vector<8x128xf32>
    %52 = arith.addf %51, %50 : vector<8x128xf32>
    %53 = arith.divf %51, %52 : vector<8x128xf32>
    %54 = vector.extract_strided_slice %47 {offsets = [0, 128], sizes = [8, 128], strides = [1, 1]} : vector<8x512xf32> to vector<8x128xf32>
    %55 = arith.negf %54 : vector<8x128xf32>
    %56 = math.exp %55 : vector<8x128xf32>
    %cst_23 = arith.constant 1.000000e+00 : f32
    %57 = vector.broadcast %cst_23 : f32 to vector<8x128xf32>
    %58 = arith.addf %57, %56 : vector<8x128xf32>
    %59 = arith.divf %57, %58 : vector<8x128xf32>
    %60 = vector.extract_strided_slice %47 {offsets = [0, 256], sizes = [8, 128], strides = [1, 1]} : vector<8x512xf32> to vector<8x128xf32>
    %61 = math.tanh %60 : vector<8x128xf32>
    %62 = vector.extract_strided_slice %47 {offsets = [0, 384], sizes = [8, 128], strides = [1, 1]} : vector<8x512xf32> to vector<8x128xf32>
    %63 = arith.negf %62 : vector<8x128xf32>
    %64 = math.exp %63 : vector<8x128xf32>
    %cst_24 = arith.constant 1.000000e+00 : f32
    %65 = vector.broadcast %cst_24 : f32 to vector<8x128xf32>
    %66 = arith.addf %65, %64 : vector<8x128xf32>
    %67 = arith.divf %65, %66 : vector<8x128xf32>
    %68 = arith.mulf %59, %37 : vector<8x128xf32>
    %69 = arith.mulf %53, %61 : vector<8x128xf32>
    %70 = arith.addf %68, %69 : vector<8x128xf32>
    %71 = math.tanh %70 : vector<8x128xf32>
    %72 = arith.mulf %67, %71 : vector<8x128xf32>
    %73 = arith.index_cast %42 : i32 to index
    %c0_25 = arith.constant 0 : index
    %74 = vector.load %arg12[%73, %c0_25] : memref<64x128xf32, #tpu.memory_space<vmem>>, vector<8x128xf32>
    tpu.vector_store %arg12[%73, %c0_25], %72 {strides = array<i32>} : memref<64x128xf32, #tpu.memory_space<vmem>>, vector<8x128xf32>,
    %c2_i32 = arith.constant 2 : i32
    %c8_i32_26 = arith.constant 8 : i32
    %75 = arith.muli %c2_i32, %c8_i32_26 : i32
    %76 = arith.index_cast %75 : i32 to index
    %c0_27 = arith.constant 0 : index
    %77 = vector.load %arg11[%76, %c0_27] : memref<64x512xf32, #tpu.memory_space<vmem>>, vector<8x512xf32>
    %c0_28 = arith.constant 0 : index
    %c0_29 = arith.constant 0 : index
    %78 = vector.load %arg3[%c0_28, %c0_29] : memref<128x512xf32, #tpu.memory_space<vmem>>, vector<128x512xf32>
    %cst_30 = arith.constant dense<0.000000e+00> : vector<8x512xf32>
    %79 = tpu.matmul %72, %78, %cst_30 {dimension_numbers = #tpu.dot_dimension_numbers<[1], [0], [0], [1], [0, 0, 1, 1], [], []>} : vector<8x128xf32>, vector<128x512xf32>, vector<8x512xf32> -> vector<8x512xf32>
    %80 = arith.addf %77, %79 : vector<8x512xf32>
    %81 = vector.extract_strided_slice %80 {offsets = [0, 0], sizes = [8, 128], strides = [1, 1]} : vector<8x512xf32> to vector<8x128xf32>
    %82 = arith.negf %81 : vector<8x128xf32>
    %83 = math.exp %82 : vector<8x128xf32>
    %cst_31 = arith.constant 1.000000e+00 : f32
    %84 = vector.broadcast %cst_31 : f32 to vector<8x128xf32>
    %85 = arith.addf %84, %83 : vector<8x128xf32>
    %86 = arith.divf %84, %85 : vector<8x128xf32>
    %87 = vector.extract_strided_slice %80 {offsets = [0, 128], sizes = [8, 128], strides = [1, 1]} : vector<8x512xf32> to vector<8x128xf32>
    %88 = arith.negf %87 : vector<8x128xf32>
    %89 = math.exp %88 : vector<8x128xf32>
    %cst_32 = arith.constant 1.000000e+00 : f32
    %90 = vector.broadcast %cst_32 : f32 to vector<8x128xf32>
    %91 = arith.addf %90, %89 : vector<8x128xf32>
    %92 = arith.divf %90, %91 : vector<8x128xf32>
    %93 = vector.extract_strided_slice %80 {offsets = [0, 256], sizes = [8, 128], strides = [1, 1]} : vector<8x512xf32> to vector<8x128xf32>
    %94 = math.tanh %93 : vector<8x128xf32>
    %95 = vector.extract_strided_slice %80 {offsets = [0, 384], sizes = [8, 128], strides = [1, 1]} : vector<8x512xf32> to vector<8x128xf32>
    %96 = arith.negf %95 : vector<8x128xf32>
    %97 = math.exp %96 : vector<8x128xf32>
    %cst_33 = arith.constant 1.000000e+00 : f32
    %98 = vector.broadcast %cst_33 : f32 to vector<8x128xf32>
    %99 = arith.addf %98, %97 : vector<8x128xf32>
    %100 = arith.divf %98, %99 : vector<8x128xf32>
    %101 = arith.mulf %92, %70 : vector<8x128xf32>
    %102 = arith.mulf %86, %94 : vector<8x128xf32>
    %103 = arith.addf %101, %102 : vector<8x128xf32>
    %104 = math.tanh %103 : vector<8x128xf32>
    %105 = arith.mulf %100, %104 : vector<8x128xf32>
    %106 = arith.index_cast %75 : i32 to index
    %c0_34 = arith.constant 0 : index
    %107 = vector.load %arg12[%106, %c0_34] : memref<64x128xf32, #tpu.memory_space<vmem>>, vector<8x128xf32>
    tpu.vector_store %arg12[%106, %c0_34], %105 {strides = array<i32>} : memref<64x128xf32, #tpu.memory_space<vmem>>, vector<8x128xf32>,
    %c3_i32 = arith.constant 3 : i32
    %c8_i32_35 = arith.constant 8 : i32
    %108 = arith.muli %c3_i32, %c8_i32_35 : i32
    %109 = arith.index_cast %108 : i32 to index
    %c0_36 = arith.constant 0 : index
    %110 = vector.load %arg11[%109, %c0_36] : memref<64x512xf32, #tpu.memory_space<vmem>>, vector<8x512xf32>
    %c0_37 = arith.constant 0 : index
    %c0_38 = arith.constant 0 : index
    %111 = vector.load %arg3[%c0_37, %c0_38] : memref<128x512xf32, #tpu.memory_space<vmem>>, vector<128x512xf32>
    %cst_39 = arith.constant dense<0.000000e+00> : vector<8x512xf32>
    %112 = tpu.matmul %105, %111, %cst_39 {dimension_numbers = #tpu.dot_dimension_numbers<[1], [0], [0], [1], [0, 0, 1, 1], [], []>} : vector<8x128xf32>, vector<128x512xf32>, vector<8x512xf32> -> vector<8x512xf32>
    %113 = arith.addf %110, %112 : vector<8x512xf32>
    %114 = vector.extract_strided_slice %113 {offsets = [0, 0], sizes = [8, 128], strides = [1, 1]} : vector<8x512xf32> to vector<8x128xf32>
    %115 = arith.negf %114 : vector<8x128xf32>
    %116 = math.exp %115 : vector<8x128xf32>
    %cst_40 = arith.constant 1.000000e+00 : f32
    %117 = vector.broadcast %cst_40 : f32 to vector<8x128xf32>
    %118 = arith.addf %117, %116 : vector<8x128xf32>
    %119 = arith.divf %117, %118 : vector<8x128xf32>
    %120 = vector.extract_strided_slice %113 {offsets = [0, 128], sizes = [8, 128], strides = [1, 1]} : vector<8x512xf32> to vector<8x128xf32>
    %121 = arith.negf %120 : vector<8x128xf32>
    %122 = math.exp %121 : vector<8x128xf32>
    %cst_41 = arith.constant 1.000000e+00 : f32
    %123 = vector.broadcast %cst_41 : f32 to vector<8x128xf32>
    %124 = arith.addf %123, %122 : vector<8x128xf32>
    %125 = arith.divf %123, %124 : vector<8x128xf32>
    %126 = vector.extract_strided_slice %113 {offsets = [0, 256], sizes = [8, 128], strides = [1, 1]} : vector<8x512xf32> to vector<8x128xf32>
    %127 = math.tanh %126 : vector<8x128xf32>
    %128 = vector.extract_strided_slice %113 {offsets = [0, 384], sizes = [8, 128], strides = [1, 1]} : vector<8x512xf32> to vector<8x128xf32>
    %129 = arith.negf %128 : vector<8x128xf32>
    %130 = math.exp %129 : vector<8x128xf32>
    %cst_42 = arith.constant 1.000000e+00 : f32
    %131 = vector.broadcast %cst_42 : f32 to vector<8x128xf32>
    %132 = arith.addf %131, %130 : vector<8x128xf32>
    %133 = arith.divf %131, %132 : vector<8x128xf32>
    %134 = arith.mulf %125, %103 : vector<8x128xf32>
    %135 = arith.mulf %119, %127 : vector<8x128xf32>
    %136 = arith.addf %134, %135 : vector<8x128xf32>
    %137 = math.tanh %136 : vector<8x128xf32>
    %138 = arith.mulf %133, %137 : vector<8x128xf32>
    %139 = arith.index_cast %108 : i32 to index
    %c0_43 = arith.constant 0 : index
    %140 = vector.load %arg12[%139, %c0_43] : memref<64x128xf32, #tpu.memory_space<vmem>>, vector<8x128xf32>
    tpu.vector_store %arg12[%139, %c0_43], %138 {strides = array<i32>} : memref<64x128xf32, #tpu.memory_space<vmem>>, vector<8x128xf32>,
    %c4_i32 = arith.constant 4 : i32
    %c8_i32_44 = arith.constant 8 : i32
    %141 = arith.muli %c4_i32, %c8_i32_44 : i32
    %142 = arith.index_cast %141 : i32 to index
    %c0_45 = arith.constant 0 : index
    %143 = vector.load %arg11[%142, %c0_45] : memref<64x512xf32, #tpu.memory_space<vmem>>, vector<8x512xf32>
    %c0_46 = arith.constant 0 : index
    %c0_47 = arith.constant 0 : index
    %144 = vector.load %arg3[%c0_46, %c0_47] : memref<128x512xf32, #tpu.memory_space<vmem>>, vector<128x512xf32>
    %cst_48 = arith.constant dense<0.000000e+00> : vector<8x512xf32>
    %145 = tpu.matmul %138, %144, %cst_48 {dimension_numbers = #tpu.dot_dimension_numbers<[1], [0], [0], [1], [0, 0, 1, 1], [], []>} : vector<8x128xf32>, vector<128x512xf32>, vector<8x512xf32> -> vector<8x512xf32>
    %146 = arith.addf %143, %145 : vector<8x512xf32>
    %147 = vector.extract_strided_slice %146 {offsets = [0, 0], sizes = [8, 128], strides = [1, 1]} : vector<8x512xf32> to vector<8x128xf32>
    %148 = arith.negf %147 : vector<8x128xf32>
    %149 = math.exp %148 : vector<8x128xf32>
    %cst_49 = arith.constant 1.000000e+00 : f32
    %150 = vector.broadcast %cst_49 : f32 to vector<8x128xf32>
    %151 = arith.addf %150, %149 : vector<8x128xf32>
    %152 = arith.divf %150, %151 : vector<8x128xf32>
    %153 = vector.extract_strided_slice %146 {offsets = [0, 128], sizes = [8, 128], strides = [1, 1]} : vector<8x512xf32> to vector<8x128xf32>
    %154 = arith.negf %153 : vector<8x128xf32>
    %155 = math.exp %154 : vector<8x128xf32>
    %cst_50 = arith.constant 1.000000e+00 : f32
    %156 = vector.broadcast %cst_50 : f32 to vector<8x128xf32>
    %157 = arith.addf %156, %155 : vector<8x128xf32>
    %158 = arith.divf %156, %157 : vector<8x128xf32>
    %159 = vector.extract_strided_slice %146 {offsets = [0, 256], sizes = [8, 128], strides = [1, 1]} : vector<8x512xf32> to vector<8x128xf32>
    %160 = math.tanh %159 : vector<8x128xf32>
    %161 = vector.extract_strided_slice %146 {offsets = [0, 384], sizes = [8, 128], strides = [1, 1]} : vector<8x512xf32> to vector<8x128xf32>
    %162 = arith.negf %161 : vector<8x128xf32>
    %163 = math.exp %162 : vector<8x128xf32>
    %cst_51 = arith.constant 1.000000e+00 : f32
    %164 = vector.broadcast %cst_51 : f32 to vector<8x128xf32>
    %165 = arith.addf %164, %163 : vector<8x128xf32>
    %166 = arith.divf %164, %165 : vector<8x128xf32>
    %167 = arith.mulf %158, %136 : vector<8x128xf32>
    %168 = arith.mulf %152, %160 : vector<8x128xf32>
    %169 = arith.addf %167, %168 : vector<8x128xf32>
    %170 = math.tanh %169 : vector<8x128xf32>
    %171 = arith.mulf %166, %170 : vector<8x128xf32>
    %172 = arith.index_cast %141 : i32 to index
    %c0_52 = arith.constant 0 : index
    %173 = vector.load %arg12[%172, %c0_52] : memref<64x128xf32, #tpu.memory_space<vmem>>, vector<8x128xf32>
    tpu.vector_store %arg12[%172, %c0_52], %171 {strides = array<i32>} : memref<64x128xf32, #tpu.memory_space<vmem>>, vector<8x128xf32>,
    %c5_i32 = arith.constant 5 : i32
    %c8_i32_53 = arith.constant 8 : i32
    %174 = arith.muli %c5_i32, %c8_i32_53 : i32
    %175 = arith.index_cast %174 : i32 to index
    %c0_54 = arith.constant 0 : index
    %176 = vector.load %arg11[%175, %c0_54] : memref<64x512xf32, #tpu.memory_space<vmem>>, vector<8x512xf32>
    %c0_55 = arith.constant 0 : index
    %c0_56 = arith.constant 0 : index
    %177 = vector.load %arg3[%c0_55, %c0_56] : memref<128x512xf32, #tpu.memory_space<vmem>>, vector<128x512xf32>
    %cst_57 = arith.constant dense<0.000000e+00> : vector<8x512xf32>
    %178 = tpu.matmul %171, %177, %cst_57 {dimension_numbers = #tpu.dot_dimension_numbers<[1], [0], [0], [1], [0, 0, 1, 1], [], []>} : vector<8x128xf32>, vector<128x512xf32>, vector<8x512xf32> -> vector<8x512xf32>
    %179 = arith.addf %176, %178 : vector<8x512xf32>
    %180 = vector.extract_strided_slice %179 {offsets = [0, 0], sizes = [8, 128], strides = [1, 1]} : vector<8x512xf32> to vector<8x128xf32>
    %181 = arith.negf %180 : vector<8x128xf32>
    %182 = math.exp %181 : vector<8x128xf32>
    %cst_58 = arith.constant 1.000000e+00 : f32
    %183 = vector.broadcast %cst_58 : f32 to vector<8x128xf32>
    %184 = arith.addf %183, %182 : vector<8x128xf32>
    %185 = arith.divf %183, %184 : vector<8x128xf32>
    %186 = vector.extract_strided_slice %179 {offsets = [0, 128], sizes = [8, 128], strides = [1, 1]} : vector<8x512xf32> to vector<8x128xf32>
    %187 = arith.negf %186 : vector<8x128xf32>
    %188 = math.exp %187 : vector<8x128xf32>
    %cst_59 = arith.constant 1.000000e+00 : f32
    %189 = vector.broadcast %cst_59 : f32 to vector<8x128xf32>
    %190 = arith.addf %189, %188 : vector<8x128xf32>
    %191 = arith.divf %189, %190 : vector<8x128xf32>
    %192 = vector.extract_strided_slice %179 {offsets = [0, 256], sizes = [8, 128], strides = [1, 1]} : vector<8x512xf32> to vector<8x128xf32>
    %193 = math.tanh %192 : vector<8x128xf32>
    %194 = vector.extract_strided_slice %179 {offsets = [0, 384], sizes = [8, 128], strides = [1, 1]} : vector<8x512xf32> to vector<8x128xf32>
    %195 = arith.negf %194 : vector<8x128xf32>
    %196 = math.exp %195 : vector<8x128xf32>
    %cst_60 = arith.constant 1.000000e+00 : f32
    %197 = vector.broadcast %cst_60 : f32 to vector<8x128xf32>
    %198 = arith.addf %197, %196 : vector<8x128xf32>
    %199 = arith.divf %197, %198 : vector<8x128xf32>
    %200 = arith.mulf %191, %169 : vector<8x128xf32>
    %201 = arith.mulf %185, %193 : vector<8x128xf32>
    %202 = arith.addf %200, %201 : vector<8x128xf32>
    %203 = math.tanh %202 : vector<8x128xf32>
    %204 = arith.mulf %199, %203 : vector<8x128xf32>
    %205 = arith.index_cast %174 : i32 to index
    %c0_61 = arith.constant 0 : index
    %206 = vector.load %arg12[%205, %c0_61] : memref<64x128xf32, #tpu.memory_space<vmem>>, vector<8x128xf32>
    tpu.vector_store %arg12[%205, %c0_61], %204 {strides = array<i32>} : memref<64x128xf32, #tpu.memory_space<vmem>>, vector<8x128xf32>,
    %c6_i32 = arith.constant 6 : i32
    %c8_i32_62 = arith.constant 8 : i32
    %207 = arith.muli %c6_i32, %c8_i32_62 : i32
    %208 = arith.index_cast %207 : i32 to index
    %c0_63 = arith.constant 0 : index
    %209 = vector.load %arg11[%208, %c0_63] : memref<64x512xf32, #tpu.memory_space<vmem>>, vector<8x512xf32>
    %c0_64 = arith.constant 0 : index
    %c0_65 = arith.constant 0 : index
    %210 = vector.load %arg3[%c0_64, %c0_65] : memref<128x512xf32, #tpu.memory_space<vmem>>, vector<128x512xf32>
    %cst_66 = arith.constant dense<0.000000e+00> : vector<8x512xf32>
    %211 = tpu.matmul %204, %210, %cst_66 {dimension_numbers = #tpu.dot_dimension_numbers<[1], [0], [0], [1], [0, 0, 1, 1], [], []>} : vector<8x128xf32>, vector<128x512xf32>, vector<8x512xf32> -> vector<8x512xf32>
    %212 = arith.addf %209, %211 : vector<8x512xf32>
    %213 = vector.extract_strided_slice %212 {offsets = [0, 0], sizes = [8, 128], strides = [1, 1]} : vector<8x512xf32> to vector<8x128xf32>
    %214 = arith.negf %213 : vector<8x128xf32>
    %215 = math.exp %214 : vector<8x128xf32>
    %cst_67 = arith.constant 1.000000e+00 : f32
    %216 = vector.broadcast %cst_67 : f32 to vector<8x128xf32>
    %217 = arith.addf %216, %215 : vector<8x128xf32>
    %218 = arith.divf %216, %217 : vector<8x128xf32>
    %219 = vector.extract_strided_slice %212 {offsets = [0, 128], sizes = [8, 128], strides = [1, 1]} : vector<8x512xf32> to vector<8x128xf32>
    %220 = arith.negf %219 : vector<8x128xf32>
    %221 = math.exp %220 : vector<8x128xf32>
    %cst_68 = arith.constant 1.000000e+00 : f32
    %222 = vector.broadcast %cst_68 : f32 to vector<8x128xf32>
    %223 = arith.addf %222, %221 : vector<8x128xf32>
    %224 = arith.divf %222, %223 : vector<8x128xf32>
    %225 = vector.extract_strided_slice %212 {offsets = [0, 256], sizes = [8, 128], strides = [1, 1]} : vector<8x512xf32> to vector<8x128xf32>
    %226 = math.tanh %225 : vector<8x128xf32>
    %227 = vector.extract_strided_slice %212 {offsets = [0, 384], sizes = [8, 128], strides = [1, 1]} : vector<8x512xf32> to vector<8x128xf32>
    %228 = arith.negf %227 : vector<8x128xf32>
    %229 = math.exp %228 : vector<8x128xf32>
    %cst_69 = arith.constant 1.000000e+00 : f32
    %230 = vector.broadcast %cst_69 : f32 to vector<8x128xf32>
    %231 = arith.addf %230, %229 : vector<8x128xf32>
    %232 = arith.divf %230, %231 : vector<8x128xf32>
    %233 = arith.mulf %224, %202 : vector<8x128xf32>
    %234 = arith.mulf %218, %226 : vector<8x128xf32>
    %235 = arith.addf %233, %234 : vector<8x128xf32>
    %236 = math.tanh %235 : vector<8x128xf32>
    %237 = arith.mulf %232, %236 : vector<8x128xf32>
    %238 = arith.index_cast %207 : i32 to index
    %c0_70 = arith.constant 0 : index
    %239 = vector.load %arg12[%238, %c0_70] : memref<64x128xf32, #tpu.memory_space<vmem>>, vector<8x128xf32>
    tpu.vector_store %arg12[%238, %c0_70], %237 {strides = array<i32>} : memref<64x128xf32, #tpu.memory_space<vmem>>, vector<8x128xf32>,
    %c7_i32 = arith.constant 7 : i32
    %c8_i32_71 = arith.constant 8 : i32
    %240 = arith.muli %c7_i32, %c8_i32_71 : i32
    %241 = arith.index_cast %240 : i32 to index
    %c0_72 = arith.constant 0 : index
    %242 = vector.load %arg11[%241, %c0_72] : memref<64x512xf32, #tpu.memory_space<vmem>>, vector<8x512xf32>
    %c0_73 = arith.constant 0 : index
    %c0_74 = arith.constant 0 : index
    %243 = vector.load %arg3[%c0_73, %c0_74] : memref<128x512xf32, #tpu.memory_space<vmem>>, vector<128x512xf32>
    %cst_75 = arith.constant dense<0.000000e+00> : vector<8x512xf32>
    %244 = tpu.matmul %237, %243, %cst_75 {dimension_numbers = #tpu.dot_dimension_numbers<[1], [0], [0], [1], [0, 0, 1, 1], [], []>} : vector<8x128xf32>, vector<128x512xf32>, vector<8x512xf32> -> vector<8x512xf32>
    %245 = arith.addf %242, %244 : vector<8x512xf32>
    %246 = vector.extract_strided_slice %245 {offsets = [0, 0], sizes = [8, 128], strides = [1, 1]} : vector<8x512xf32> to vector<8x128xf32>
    %247 = arith.negf %246 : vector<8x128xf32>
    %248 = math.exp %247 : vector<8x128xf32>
    %cst_76 = arith.constant 1.000000e+00 : f32
    %249 = vector.broadcast %cst_76 : f32 to vector<8x128xf32>
    %250 = arith.addf %249, %248 : vector<8x128xf32>
    %251 = arith.divf %249, %250 : vector<8x128xf32>
    %252 = vector.extract_strided_slice %245 {offsets = [0, 128], sizes = [8, 128], strides = [1, 1]} : vector<8x512xf32> to vector<8x128xf32>
    %253 = arith.negf %252 : vector<8x128xf32>
    %254 = math.exp %253 : vector<8x128xf32>
    %cst_77 = arith.constant 1.000000e+00 : f32
    %255 = vector.broadcast %cst_77 : f32 to vector<8x128xf32>
    %256 = arith.addf %255, %254 : vector<8x128xf32>
    %257 = arith.divf %255, %256 : vector<8x128xf32>
    %258 = vector.extract_strided_slice %245 {offsets = [0, 256], sizes = [8, 128], strides = [1, 1]} : vector<8x512xf32> to vector<8x128xf32>
    %259 = math.tanh %258 : vector<8x128xf32>
    %260 = vector.extract_strided_slice %245 {offsets = [0, 384], sizes = [8, 128], strides = [1, 1]} : vector<8x512xf32> to vector<8x128xf32>
    %261 = arith.negf %260 : vector<8x128xf32>
    %262 = math.exp %261 : vector<8x128xf32>
    %cst_78 = arith.constant 1.000000e+00 : f32
    %263 = vector.broadcast %cst_78 : f32 to vector<8x128xf32>
    %264 = arith.addf %263, %262 : vector<8x128xf32>
    %265 = arith.divf %263, %264 : vector<8x128xf32>
    %266 = arith.mulf %257, %235 : vector<8x128xf32>
    %267 = arith.mulf %251, %259 : vector<8x128xf32>
    %268 = arith.addf %266, %267 : vector<8x128xf32>
    %269 = math.tanh %268 : vector<8x128xf32>
    %270 = arith.mulf %265, %269 : vector<8x128xf32>
    %271 = arith.index_cast %240 : i32 to index
    %c0_79 = arith.constant 0 : index
    %272 = vector.load %arg12[%271, %c0_79] : memref<64x128xf32, #tpu.memory_space<vmem>>, vector<8x128xf32>
    tpu.vector_store %arg12[%271, %c0_79], %270 {strides = array<i32>} : memref<64x128xf32, #tpu.memory_space<vmem>>, vector<8x128xf32>,
    %c8_i32_80 = arith.constant 8 : i32
    %c0_81 = arith.constant 0 : index
    %c0_82 = arith.constant 0 : index
    %273 = vector.load %arg12[%c0_81, %c0_82] : memref<64x128xf32, #tpu.memory_space<vmem>>, vector<64x128xf32>
    %c0_83 = arith.constant 0 : index
    %c0_84 = arith.constant 0 : index
    %274 = vector.load %arg5[%c0_83, %c0_84] : memref<128x512xf32, #tpu.memory_space<vmem>>, vector<128x512xf32>
    %cst_85 = arith.constant dense<0.000000e+00> : vector<64x512xf32>
    %275 = tpu.matmul %273, %274, %cst_85 {dimension_numbers = #tpu.dot_dimension_numbers<[1], [0], [0], [1], [0, 0, 1, 1], [], []>} : vector<64x128xf32>, vector<128x512xf32>, vector<64x512xf32> -> vector<64x512xf32>
    %c0_86 = arith.constant 0 : index
    %c0_87 = arith.constant 0 : index
    %276 = vector.load %arg7[%c0_86, %c0_87] : memref<1x512xf32, #tpu.memory_space<vmem>>, vector<1x512xf32>
    %277 = vector.broadcast %276 : vector<1x512xf32> to vector<64x512xf32>
    %278 = arith.addf %275, %277 : vector<64x512xf32>
    %c0_88 = arith.constant 0 : index
    %c0_89 = arith.constant 0 : index
    %279 = vector.load %arg11[%c0_88, %c0_89] : memref<64x512xf32, #tpu.memory_space<vmem>>, vector<64x512xf32>
    tpu.vector_store %arg11[%c0_88, %c0_89], %278 {strides = array<i32>} : memref<64x512xf32, #tpu.memory_space<vmem>>, vector<64x512xf32>,
    %cst_90 = arith.constant 0.000000e+00 : f32
    %280 = vector.broadcast %cst_90 : f32 to vector<8x128xf32>
    %cst_91 = arith.constant 0.000000e+00 : f32
    %281 = vector.broadcast %cst_91 : f32 to vector<8x128xf32>
    %c0_i32_92 = arith.constant 0 : i32
    %c8_i32_93 = arith.constant 8 : i32
    %282 = arith.muli %c0_i32_92, %c8_i32_93 : i32
    %283 = arith.index_cast %282 : i32 to index
    %c0_94 = arith.constant 0 : index
    %284 = vector.load %arg11[%283, %c0_94] : memref<64x512xf32, #tpu.memory_space<vmem>>, vector<8x512xf32>
    %c0_95 = arith.constant 0 : index
    %c0_96 = arith.constant 0 : index
    %285 = vector.load %arg6[%c0_95, %c0_96] : memref<128x512xf32, #tpu.memory_space<vmem>>, vector<128x512xf32>
    %cst_97 = arith.constant dense<0.000000e+00> : vector<8x512xf32>
    %286 = tpu.matmul %280, %285, %cst_97 {dimension_numbers = #tpu.dot_dimension_numbers<[1], [0], [0], [1], [0, 0, 1, 1], [], []>} : vector<8x128xf32>, vector<128x512xf32>, vector<8x512xf32> -> vector<8x512xf32>
    %287 = arith.addf %284, %286 : vector<8x512xf32>
    %288 = vector.extract_strided_slice %287 {offsets = [0, 0], sizes = [8, 128], strides = [1, 1]} : vector<8x512xf32> to vector<8x128xf32>
    %289 = arith.negf %288 : vector<8x128xf32>
    %290 = math.exp %289 : vector<8x128xf32>
    %cst_98 = arith.constant 1.000000e+00 : f32
    %291 = vector.broadcast %cst_98 : f32 to vector<8x128xf32>
    %292 = arith.addf %291, %290 : vector<8x128xf32>
    %293 = arith.divf %291, %292 : vector<8x128xf32>
    %294 = vector.extract_strided_slice %287 {offsets = [0, 128], sizes = [8, 128], strides = [1, 1]} : vector<8x512xf32> to vector<8x128xf32>
    %295 = arith.negf %294 : vector<8x128xf32>
    %296 = math.exp %295 : vector<8x128xf32>
    %cst_99 = arith.constant 1.000000e+00 : f32
    %297 = vector.broadcast %cst_99 : f32 to vector<8x128xf32>
    %298 = arith.addf %297, %296 : vector<8x128xf32>
    %299 = arith.divf %297, %298 : vector<8x128xf32>
    %300 = vector.extract_strided_slice %287 {offsets = [0, 256], sizes = [8, 128], strides = [1, 1]} : vector<8x512xf32> to vector<8x128xf32>
    %301 = math.tanh %300 : vector<8x128xf32>
    %302 = vector.extract_strided_slice %287 {offsets = [0, 384], sizes = [8, 128], strides = [1, 1]} : vector<8x512xf32> to vector<8x128xf32>
    %303 = arith.negf %302 : vector<8x128xf32>
    %304 = math.exp %303 : vector<8x128xf32>
    %cst_100 = arith.constant 1.000000e+00 : f32
    %305 = vector.broadcast %cst_100 : f32 to vector<8x128xf32>
    %306 = arith.addf %305, %304 : vector<8x128xf32>
    %307 = arith.divf %305, %306 : vector<8x128xf32>
    %308 = arith.mulf %299, %281 : vector<8x128xf32>
    %309 = arith.mulf %293, %301 : vector<8x128xf32>
    %310 = arith.addf %308, %309 : vector<8x128xf32>
    %311 = math.tanh %310 : vector<8x128xf32>
    %312 = arith.mulf %307, %311 : vector<8x128xf32>
    %c1_i32_101 = arith.constant 1 : i32
    %c8_i32_102 = arith.constant 8 : i32
    %313 = arith.muli %c1_i32_101, %c8_i32_102 : i32
    %314 = arith.index_cast %313 : i32 to index
    %c0_103 = arith.constant 0 : index
    %315 = vector.load %arg11[%314, %c0_103] : memref<64x512xf32, #tpu.memory_space<vmem>>, vector<8x512xf32>
    %c0_104 = arith.constant 0 : index
    %c0_105 = arith.constant 0 : index
    %316 = vector.load %arg6[%c0_104, %c0_105] : memref<128x512xf32, #tpu.memory_space<vmem>>, vector<128x512xf32>
    %cst_106 = arith.constant dense<0.000000e+00> : vector<8x512xf32>
    %317 = tpu.matmul %312, %316, %cst_106 {dimension_numbers = #tpu.dot_dimension_numbers<[1], [0], [0], [1], [0, 0, 1, 1], [], []>} : vector<8x128xf32>, vector<128x512xf32>, vector<8x512xf32> -> vector<8x512xf32>
    %318 = arith.addf %315, %317 : vector<8x512xf32>
    %319 = vector.extract_strided_slice %318 {offsets = [0, 0], sizes = [8, 128], strides = [1, 1]} : vector<8x512xf32> to vector<8x128xf32>
    %320 = arith.negf %319 : vector<8x128xf32>
    %321 = math.exp %320 : vector<8x128xf32>
    %cst_107 = arith.constant 1.000000e+00 : f32
    %322 = vector.broadcast %cst_107 : f32 to vector<8x128xf32>
    %323 = arith.addf %322, %321 : vector<8x128xf32>
    %324 = arith.divf %322, %323 : vector<8x128xf32>
    %325 = vector.extract_strided_slice %318 {offsets = [0, 128], sizes = [8, 128], strides = [1, 1]} : vector<8x512xf32> to vector<8x128xf32>
    %326 = arith.negf %325 : vector<8x128xf32>
    %327 = math.exp %326 : vector<8x128xf32>
    %cst_108 = arith.constant 1.000000e+00 : f32
    %328 = vector.broadcast %cst_108 : f32 to vector<8x128xf32>
    %329 = arith.addf %328, %327 : vector<8x128xf32>
    %330 = arith.divf %328, %329 : vector<8x128xf32>
    %331 = vector.extract_strided_slice %318 {offsets = [0, 256], sizes = [8, 128], strides = [1, 1]} : vector<8x512xf32> to vector<8x128xf32>
    %332 = math.tanh %331 : vector<8x128xf32>
    %333 = vector.extract_strided_slice %318 {offsets = [0, 384], sizes = [8, 128], strides = [1, 1]} : vector<8x512xf32> to vector<8x128xf32>
    %334 = arith.negf %333 : vector<8x128xf32>
    %335 = math.exp %334 : vector<8x128xf32>
    %cst_109 = arith.constant 1.000000e+00 : f32
    %336 = vector.broadcast %cst_109 : f32 to vector<8x128xf32>
    %337 = arith.addf %336, %335 : vector<8x128xf32>
    %338 = arith.divf %336, %337 : vector<8x128xf32>
    %339 = arith.mulf %330, %310 : vector<8x128xf32>
    %340 = arith.mulf %324, %332 : vector<8x128xf32>
    %341 = arith.addf %339, %340 : vector<8x128xf32>
    %342 = math.tanh %341 : vector<8x128xf32>
    %343 = arith.mulf %338, %342 : vector<8x128xf32>
    %c2_i32_110 = arith.constant 2 : i32
    %c8_i32_111 = arith.constant 8 : i32
    %344 = arith.muli %c2_i32_110, %c8_i32_111 : i32
    %345 = arith.index_cast %344 : i32 to index
    %c0_112 = arith.constant 0 : index
    %346 = vector.load %arg11[%345, %c0_112] : memref<64x512xf32, #tpu.memory_space<vmem>>, vector<8x512xf32>
    %c0_113 = arith.constant 0 : index
    %c0_114 = arith.constant 0 : index
    %347 = vector.load %arg6[%c0_113, %c0_114] : memref<128x512xf32, #tpu.memory_space<vmem>>, vector<128x512xf32>
    %cst_115 = arith.constant dense<0.000000e+00> : vector<8x512xf32>
    %348 = tpu.matmul %343, %347, %cst_115 {dimension_numbers = #tpu.dot_dimension_numbers<[1], [0], [0], [1], [0, 0, 1, 1], [], []>} : vector<8x128xf32>, vector<128x512xf32>, vector<8x512xf32> -> vector<8x512xf32>
    %349 = arith.addf %346, %348 : vector<8x512xf32>
    %350 = vector.extract_strided_slice %349 {offsets = [0, 0], sizes = [8, 128], strides = [1, 1]} : vector<8x512xf32> to vector<8x128xf32>
    %351 = arith.negf %350 : vector<8x128xf32>
    %352 = math.exp %351 : vector<8x128xf32>
    %cst_116 = arith.constant 1.000000e+00 : f32
    %353 = vector.broadcast %cst_116 : f32 to vector<8x128xf32>
    %354 = arith.addf %353, %352 : vector<8x128xf32>
    %355 = arith.divf %353, %354 : vector<8x128xf32>
    %356 = vector.extract_strided_slice %349 {offsets = [0, 128], sizes = [8, 128], strides = [1, 1]} : vector<8x512xf32> to vector<8x128xf32>
    %357 = arith.negf %356 : vector<8x128xf32>
    %358 = math.exp %357 : vector<8x128xf32>
    %cst_117 = arith.constant 1.000000e+00 : f32
    %359 = vector.broadcast %cst_117 : f32 to vector<8x128xf32>
    %360 = arith.addf %359, %358 : vector<8x128xf32>
    %361 = arith.divf %359, %360 : vector<8x128xf32>
    %362 = vector.extract_strided_slice %349 {offsets = [0, 256], sizes = [8, 128], strides = [1, 1]} : vector<8x512xf32> to vector<8x128xf32>
    %363 = math.tanh %362 : vector<8x128xf32>
    %364 = vector.extract_strided_slice %349 {offsets = [0, 384], sizes = [8, 128], strides = [1, 1]} : vector<8x512xf32> to vector<8x128xf32>
    %365 = arith.negf %364 : vector<8x128xf32>
    %366 = math.exp %365 : vector<8x128xf32>
    %cst_118 = arith.constant 1.000000e+00 : f32
    %367 = vector.broadcast %cst_118 : f32 to vector<8x128xf32>
    %368 = arith.addf %367, %366 : vector<8x128xf32>
    %369 = arith.divf %367, %368 : vector<8x128xf32>
    %370 = arith.mulf %361, %341 : vector<8x128xf32>
    %371 = arith.mulf %355, %363 : vector<8x128xf32>
    %372 = arith.addf %370, %371 : vector<8x128xf32>
    %373 = math.tanh %372 : vector<8x128xf32>
    %374 = arith.mulf %369, %373 : vector<8x128xf32>
    %c3_i32_119 = arith.constant 3 : i32
    %c8_i32_120 = arith.constant 8 : i32
    %375 = arith.muli %c3_i32_119, %c8_i32_120 : i32
    %376 = arith.index_cast %375 : i32 to index
    %c0_121 = arith.constant 0 : index
    %377 = vector.load %arg11[%376, %c0_121] : memref<64x512xf32, #tpu.memory_space<vmem>>, vector<8x512xf32>
    %c0_122 = arith.constant 0 : index
    %c0_123 = arith.constant 0 : index
    %378 = vector.load %arg6[%c0_122, %c0_123] : memref<128x512xf32, #tpu.memory_space<vmem>>, vector<128x512xf32>
    %cst_124 = arith.constant dense<0.000000e+00> : vector<8x512xf32>
    %379 = tpu.matmul %374, %378, %cst_124 {dimension_numbers = #tpu.dot_dimension_numbers<[1], [0], [0], [1], [0, 0, 1, 1], [], []>} : vector<8x128xf32>, vector<128x512xf32>, vector<8x512xf32> -> vector<8x512xf32>
    %380 = arith.addf %377, %379 : vector<8x512xf32>
    %381 = vector.extract_strided_slice %380 {offsets = [0, 0], sizes = [8, 128], strides = [1, 1]} : vector<8x512xf32> to vector<8x128xf32>
    %382 = arith.negf %381 : vector<8x128xf32>
    %383 = math.exp %382 : vector<8x128xf32>
    %cst_125 = arith.constant 1.000000e+00 : f32
    %384 = vector.broadcast %cst_125 : f32 to vector<8x128xf32>
    %385 = arith.addf %384, %383 : vector<8x128xf32>
    %386 = arith.divf %384, %385 : vector<8x128xf32>
    %387 = vector.extract_strided_slice %380 {offsets = [0, 128], sizes = [8, 128], strides = [1, 1]} : vector<8x512xf32> to vector<8x128xf32>
    %388 = arith.negf %387 : vector<8x128xf32>
    %389 = math.exp %388 : vector<8x128xf32>
    %cst_126 = arith.constant 1.000000e+00 : f32
    %390 = vector.broadcast %cst_126 : f32 to vector<8x128xf32>
    %391 = arith.addf %390, %389 : vector<8x128xf32>
    %392 = arith.divf %390, %391 : vector<8x128xf32>
    %393 = vector.extract_strided_slice %380 {offsets = [0, 256], sizes = [8, 128], strides = [1, 1]} : vector<8x512xf32> to vector<8x128xf32>
    %394 = math.tanh %393 : vector<8x128xf32>
    %395 = vector.extract_strided_slice %380 {offsets = [0, 384], sizes = [8, 128], strides = [1, 1]} : vector<8x512xf32> to vector<8x128xf32>
    %396 = arith.negf %395 : vector<8x128xf32>
    %397 = math.exp %396 : vector<8x128xf32>
    %cst_127 = arith.constant 1.000000e+00 : f32
    %398 = vector.broadcast %cst_127 : f32 to vector<8x128xf32>
    %399 = arith.addf %398, %397 : vector<8x128xf32>
    %400 = arith.divf %398, %399 : vector<8x128xf32>
    %401 = arith.mulf %392, %372 : vector<8x128xf32>
    %402 = arith.mulf %386, %394 : vector<8x128xf32>
    %403 = arith.addf %401, %402 : vector<8x128xf32>
    %404 = math.tanh %403 : vector<8x128xf32>
    %405 = arith.mulf %400, %404 : vector<8x128xf32>
    %c4_i32_128 = arith.constant 4 : i32
    %c8_i32_129 = arith.constant 8 : i32
    %406 = arith.muli %c4_i32_128, %c8_i32_129 : i32
    %407 = arith.index_cast %406 : i32 to index
    %c0_130 = arith.constant 0 : index
    %408 = vector.load %arg11[%407, %c0_130] : memref<64x512xf32, #tpu.memory_space<vmem>>, vector<8x512xf32>
    %c0_131 = arith.constant 0 : index
    %c0_132 = arith.constant 0 : index
    %409 = vector.load %arg6[%c0_131, %c0_132] : memref<128x512xf32, #tpu.memory_space<vmem>>, vector<128x512xf32>
    %cst_133 = arith.constant dense<0.000000e+00> : vector<8x512xf32>
    %410 = tpu.matmul %405, %409, %cst_133 {dimension_numbers = #tpu.dot_dimension_numbers<[1], [0], [0], [1], [0, 0, 1, 1], [], []>} : vector<8x128xf32>, vector<128x512xf32>, vector<8x512xf32> -> vector<8x512xf32>
    %411 = arith.addf %408, %410 : vector<8x512xf32>
    %412 = vector.extract_strided_slice %411 {offsets = [0, 0], sizes = [8, 128], strides = [1, 1]} : vector<8x512xf32> to vector<8x128xf32>
    %413 = arith.negf %412 : vector<8x128xf32>
    %414 = math.exp %413 : vector<8x128xf32>
    %cst_134 = arith.constant 1.000000e+00 : f32
    %415 = vector.broadcast %cst_134 : f32 to vector<8x128xf32>
    %416 = arith.addf %415, %414 : vector<8x128xf32>
    %417 = arith.divf %415, %416 : vector<8x128xf32>
    %418 = vector.extract_strided_slice %411 {offsets = [0, 128], sizes = [8, 128], strides = [1, 1]} : vector<8x512xf32> to vector<8x128xf32>
    %419 = arith.negf %418 : vector<8x128xf32>
    %420 = math.exp %419 : vector<8x128xf32>
    %cst_135 = arith.constant 1.000000e+00 : f32
    %421 = vector.broadcast %cst_135 : f32 to vector<8x128xf32>
    %422 = arith.addf %421, %420 : vector<8x128xf32>
    %423 = arith.divf %421, %422 : vector<8x128xf32>
    %424 = vector.extract_strided_slice %411 {offsets = [0, 256], sizes = [8, 128], strides = [1, 1]} : vector<8x512xf32> to vector<8x128xf32>
    %425 = math.tanh %424 : vector<8x128xf32>
    %426 = vector.extract_strided_slice %411 {offsets = [0, 384], sizes = [8, 128], strides = [1, 1]} : vector<8x512xf32> to vector<8x128xf32>
    %427 = arith.negf %426 : vector<8x128xf32>
    %428 = math.exp %427 : vector<8x128xf32>
    %cst_136 = arith.constant 1.000000e+00 : f32
    %429 = vector.broadcast %cst_136 : f32 to vector<8x128xf32>
    %430 = arith.addf %429, %428 : vector<8x128xf32>
    %431 = arith.divf %429, %430 : vector<8x128xf32>
    %432 = arith.mulf %423, %403 : vector<8x128xf32>
    %433 = arith.mulf %417, %425 : vector<8x128xf32>
    %434 = arith.addf %432, %433 : vector<8x128xf32>
    %435 = math.tanh %434 : vector<8x128xf32>
    %436 = arith.mulf %431, %435 : vector<8x128xf32>
    %c5_i32_137 = arith.constant 5 : i32
    %c8_i32_138 = arith.constant 8 : i32
    %437 = arith.muli %c5_i32_137, %c8_i32_138 : i32
    %438 = arith.index_cast %437 : i32 to index
    %c0_139 = arith.constant 0 : index
    %439 = vector.load %arg11[%438, %c0_139] : memref<64x512xf32, #tpu.memory_space<vmem>>, vector<8x512xf32>
    %c0_140 = arith.constant 0 : index
    %c0_141 = arith.constant 0 : index
    %440 = vector.load %arg6[%c0_140, %c0_141] : memref<128x512xf32, #tpu.memory_space<vmem>>, vector<128x512xf32>
    %cst_142 = arith.constant dense<0.000000e+00> : vector<8x512xf32>
    %441 = tpu.matmul %436, %440, %cst_142 {dimension_numbers = #tpu.dot_dimension_numbers<[1], [0], [0], [1], [0, 0, 1, 1], [], []>} : vector<8x128xf32>, vector<128x512xf32>, vector<8x512xf32> -> vector<8x512xf32>
    %442 = arith.addf %439, %441 : vector<8x512xf32>
    %443 = vector.extract_strided_slice %442 {offsets = [0, 0], sizes = [8, 128], strides = [1, 1]} : vector<8x512xf32> to vector<8x128xf32>
    %444 = arith.negf %443 : vector<8x128xf32>
    %445 = math.exp %444 : vector<8x128xf32>
    %cst_143 = arith.constant 1.000000e+00 : f32
    %446 = vector.broadcast %cst_143 : f32 to vector<8x128xf32>
    %447 = arith.addf %446, %445 : vector<8x128xf32>
    %448 = arith.divf %446, %447 : vector<8x128xf32>
    %449 = vector.extract_strided_slice %442 {offsets = [0, 128], sizes = [8, 128], strides = [1, 1]} : vector<8x512xf32> to vector<8x128xf32>
    %450 = arith.negf %449 : vector<8x128xf32>
    %451 = math.exp %450 : vector<8x128xf32>
    %cst_144 = arith.constant 1.000000e+00 : f32
    %452 = vector.broadcast %cst_144 : f32 to vector<8x128xf32>
    %453 = arith.addf %452, %451 : vector<8x128xf32>
    %454 = arith.divf %452, %453 : vector<8x128xf32>
    %455 = vector.extract_strided_slice %442 {offsets = [0, 256], sizes = [8, 128], strides = [1, 1]} : vector<8x512xf32> to vector<8x128xf32>
    %456 = math.tanh %455 : vector<8x128xf32>
    %457 = vector.extract_strided_slice %442 {offsets = [0, 384], sizes = [8, 128], strides = [1, 1]} : vector<8x512xf32> to vector<8x128xf32>
    %458 = arith.negf %457 : vector<8x128xf32>
    %459 = math.exp %458 : vector<8x128xf32>
    %cst_145 = arith.constant 1.000000e+00 : f32
    %460 = vector.broadcast %cst_145 : f32 to vector<8x128xf32>
    %461 = arith.addf %460, %459 : vector<8x128xf32>
    %462 = arith.divf %460, %461 : vector<8x128xf32>
    %463 = arith.mulf %454, %434 : vector<8x128xf32>
    %464 = arith.mulf %448, %456 : vector<8x128xf32>
    %465 = arith.addf %463, %464 : vector<8x128xf32>
    %466 = math.tanh %465 : vector<8x128xf32>
    %467 = arith.mulf %462, %466 : vector<8x128xf32>
    %c6_i32_146 = arith.constant 6 : i32
    %c8_i32_147 = arith.constant 8 : i32
    %468 = arith.muli %c6_i32_146, %c8_i32_147 : i32
    %469 = arith.index_cast %468 : i32 to index
    %c0_148 = arith.constant 0 : index
    %470 = vector.load %arg11[%469, %c0_148] : memref<64x512xf32, #tpu.memory_space<vmem>>, vector<8x512xf32>
    %c0_149 = arith.constant 0 : index
    %c0_150 = arith.constant 0 : index
    %471 = vector.load %arg6[%c0_149, %c0_150] : memref<128x512xf32, #tpu.memory_space<vmem>>, vector<128x512xf32>
    %cst_151 = arith.constant dense<0.000000e+00> : vector<8x512xf32>
    %472 = tpu.matmul %467, %471, %cst_151 {dimension_numbers = #tpu.dot_dimension_numbers<[1], [0], [0], [1], [0, 0, 1, 1], [], []>} : vector<8x128xf32>, vector<128x512xf32>, vector<8x512xf32> -> vector<8x512xf32>
    %473 = arith.addf %470, %472 : vector<8x512xf32>
    %474 = vector.extract_strided_slice %473 {offsets = [0, 0], sizes = [8, 128], strides = [1, 1]} : vector<8x512xf32> to vector<8x128xf32>
    %475 = arith.negf %474 : vector<8x128xf32>
    %476 = math.exp %475 : vector<8x128xf32>
    %cst_152 = arith.constant 1.000000e+00 : f32
    %477 = vector.broadcast %cst_152 : f32 to vector<8x128xf32>
    %478 = arith.addf %477, %476 : vector<8x128xf32>
    %479 = arith.divf %477, %478 : vector<8x128xf32>
    %480 = vector.extract_strided_slice %473 {offsets = [0, 128], sizes = [8, 128], strides = [1, 1]} : vector<8x512xf32> to vector<8x128xf32>
    %481 = arith.negf %480 : vector<8x128xf32>
    %482 = math.exp %481 : vector<8x128xf32>
    %cst_153 = arith.constant 1.000000e+00 : f32
    %483 = vector.broadcast %cst_153 : f32 to vector<8x128xf32>
    %484 = arith.addf %483, %482 : vector<8x128xf32>
    %485 = arith.divf %483, %484 : vector<8x128xf32>
    %486 = vector.extract_strided_slice %473 {offsets = [0, 256], sizes = [8, 128], strides = [1, 1]} : vector<8x512xf32> to vector<8x128xf32>
    %487 = math.tanh %486 : vector<8x128xf32>
    %488 = vector.extract_strided_slice %473 {offsets = [0, 384], sizes = [8, 128], strides = [1, 1]} : vector<8x512xf32> to vector<8x128xf32>
    %489 = arith.negf %488 : vector<8x128xf32>
    %490 = math.exp %489 : vector<8x128xf32>
    %cst_154 = arith.constant 1.000000e+00 : f32
    %491 = vector.broadcast %cst_154 : f32 to vector<8x128xf32>
    %492 = arith.addf %491, %490 : vector<8x128xf32>
    %493 = arith.divf %491, %492 : vector<8x128xf32>
    %494 = arith.mulf %485, %465 : vector<8x128xf32>
    %495 = arith.mulf %479, %487 : vector<8x128xf32>
    %496 = arith.addf %494, %495 : vector<8x128xf32>
    %497 = math.tanh %496 : vector<8x128xf32>
    %498 = arith.mulf %493, %497 : vector<8x128xf32>
    %c7_i32_155 = arith.constant 7 : i32
    %c8_i32_156 = arith.constant 8 : i32
    %499 = arith.muli %c7_i32_155, %c8_i32_156 : i32
    %500 = arith.index_cast %499 : i32 to index
    %c0_157 = arith.constant 0 : index
    %501 = vector.load %arg11[%500, %c0_157] : memref<64x512xf32, #tpu.memory_space<vmem>>, vector<8x512xf32>
    %c0_158 = arith.constant 0 : index
    %c0_159 = arith.constant 0 : index
    %502 = vector.load %arg6[%c0_158, %c0_159] : memref<128x512xf32, #tpu.memory_space<vmem>>, vector<128x512xf32>
    %cst_160 = arith.constant dense<0.000000e+00> : vector<8x512xf32>
    %503 = tpu.matmul %498, %502, %cst_160 {dimension_numbers = #tpu.dot_dimension_numbers<[1], [0], [0], [1], [0, 0, 1, 1], [], []>} : vector<8x128xf32>, vector<128x512xf32>, vector<8x512xf32> -> vector<8x512xf32>
    %504 = arith.addf %501, %503 : vector<8x512xf32>
    %505 = vector.extract_strided_slice %504 {offsets = [0, 0], sizes = [8, 128], strides = [1, 1]} : vector<8x512xf32> to vector<8x128xf32>
    %506 = arith.negf %505 : vector<8x128xf32>
    %507 = math.exp %506 : vector<8x128xf32>
    %cst_161 = arith.constant 1.000000e+00 : f32
    %508 = vector.broadcast %cst_161 : f32 to vector<8x128xf32>
    %509 = arith.addf %508, %507 : vector<8x128xf32>
    %510 = arith.divf %508, %509 : vector<8x128xf32>
    %511 = vector.extract_strided_slice %504 {offsets = [0, 128], sizes = [8, 128], strides = [1, 1]} : vector<8x512xf32> to vector<8x128xf32>
    %512 = arith.negf %511 : vector<8x128xf32>
    %513 = math.exp %512 : vector<8x128xf32>
    %cst_162 = arith.constant 1.000000e+00 : f32
    %514 = vector.broadcast %cst_162 : f32 to vector<8x128xf32>
    %515 = arith.addf %514, %513 : vector<8x128xf32>
    %516 = arith.divf %514, %515 : vector<8x128xf32>
    %517 = vector.extract_strided_slice %504 {offsets = [0, 256], sizes = [8, 128], strides = [1, 1]} : vector<8x512xf32> to vector<8x128xf32>
    %518 = math.tanh %517 : vector<8x128xf32>
    %519 = vector.extract_strided_slice %504 {offsets = [0, 384], sizes = [8, 128], strides = [1, 1]} : vector<8x512xf32> to vector<8x128xf32>
    %520 = arith.negf %519 : vector<8x128xf32>
    %521 = math.exp %520 : vector<8x128xf32>
    %cst_163 = arith.constant 1.000000e+00 : f32
    %522 = vector.broadcast %cst_163 : f32 to vector<8x128xf32>
    %523 = arith.addf %522, %521 : vector<8x128xf32>
    %524 = arith.divf %522, %523 : vector<8x128xf32>
    %525 = arith.mulf %516, %496 : vector<8x128xf32>
    %526 = arith.mulf %510, %518 : vector<8x128xf32>
    %527 = arith.addf %525, %526 : vector<8x128xf32>
    %528 = math.tanh %527 : vector<8x128xf32>
    %529 = arith.mulf %524, %528 : vector<8x128xf32>
    %c8_i32_164 = arith.constant 8 : i32
    %c0_165 = arith.constant 0 : index
    %c0_166 = arith.constant 0 : index
    %530 = vector.load %arg8[%c0_165, %c0_166] : memref<128x128xf32, #tpu.memory_space<vmem>>, vector<128x128xf32>
    %cst_167 = arith.constant dense<0.000000e+00> : vector<8x128xf32>
    %531 = tpu.matmul %529, %530, %cst_167 {dimension_numbers = #tpu.dot_dimension_numbers<[1], [0], [0], [1], [0, 0, 1, 1], [], []>} : vector<8x128xf32>, vector<128x128xf32>, vector<8x128xf32> -> vector<8x128xf32>
    %c0_168 = arith.constant 0 : index
    %c0_169 = arith.constant 0 : index
    %532 = vector.load %arg9[%c0_168, %c0_169] : memref<1x128xf32, #tpu.memory_space<vmem>>, vector<1x128xf32>
    %533 = vector.broadcast %532 : vector<1x128xf32> to vector<8x128xf32>
    %534 = arith.addf %531, %533 : vector<8x128xf32>
    %c0_170 = arith.constant 0 : index
    %c0_171 = arith.constant 0 : index
    %535 = vector.load %arg10[%c0_170, %c0_171] : memref<8x128xf32, #tpu.memory_space<vmem>>, vector<8x128xf32>
    tpu.vector_store %arg10[%c0_170, %c0_171], %534 {strides = array<i32>} : memref<8x128xf32, #tpu.memory_space<vmem>>, vector<8x128xf32>,
    return
  }
  func.func @transform_0(%arg0: i32) -> (i32, i32) {
    %c0_i32 = arith.constant 0 : i32
    %c0_i32_0 = arith.constant 0 : i32
    %c0_i32_1 = arith.constant 0 : i32
    return %c0_i32, %c0_i32_0 : i32, i32
  }
  func.func @transform_1(%arg0: i32) -> (i32, i32) {
    %c0_i32 = arith.constant 0 : i32
    %c0_i32_0 = arith.constant 0 : i32
    %c0_i32_1 = arith.constant 0 : i32
    return %c0_i32, %c0_i32_0 : i32, i32
  }
  func.func @transform_2(%arg0: i32) -> (i32, i32) {
    %c0_i32 = arith.constant 0 : i32
    %c0_i32_0 = arith.constant 0 : i32
    %c0_i32_1 = arith.constant 0 : i32
    return %c0_i32, %c0_i32_0 : i32, i32
  }
  func.func @transform_3(%arg0: i32) -> (i32, i32) {
    %c0_i32 = arith.constant 0 : i32
    %c0_i32_0 = arith.constant 0 : i32
    %c0_i32_1 = arith.constant 0 : i32
    return %c0_i32, %c0_i32_0 : i32, i32
  }
  func.func @transform_4(%arg0: i32) -> (i32, i32) {
    %c0_i32 = arith.constant 0 : i32
    %c0_i32_0 = arith.constant 0 : i32
    %c0_i32_1 = arith.constant 0 : i32
    return %c0_i32, %c0_i32_0 : i32, i32
  }
  func.func @transform_5(%arg0: i32) -> (i32, i32) {
    %c0_i32 = arith.constant 0 : i32
    %c0_i32_0 = arith.constant 0 : i32
    %c0_i32_1 = arith.constant 0 : i32
    return %c0_i32, %c0_i32_0 : i32, i32
  }
  func.func @transform_6(%arg0: i32) -> (i32, i32) {
    %c0_i32 = arith.constant 0 : i32
    %c0_i32_0 = arith.constant 0 : i32
    %c0_i32_1 = arith.constant 0 : i32
    return %c0_i32, %c0_i32_0 : i32, i32
  }
  func.func @transform_7(%arg0: i32) -> (i32, i32) {
    %c0_i32 = arith.constant 0 : i32
    %c0_i32_0 = arith.constant 0 : i32
    %c0_i32_1 = arith.constant 0 : i32
    return %c0_i32, %c0_i32_0 : i32, i32
  }
  func.func @transform_8(%arg0: i32) -> (i32, i32) {
    %c0_i32 = arith.constant 0 : i32
    %c0_i32_0 = arith.constant 0 : i32
    %c0_i32_1 = arith.constant 0 : i32
    return %c0_i32, %c0_i32_0 : i32, i32
  }
  func.func @transform_9(%arg0: i32) -> (i32, i32) {
    %c0_i32 = arith.constant 0 : i32
    %c0_i32_0 = arith.constant 0 : i32
    %c0_i32_1 = arith.constant 0 : i32
    return %c0_i32, %c0_i32_0 : i32, i32
  }
}

</mosaic_0001>

<llo_original>
// kernel: lstm_model_forward.1
$region0: #{lstm_model_forward.1}
  #allocation0 [shape = 'u32[]', space=smem, size = 0x4, offset = 0x4, fixed_abs, tag = 'smem constant byte address 0x4 - core index']
  #allocation1 [shape = 'u32[144,128]{1,0:T(1,128)}', space=vmem, size = 0x12000, scoped, tag = 'internal scratch']
  #allocation2 [shape = 'f32[64,512]{1,0:T(8,128)}', space=vmem, size = 0x20000, scoped, tag = 'scratch operand']
  #allocation3 [shape = 'f32[64,128]{1,0:T(8,128)}', space=vmem, size = 0x8000, scoped, tag = 'scratch operand']
  %s0 = inlined_call_operand.vmem [shape: f32[64,4], index: 0, kind: input, shape index: {}]
  %s1 = inlined_call_operand.vmem [shape: f32[4,512], index: 1, kind: input, shape index: {}]
  %s2 = inlined_call_operand.hbm [shape: f32[128,512], index: 2, kind: input, shape index: {}]
  %s3 = inlined_call_operand.vmem [shape: f32[1,512], index: 3, kind: input, shape index: {}]
  %s4 = inlined_call_operand.hbm [shape: f32[128,512], index: 4, kind: input, shape index: {}]
  %s5 = inlined_call_operand.hbm [shape: f32[128,512], index: 5, kind: input, shape index: {}]
  %s6 = inlined_call_operand.vmem [shape: f32[1,512], index: 6, kind: input, shape index: {}]
  %s7 = inlined_call_operand.hbm [shape: f32[128,128], index: 7, kind: input, shape index: {}]
  %s8 = inlined_call_operand.vmem [shape: f32[1,128], index: 8, kind: input, shape index: {}]
  %s9 = inlined_call_operand.vmem [shape: f32[8,128], index: 9, kind: output, shape index: {}]
  %s10 = sld [smem:[#allocation0]]
  $region62: #{lstm_model_forward.1} parent=0
    _
  %s12 = ssub.s32 1, %s10
  %s13 = scalar_select 0, %s12, %s10
  $region1: #{lstm_model_forward.1} parent=0
    #allocation4 [shape = 'u8[262144]{0}', space=vmem, size = 0x40000, scoped, tag = 'input window, operand 2, single buffered']
    #allocation5 [shape = 's32[1]{0}', space=sflag, size = 0x4, scoped, tag = 'scoped memory for lstm_model_forward.1']
    #allocation6 [shape = 'u8[262144]{0}', space=vmem, size = 0x40000, scoped, tag = 'input window, operand 4, single buffered']
    #allocation7 [shape = 's32[1]{0}', space=sflag, size = 0x4, scoped, tag = 'scoped memory for lstm_model_forward.1']
    #allocation8 [shape = 'u8[262144]{0}', space=vmem, size = 0x40000, scoped, tag = 'input window, operand 5, single buffered']
    #allocation9 [shape = 'u8[65536]{0}', space=vmem, size = 0x10000, scoped, tag = 'input window, operand 7, single buffered']
    #allocation10 [shape = 's32[1]{0}', space=sflag, size = 0x4, scoped, tag = 'scoped memory for lstm_model_forward.1']
    %14 = vsyncpa [#allocation5], 0
    %15 = vsyncpa [#allocation7], 0
    %16 = vsyncpa [#allocation10], 0
    // Predicated region
    $region2: #{lstm_model_forward.1} parent=1 // pred_check
      _
    $region3: #{lstm_model_forward.1} parent=1 // pred_check_branch
      %18 = sbr.rel (0) target = $region5
    $region4: #{lstm_model_forward.1} parent=1 // pred_region
      _
    $region5: #{lstm_model_forward.1} parent=1 // pred_fallthru
      _
    // Predicated region
    $region6: #{lstm_model_forward.1} parent=1 // pred_check
      _
    $region7: #{lstm_model_forward.1} parent=1 // pred_check_branch
      %20 = sbr.rel (0) target = $region9
    $region8: #{lstm_model_forward.1} parent=1 // pred_region
      _
    $region9: #{lstm_model_forward.1} parent=1 // pred_fallthru
      _
    // Predicated region
    $region10: #{lstm_model_forward.1} parent=1 // pred_check
      _
    $region11: #{lstm_model_forward.1} parent=1 // pred_check_branch
      %22 = sbr.rel (0) target = $region13
    $region12: #{lstm_model_forward.1} parent=1 // pred_region
      %s24 = ssub.s32 8192, 8192
      %25 = vsyncadd [#allocation5], %s24
      %s26 = sshll.u32 [#allocation4], 4
      %s27 = int_to_ptr.vmem [resolvable:$true] %s26
      %32 = dma.hbm_to_vmem [thread:$0]  %s2, 8192, %s27, [#allocation5], 512, 512, 32
    $region13: #{lstm_model_forward.1} parent=1 // pred_fallthru
      _
    // Predicated region
    $region14: #{lstm_model_forward.1} parent=1 // pred_check
      _
    $region15: #{lstm_model_forward.1} parent=1 // pred_check_branch
      %34 = sbr.rel (0) target = $region17
    $region16: #{lstm_model_forward.1} parent=1 // pred_region
      _
    $region17: #{lstm_model_forward.1} parent=1 // pred_fallthru
      _
    // Predicated region
    $region18: #{lstm_model_forward.1} parent=1 // pred_check
      _
    $region19: #{lstm_model_forward.1} parent=1 // pred_check_branch
      %36 = sbr.rel (0) target = $region21
    $region20: #{lstm_model_forward.1} parent=1 // pred_region
      %s38 = ssub.s32 8192, 8192
      %39 = vsyncadd [#allocation7], %s38
      %s40 = sshll.u32 [#allocation6], 4
      %s41 = int_to_ptr.vmem [resolvable:$true] %s40
      %46 = dma.hbm_to_vmem [thread:$0]  %s4, 8192, %s41, [#allocation7], 512, 512, 32
    $region21: #{lstm_model_forward.1} parent=1 // pred_fallthru
      _
    // Predicated region
    $region22: #{lstm_model_forward.1} parent=1 // pred_check
      _
    $region23: #{lstm_model_forward.1} parent=1 // pred_check_branch
      %48 = sbr.rel (0) target = $region25
    $region24: #{lstm_model_forward.1} parent=1 // pred_region
      %s50 = ssub.s32 8192, 8192
      %51 = vsyncadd [#allocation7], %s50
      %s52 = sshll.u32 [#allocation8], 4
      %s53 = int_to_ptr.vmem [resolvable:$true] %s52
      %58 = dma.hbm_to_vmem [thread:$0]  %s5, 8192, %s53, [#allocation7], 512, 512, 32
    $region25: #{lstm_model_forward.1} parent=1 // pred_fallthru
      _
    // Predicated region
    $region26: #{lstm_model_forward.1} parent=1 // pred_check
      _
    $region27: #{lstm_model_forward.1} parent=1 // pred_check_branch
      %60 = sbr.rel (0) target = $region29
    $region28: #{lstm_model_forward.1} parent=1 // pred_region
      _
    $region29: #{lstm_model_forward.1} parent=1 // pred_fallthru
      _
    // Predicated region
    $region30: #{lstm_model_forward.1} parent=1 // pred_check
      _
    $region31: #{lstm_model_forward.1} parent=1 // pred_check_branch
      %62 = sbr.rel (0) target = $region33
    $region32: #{lstm_model_forward.1} parent=1 // pred_region
      %s64 = ssub.s32 2048, 2048
      %65 = vsyncadd [#allocation10], %s64
      %s66 = sshll.u32 [#allocation9], 4
      %s67 = int_to_ptr.vmem [resolvable:$true] %s66
      %72 = dma.hbm_to_vmem [thread:$0]  %s7, 2048, %s67, [#allocation10], 128, 128, 8
    $region33: #{lstm_model_forward.1} parent=1 // pred_fallthru
      _
    // Predicated region
    $region34: #{lstm_model_forward.1} parent=1 // pred_check
      _
    $region35: #{lstm_model_forward.1} parent=1 // pred_check_branch
      %74 = sbr.rel (0) target = $region37
    $region36: #{lstm_model_forward.1} parent=1 // pred_region
      _
    $region37: #{lstm_model_forward.1} parent=1 // pred_fallthru
      _
    // Predicated region
    $region38: #{lstm_model_forward.1} parent=1 // pred_check
      _
    $region39: #{lstm_model_forward.1} parent=1 // pred_check_branch
      %76 = sbr.rel (0) target = $region41
    $region40: #{lstm_model_forward.1} parent=1 // pred_region
      %77 = dma.done [#allocation5], 8192
    $region41: #{lstm_model_forward.1} parent=1 // pred_fallthru
      _
    // Predicated region
    $region42: #{lstm_model_forward.1} parent=1 // pred_check
      _
    $region43: #{lstm_model_forward.1} parent=1 // pred_check_branch
      %79 = sbr.rel (0) target = $region45
    $region44: #{lstm_model_forward.1} parent=1 // pred_region
      %80 = dma.done [#allocation7], 8192
    $region45: #{lstm_model_forward.1} parent=1 // pred_fallthru
      _
    // Predicated region
    $region46: #{lstm_model_forward.1} parent=1 // pred_check
      _
    $region47: #{lstm_model_forward.1} parent=1 // pred_check_branch
      %82 = sbr.rel (0) target = $region49
    $region48: #{lstm_model_forward.1} parent=1 // pred_region
      %83 = dma.done [#allocation7], 8192
    $region49: #{lstm_model_forward.1} parent=1 // pred_fallthru
      _
    // Predicated region
    $region50: #{lstm_model_forward.1} parent=1 // pred_check
      _
    $region51: #{lstm_model_forward.1} parent=1 // pred_check_branch
      %85 = sbr.rel (0) target = $region53
    $region52: #{lstm_model_forward.1} parent=1 // pred_region
      %86 = dma.done [#allocation10], 2048
    $region53: #{lstm_model_forward.1} parent=1 // pred_fallthru
      _
    %v87 = vld [vmem:[%s0] sm:$0xff]
    %v88 = vld [vmem:[%s0 + $0x8] sm:$0xff]
    %v89 = vld [vmem:[%s0 + $0x10] sm:$0xff]
    %v90 = vld [vmem:[%s0 + $0x18] sm:$0xff]
    %v91 = vld [vmem:[%s0 + $0x20] sm:$0xff]
    %v92 = vld [vmem:[%s0 + $0x28] sm:$0xff]
    %v93 = vld [vmem:[%s0 + $0x30] sm:$0xff]
    %v94 = vld [vmem:[%s0 + $0x38] sm:$0xff]
    %v95 = vld [vmem:[%s1] sm:$0xff]
    %v96 = vld [vmem:[%s1 + $0x8] sm:$0xff]
    %v97 = vld [vmem:[%s3] sm:$0xf]
    %v99 = vlaneseq
    %v100 = vshrl.u32 %v99, 7
    %v101 = vsub.s32 0, %v100
    %v102 = vrot.slane %v97, %v101
    %v103 = vlaneseq
    %v104 = vshrl.u32 %v103, 7
    %v105 = vsub.s32 1, %v104
    %v106 = vrot.slane %v97, %v105
    %v107 = vlaneseq
    %v108 = vshrl.u32 %v107, 7
    %v109 = vsub.s32 2, %v108
    %v110 = vrot.slane %v97, %v109
    %v111 = vlaneseq
    %v112 = vshrl.u32 %v111, 7
    %v113 = vsub.s32 3, %v112
    %v114 = vrot.slane %v97, %v113
    %v121 = vcombine.high %v95, %v95
    %v122 = vcombine.high %v96, %v96
    %vm123 = vcmask 31744
    %v125 = vsel %vm123, %v87, 0
    %v128 = vsel %vm123, %v88, 0
    %v131 = vsel %vm123, %v89, 0
    %v134 = vsel %vm123, %v90, 0
    %v137 = vsel %vm123, %v91, 0
    %v140 = vsel %vm123, %v92, 0
    %v143 = vsel %vm123, %v93, 0
    %v146 = vsel %vm123, %v94, 0
    %vm148 = vcmask 1043456
    %v149 = vsel %vm148, %v95, 0
    %v151 = vsel %vm148, %v121, 0
    %v153 = vsel %vm148, %v96, 0
    %v155 = vsel %vm148, %v122, 0
    %157 = vmatprep.subr.mxu0 %v151
    %158 = vmatpush1.msra.mxu0 %v149
    %159 = vmatprep.subr.mxu0 0.0
    %160 = vmatpush1.msra.mxu0 0.0
    %161 = vmatprep.subr.mxu0 0.0
    %162 = vmatpush1.msra.mxu0 0.0
    %163 = vmatprep.subr.mxu0 0.0
    %164 = vmatpush1.msra.mxu0 0.0
    %165 = vmatprep.subr.mxu0 0.0
    %166 = vmatpush1.msra.mxu0 0.0
    %167 = vmatprep.subr.mxu0 0.0
    %168 = vmatpush1.msra.mxu0 0.0
    %169 = vmatprep.subr.mxu0 0.0
    %170 = vmatpush1.msra.mxu0 0.0
    %171 = vmatprep.subr.mxu0 0.0
    %172 = vmatpush1.msra.mxu0 0.0
    %173 = vmatprep.subr.mxu0 0.0
    %174 = vmatpush1.msra.mxu0 0.0
    %175 = vmatprep.subr.mxu0 0.0
    %176 = vmatpush1.msra.mxu0 0.0
    %177 = vmatprep.subr.mxu0 0.0
    %178 = vmatpush1.msra.mxu0 0.0
    %179 = vmatprep.subr.mxu0 0.0
    %180 = vmatpush1.msra.mxu0 0.0
    %181 = vmatprep.subr.mxu0 0.0
    %182 = vmatpush1.msra.mxu0 0.0
    %183 = vmatprep.subr.mxu0 0.0
    %184 = vmatpush1.msra.mxu0 0.0
    %185 = vmatprep.subr.mxu0 0.0
    %186 = vmatpush1.msra.mxu0 0.0
    %187 = vmatprep.subr.mxu0 0.0
    %188 = vmatpush1.msra.mxu0 0.0
    %189 = vmatprep.subr.mxu0 0.0
    %190 = vmatpush1.msra.mxu0 0.0
    %191 = vmatprep.subr.mxu0 0.0
    %192 = vmatpush1.msra.mxu0 0.0
    %193 = vmatprep.subr.mxu0 0.0
    %194 = vmatpush1.msra.mxu0 0.0
    %195 = vmatprep.subr.mxu0 0.0
    %196 = vmatpush1.msra.mxu0 0.0
    %197 = vmatprep.subr.mxu0 0.0
    %198 = vmatpush1.msra.mxu0 0.0
    %199 = vmatprep.subr.mxu0 0.0
    %200 = vmatpush1.msra.mxu0 0.0
    %201 = vmatprep.subr.mxu0 0.0
    %202 = vmatpush1.msra.mxu0 0.0
    %203 = vmatprep.subr.mxu0 0.0
    %204 = vmatpush1.msra.mxu0 0.0
    %205 = vmatprep.subr.mxu0 0.0
    %206 = vmatpush1.msra.mxu0 0.0
    %207 = vmatprep.subr.mxu0 0.0
    %208 = vmatpush1.msra.mxu0 0.0
    %209 = vmatprep.subr.mxu0 0.0
    %210 = vmatpush1.msra.mxu0 0.0
    %211 = vmatprep.subr.mxu0 0.0
    %212 = vmatpush1.msra.mxu0 0.0
    %213 = vmatprep.subr.mxu0 0.0
    %214 = vmatpush1.msra.mxu0 0.0
    %215 = vmatprep.subr.mxu0 0.0
    %216 = vmatpush1.msra.mxu0 0.0
    %217 = vmatprep.subr.mxu0 0.0
    %218 = vmatpush1.msra.mxu0 0.0
    %219 = vmatprep.subr.mxu0 0.0
    %220 = vmatpush1.msra.mxu0 0.0
    %221 = vmatprep.mubr.f32.mxu0 0.0
    %222 = vmatmul.mubr.f32.gmra.mrb[0].mxu0 %v125
    %v223 = vpop.f32.mrb[0].mxu0
    %v224 = vadd.f32 %v102, %v223
    %v225 = vpop.f32.mrb[0].mxu0
    %v226 = vadd.f32 %v106, %v225
    %227 = vmatprep.mubr.f32.mxu0 0.0
    %228 = vmatmul.mubr.f32.gmra.mrb[0].mxu0 %v128
    %v229 = vpop.f32.mrb[0].mxu0
    %v230 = vadd.f32 %v102, %v229
    %v231 = vpop.f32.mrb[0].mxu0
    %v232 = vadd.f32 %v106, %v231
    %233 = vmatprep.mubr.f32.mxu0 0.0
    %234 = vmatmul.mubr.f32.gmra.mrb[0].mxu0 %v131
    %v235 = vpop.f32.mrb[0].mxu0
    %v236 = vadd.f32 %v102, %v235
    %v237 = vpop.f32.mrb[0].mxu0
    %v238 = vadd.f32 %v106, %v237
    %239 = vmatprep.mubr.f32.mxu0 0.0
    %240 = vmatmul.mubr.f32.gmra.mrb[0].mxu0 %v134
    %v241 = vpop.f32.mrb[0].mxu0
    %v242 = vadd.f32 %v102, %v241
    %v243 = vpop.f32.mrb[0].mxu0
    %v244 = vadd.f32 %v106, %v243
    %245 = vmatprep.mubr.f32.mxu0 0.0
    %246 = vmatmul.mubr.f32.gmra.mrb[0].mxu0 %v137
    %v247 = vpop.f32.mrb[0].mxu0
    %v248 = vadd.f32 %v102, %v247
    %v249 = vpop.f32.mrb[0].mxu0
    %v250 = vadd.f32 %v106, %v249
    %251 = vmatprep.mubr.f32.mxu0 0.0
    %252 = vmatmul.mubr.f32.gmra.mrb[0].mxu0 %v140
    %v253 = vpop.f32.mrb[0].mxu0
    %v254 = vadd.f32 %v102, %v253
    %v255 = vpop.f32.mrb[0].mxu0
    %v256 = vadd.f32 %v106, %v255
    %257 = vmatprep.mubr.f32.mxu0 0.0
    %258 = vmatmul.mubr.f32.gmra.mrb[0].mxu0 %v143
    %v259 = vpop.f32.mrb[0].mxu0
    %v260 = vadd.f32 %v102, %v259
    %v261 = vpop.f32.mrb[0].mxu0
    %v262 = vadd.f32 %v106, %v261
    %263 = vmatprep.mubr.f32.mxu0 0.0
    %264 = vmatmul.mubr.f32.gmra.mrb[0].mxu0 %v146
    %v265 = vpop.f32.mrb[0].mxu0
    %v266 = vadd.f32 %v102, %v265
    %v267 = vpop.f32.mrb[0].mxu0
    %v268 = vadd.f32 %v106, %v267
    %269 = vdwg.mxu0
    %270 = vmatprep.subr.mxu0 %v155
    %271 = vmatpush1.msra.mxu0 %v153
    %272 = vmatprep.subr.mxu0 0.0
    %273 = vmatpush1.msra.mxu0 0.0
    %274 = vmatprep.subr.mxu0 0.0
    %275 = vmatpush1.msra.mxu0 0.0
    %276 = vmatprep.subr.mxu0 0.0
    %277 = vmatpush1.msra.mxu0 0.0
    %278 = vmatprep.subr.mxu0 0.0
    %279 = vmatpush1.msra.mxu0 0.0
    %280 = vmatprep.subr.mxu0 0.0
    %281 = vmatpush1.msra.mxu0 0.0
    %282 = vmatprep.subr.mxu0 0.0
    %283 = vmatpush1.msra.mxu0 0.0
    %284 = vmatprep.subr.mxu0 0.0
    %285 = vmatpush1.msra.mxu0 0.0
    %286 = vmatprep.subr.mxu0 0.0
    %287 = vmatpush1.msra.mxu0 0.0
    %288 = vmatprep.subr.mxu0 0.0
    %289 = vmatpush1.msra.mxu0 0.0
    %290 = vmatprep.subr.mxu0 0.0
    %291 = vmatpush1.msra.mxu0 0.0
    %292 = vmatprep.subr.mxu0 0.0
    %293 = vmatpush1.msra.mxu0 0.0
    %294 = vmatprep.subr.mxu0 0.0
    %295 = vmatpush1.msra.mxu0 0.0
    %296 = vmatprep.subr.mxu0 0.0
    %297 = vmatpush1.msra.mxu0 0.0
    %298 = vmatprep.subr.mxu0 0.0
    %299 = vmatpush1.msra.mxu0 0.0
    %300 = vmatprep.subr.mxu0 0.0
    %301 = vmatpush1.msra.mxu0 0.0
    %302 = vmatprep.subr.mxu0 0.0
    %303 = vmatpush1.msra.mxu0 0.0
    %304 = vmatprep.subr.mxu0 0.0
    %305 = vmatpush1.msra.mxu0 0.0
    %306 = vmatprep.subr.mxu0 0.0
    %307 = vmatpush1.msra.mxu0 0.0
    %308 = vmatprep.subr.mxu0 0.0
    %309 = vmatpush1.msra.mxu0 0.0
    %310 = vmatprep.subr.mxu0 0.0
    %311 = vmatpush1.msra.mxu0 0.0
    %312 = vmatprep.subr.mxu0 0.0
    %313 = vmatpush1.msra.mxu0 0.0
    %314 = vmatprep.subr.mxu0 0.0
    %315 = vmatpush1.msra.mxu0 0.0
    %316 = vmatprep.subr.mxu0 0.0
    %317 = vmatpush1.msra.mxu0 0.0
    %318 = vmatprep.subr.mxu0 0.0
    %319 = vmatpush1.msra.mxu0 0.0
    %320 = vmatprep.subr.mxu0 0.0
    %321 = vmatpush1.msra.mxu0 0.0
    %322 = vmatprep.subr.mxu0 0.0
    %323 = vmatpush1.msra.mxu0 0.0
    %324 = vmatprep.subr.mxu0 0.0
    %325 = vmatpush1.msra.mxu0 0.0
    %326 = vmatprep.subr.mxu0 0.0
    %327 = vmatpush1.msra.mxu0 0.0
    %328 = vmatprep.subr.mxu0 0.0
    %329 = vmatpush1.msra.mxu0 0.0
    %330 = vmatprep.subr.mxu0 0.0
    %331 = vmatpush1.msra.mxu0 0.0
    %332 = vmatprep.subr.mxu0 0.0
    %333 = vmatpush1.msra.mxu0 0.0
    %334 = vmatprep.mubr.f32.mxu0 0.0
    %335 = vmatmul.mubr.f32.gmra.mrb[0].mxu0 %v125
    %v336 = vpop.f32.mrb[0].mxu0
    %v337 = vadd.f32 %v110, %v336
    %v338 = vpop.f32.mrb[0].mxu0
    %v339 = vadd.f32 %v114, %v338
    %340 = vmatprep.mubr.f32.mxu0 0.0
    %341 = vmatmul.mubr.f32.gmra.mrb[0].mxu0 %v128
    %v342 = vpop.f32.mrb[0].mxu0
    %v343 = vadd.f32 %v110, %v342
    %v344 = vpop.f32.mrb[0].mxu0
    %v345 = vadd.f32 %v114, %v344
    %346 = vmatprep.mubr.f32.mxu0 0.0
    %347 = vmatmul.mubr.f32.gmra.mrb[0].mxu0 %v131
    %v348 = vpop.f32.mrb[0].mxu0
    %v349 = vadd.f32 %v110, %v348
    %v350 = vpop.f32.mrb[0].mxu0
    %v351 = vadd.f32 %v114, %v350
    %352 = vmatprep.mubr.f32.mxu0 0.0
    %353 = vmatmul.mubr.f32.gmra.mrb[0].mxu0 %v134
    %v354 = vpop.f32.mrb[0].mxu0
    %v355 = vadd.f32 %v110, %v354
    %v356 = vpop.f32.mrb[0].mxu0
    %v357 = vadd.f32 %v114, %v356
    %358 = vmatprep.mubr.f32.mxu0 0.0
    %359 = vmatmul.mubr.f32.gmra.mrb[0].mxu0 %v137
    %v360 = vpop.f32.mrb[0].mxu0
    %v361 = vadd.f32 %v110, %v360
    %v362 = vpop.f32.mrb[0].mxu0
    %v363 = vadd.f32 %v114, %v362
    %364 = vmatprep.mubr.f32.mxu0 0.0
    %365 = vmatmul.mubr.f32.gmra.mrb[0].mxu0 %v140
    %v366 = vpop.f32.mrb[0].mxu0
    %v367 = vadd.f32 %v110, %v366
    %v368 = vpop.f32.mrb[0].mxu0
    %v369 = vadd.f32 %v114, %v368
    %370 = vmatprep.mubr.f32.mxu0 0.0
    %371 = vmatmul.mubr.f32.gmra.mrb[0].mxu0 %v143
    %v372 = vpop.f32.mrb[0].mxu0
    %v373 = vadd.f32 %v110, %v372
    %v374 = vpop.f32.mrb[0].mxu0
    %v375 = vadd.f32 %v114, %v374
    %376 = vmatprep.mubr.f32.mxu0 0.0
    %377 = vmatmul.mubr.f32.gmra.mrb[0].mxu0 %v146
    %v378 = vpop.f32.mrb[0].mxu0
    %v379 = vadd.f32 %v110, %v378
    %v380 = vpop.f32.mrb[0].mxu0
    %v381 = vadd.f32 %v114, %v380
    %382 = vdwg.mxu0
    %383 = vst [vmem:[#allocation2] sm:$0xff] %v224
    %384 = vst [vmem:[#allocation2 + $0x8] sm:$0xff] %v226
    %385 = vst [vmem:[#allocation2 + $0x10] sm:$0xff] %v337
    %386 = vst [vmem:[#allocation2 + $0x18] sm:$0xff] %v339
    %387 = vst [vmem:[#allocation2 + $0x20] sm:$0xff] %v230
    %388 = vst [vmem:[#allocation2 + $0x28] sm:$0xff] %v232
    %389 = vst [vmem:[#allocation2 + $0x30] sm:$0xff] %v343
    %390 = vst [vmem:[#allocation2 + $0x38] sm:$0xff] %v345
    %391 = vst [vmem:[#allocation2 + $0x40] sm:$0xff] %v236
    %392 = vst [vmem:[#allocation2 + $0x48] sm:$0xff] %v238
    %393 = vst [vmem:[#allocation2 + $0x50] sm:$0xff] %v349
    %394 = vst [vmem:[#allocation2 + $0x58] sm:$0xff] %v351
    %395 = vst [vmem:[#allocation2 + $0x60] sm:$0xff] %v242
    %396 = vst [vmem:[#allocation2 + $0x68] sm:$0xff] %v244
    %397 = vst [vmem:[#allocation2 + $0x70] sm:$0xff] %v355
    %398 = vst [vmem:[#allocation2 + $0x78] sm:$0xff] %v357
    %399 = vst [vmem:[#allocation2 + $0x80] sm:$0xff] %v248
    %400 = vst [vmem:[#allocation2 + $0x88] sm:$0xff] %v250
    %401 = vst [vmem:[#allocation2 + $0x90] sm:$0xff] %v361
    %402 = vst [vmem:[#allocation2 + $0x98] sm:$0xff] %v363
    %403 = vst [vmem:[#allocation2 + $0xa0] sm:$0xff] %v254
    %404 = vst [vmem:[#allocation2 + $0xa8] sm:$0xff] %v256
    %405 = vst [vmem:[#allocation2 + $0xb0] sm:$0xff] %v367
    %406 = vst [vmem:[#allocation2 + $0xb8] sm:$0xff] %v369
    %407 = vst [vmem:[#allocation2 + $0xc0] sm:$0xff] %v260
    %408 = vst [vmem:[#allocation2 + $0xc8] sm:$0xff] %v262
    %409 = vst [vmem:[#allocation2 + $0xd0] sm:$0xff] %v373
    %410 = vst [vmem:[#allocation2 + $0xd8] sm:$0xff] %v375
    %411 = vst [vmem:[#allocation2 + $0xe0] sm:$0xff] %v266
    %412 = vst [vmem:[#allocation2 + $0xe8] sm:$0xff] %v268
    %413 = vst [vmem:[#allocation2 + $0xf0] sm:$0xff] %v379
    %414 = vst [vmem:[#allocation2 + $0xf8] sm:$0xff] %v381
    %v415 = vld [vmem:[#allocation2] sm:$0xff]
    %v416 = vld [vmem:[#allocation2 + $0x8] sm:$0xff]
    %v417 = vld [vmem:[#allocation2 + $0x10] sm:$0xff]
    %v418 = vld [vmem:[#allocation2 + $0x18] sm:$0xff]
    %v419 = vld [vmem:[#allocation4] sm:$0xff]
    %v420 = vld [vmem:[#allocation4 + $0x8] sm:$0xff]
    %v421 = vld [vmem:[#allocation4 + $0x10] sm:$0xff]
    %v422 = vld [vmem:[#allocation4 + $0x18] sm:$0xff]
    %v423 = vld [vmem:[#allocation4 + $0x20] sm:$0xff]
    %v424 = vld [vmem:[#allocation4 + $0x28] sm:$0xff]
    %v425 = vld [vmem:[#allocation4 + $0x30] sm:$0xff]
    %v426 = vld [vmem:[#allocation4 + $0x38] sm:$0xff]
    %v427 = vld [vmem:[#allocation4 + $0x40] sm:$0xff]
    %v428 = vld [vmem:[#allocation4 + $0x48] sm:$0xff]
    %v429 = vld [vmem:[#allocation4 + $0x50] sm:$0xff]
    %v430 = vld [vmem:[#allocation4 + $0x58] sm:$0xff]
    %v431 = vld [vmem:[#allocation4 + $0x60] sm:$0xff]
    %v432 = vld [vmem:[#allocation4 + $0x68] sm:$0xff]
    %v433 = vld [vmem:[#allocation4 + $0x70] sm:$0xff]
    %v434 = vld [vmem:[#allocation4 + $0x78] sm:$0xff]
    %v435 = vld [vmem:[#allocation4 + $0x80] sm:$0xff]
    %v436 = vld [vmem:[#allocation4 + $0x88] sm:$0xff]
    %v437 = vld [vmem:[#allocation4 + $0x90] sm:$0xff]
    %v438 = vld [vmem:[#allocation4 + $0x98] sm:$0xff]
    %v439 = vld [vmem:[#allocation4 + $0xa0] sm:$0xff]
    %v440 = vld [vmem:[#allocation4 + $0xa8] sm:$0xff]
    %v441 = vld [vmem:[#allocation4 + $0xb0] sm:$0xff]
    %v442 = vld [vmem:[#allocation4 + $0xb8] sm:$0xff]
    %v443 = vld [vmem:[#allocation4 + $0xc0] sm:$0xff]
    %v444 = vld [vmem:[#allocation4 + $0xc8] sm:$0xff]
    %v445 = vld [vmem:[#allocation4 + $0xd0] sm:$0xff]
    %v446 = vld [vmem:[#allocation4 + $0xd8] sm:$0xff]
    %v447 = vld [vmem:[#allocation4 + $0xe0] sm:$0xff]
    %v448 = vld [vmem:[#allocation4 + $0xe8] sm:$0xff]
    %v449 = vld [vmem:[#allocation4 + $0xf0] sm:$0xff]
    %v450 = vld [vmem:[#allocation4 + $0xf8] sm:$0xff]
    %v451 = vld [vmem:[#allocation4 + $0x100] sm:$0xff]
    %v452 = vld [vmem:[#allocation4 + $0x108] sm:$0xff]
    %v453 = vld [vmem:[#allocation4 + $0x110] sm:$0xff]
    %v454 = vld [vmem:[#allocation4 + $0x118] sm:$0xff]
    %v455 = vld [vmem:[#allocation4 + $0x120] sm:$0xff]
    %v456 = vld [vmem:[#allocation4 + $0x128] sm:$0xff]
    %v457 = vld [vmem:[#allocation4 + $0x130] sm:$0xff]
    %v458 = vld [vmem:[#allocation4 + $0x138] sm:$0xff]
    %v459 = vld [vmem:[#allocation4 + $0x140] sm:$0xff]
    %v460 = vld [vmem:[#allocation4 + $0x148] sm:$0xff]
    %v461 = vld [vmem:[#allocation4 + $0x150] sm:$0xff]
    %v462 = vld [vmem:[#allocation4 + $0x158] sm:$0xff]
    %v463 = vld [vmem:[#allocation4 + $0x160] sm:$0xff]
    %v464 = vld [vmem:[#allocation4 + $0x168] sm:$0xff]
    %v465 = vld [vmem:[#allocation4 + $0x170] sm:$0xff]
    %v466 = vld [vmem:[#allocation4 + $0x178] sm:$0xff]
    %v467 = vld [vmem:[#allocation4 + $0x180] sm:$0xff]
    %v468 = vld [vmem:[#allocation4 + $0x188] sm:$0xff]
    %v469 = vld [vmem:[#allocation4 + $0x190] sm:$0xff]
    %v470 = vld [vmem:[#allocation4 + $0x198] sm:$0xff]
    %v471 = vld [vmem:[#allocation4 + $0x1a0] sm:$0xff]
    %v472 = vld [vmem:[#allocation4 + $0x1a8] sm:$0xff]
    %v473 = vld [vmem:[#allocation4 + $0x1b0] sm:$0xff]
    %v474 = vld [vmem:[#allocation4 + $0x1b8] sm:$0xff]
    %v475 = vld [vmem:[#allocation4 + $0x1c0] sm:$0xff]
    %v476 = vld [vmem:[#allocation4 + $0x1c8] sm:$0xff]
    %v477 = vld [vmem:[#allocation4 + $0x1d0] sm:$0xff]
    %v478 = vld [vmem:[#allocation4 + $0x1d8] sm:$0xff]
    %v479 = vld [vmem:[#allocation4 + $0x1e0] sm:$0xff]
    %v480 = vld [vmem:[#allocation4 + $0x1e8] sm:$0xff]
    %v481 = vld [vmem:[#allocation4 + $0x1f0] sm:$0xff]
    %v482 = vld [vmem:[#allocation4 + $0x1f8] sm:$0xff]
    %483 = vmatprep.subr.mxu0 %v420
    %484 = vmatpush1.msra.mxu0 %v419
    %485 = vmatprep.subr.mxu0 %v424
    %486 = vmatpush1.msra.mxu0 %v423
    %487 = vmatprep.subr.mxu0 %v428
    %488 = vmatpush1.msra.mxu0 %v427
    %489 = vmatprep.subr.mxu0 %v432
    %490 = vmatpush1.msra.mxu0 %v431
    %491 = vmatprep.subr.mxu0 %v436
    %492 = vmatpush1.msra.mxu0 %v435
    %493 = vmatprep.subr.mxu0 %v440
    %494 = vmatpush1.msra.mxu0 %v439
    %495 = vmatprep.subr.mxu0 %v444
    %496 = vmatpush1.msra.mxu0 %v443
    %497 = vmatprep.subr.mxu0 %v448
    %498 = vmatpush1.msra.mxu0 %v447
    %499 = vmatprep.subr.mxu0 %v452
    %500 = vmatpush1.msra.mxu0 %v451
    %501 = vmatprep.subr.mxu0 %v456
    %502 = vmatpush1.msra.mxu0 %v455
    %503 = vmatprep.subr.mxu0 %v460
    %504 = vmatpush1.msra.mxu0 %v459
    %505 = vmatprep.subr.mxu0 %v464
    %506 = vmatpush1.msra.mxu0 %v463
    %507 = vmatprep.subr.mxu0 %v468
    %508 = vmatpush1.msra.mxu0 %v467
    %509 = vmatprep.subr.mxu0 %v472
    %510 = vmatpush1.msra.mxu0 %v471
    %511 = vmatprep.subr.mxu0 %v476
    %512 = vmatpush1.msra.mxu0 %v475
    %513 = vmatprep.subr.mxu0 %v480
    %514 = vmatpush1.msra.mxu0 %v479
    %515 = vmatprep.subr.mxu0 0.0
    %516 = vmatpush1.msra.mxu0 0.0
    %517 = vmatprep.subr.mxu0 0.0
    %518 = vmatpush1.msra.mxu0 0.0
    %519 = vmatprep.subr.mxu0 0.0
    %520 = vmatpush1.msra.mxu0 0.0
    %521 = vmatprep.subr.mxu0 0.0
    %522 = vmatpush1.msra.mxu0 0.0
    %523 = vmatprep.subr.mxu0 0.0
    %524 = vmatpush1.msra.mxu0 0.0
    %525 = vmatprep.subr.mxu0 0.0
    %526 = vmatpush1.msra.mxu0 0.0
    %527 = vmatprep.subr.mxu0 0.0
    %528 = vmatpush1.msra.mxu0 0.0
    %529 = vmatprep.subr.mxu0 0.0
    %530 = vmatpush1.msra.mxu0 0.0
    %531 = vmatprep.subr.mxu0 0.0
    %532 = vmatpush1.msra.mxu0 0.0
    %533 = vmatprep.subr.mxu0 0.0
    %534 = vmatpush1.msra.mxu0 0.0
    %535 = vmatprep.subr.mxu0 0.0
    %536 = vmatpush1.msra.mxu0 0.0
    %537 = vmatprep.subr.mxu0 0.0
    %538 = vmatpush1.msra.mxu0 0.0
    %539 = vmatprep.subr.mxu0 0.0
    %540 = vmatpush1.msra.mxu0 0.0
    %541 = vmatprep.subr.mxu0 0.0
    %542 = vmatpush1.msra.mxu0 0.0
    %543 = vmatprep.subr.mxu0 0.0
    %544 = vmatpush1.msra.mxu0 0.0
    %545 = vmatprep.subr.mxu0 0.0
    %546 = vmatpush1.msra.mxu0 0.0
    %547 = vmatprep.mubr.f32.mxu0 0.0
    %548 = vmatmul.mubr.f32.gmra.mrb[0].mxu0 0.0
    %v549 = vpop.f32.mrb[0].mxu0
    %v550 = vadd.f32 0.0, %v549
    %v551 = vpop.f32.mrb[0].mxu0
    %v552 = vadd.f32 0.0, %v551
    %553 = vdwg.mxu0
    %554 = vmatprep.subr.mxu0 %v422
    %555 = vmatpush1.msra.mxu0 %v421
    %556 = vmatprep.subr.mxu0 %v426
    %557 = vmatpush1.msra.mxu0 %v425
    %558 = vmatprep.subr.mxu0 %v430
    %559 = vmatpush1.msra.mxu0 %v429
    %560 = vmatprep.subr.mxu0 %v434
    %561 = vmatpush1.msra.mxu0 %v433
    %562 = vmatprep.subr.mxu0 %v438
    %563 = vmatpush1.msra.mxu0 %v437
    %564 = vmatprep.subr.mxu0 %v442
    %565 = vmatpush1.msra.mxu0 %v441
    %566 = vmatprep.subr.mxu0 %v446
    %567 = vmatpush1.msra.mxu0 %v445
    %568 = vmatprep.subr.mxu0 %v450
    %569 = vmatpush1.msra.mxu0 %v449
    %570 = vmatprep.subr.mxu0 %v454
    %571 = vmatpush1.msra.mxu0 %v453
    %572 = vmatprep.subr.mxu0 %v458
    %573 = vmatpush1.msra.mxu0 %v457
    %574 = vmatprep.subr.mxu0 %v462
    %575 = vmatpush1.msra.mxu0 %v461
    %576 = vmatprep.subr.mxu0 %v466
    %577 = vmatpush1.msra.mxu0 %v465
    %578 = vmatprep.subr.mxu0 %v470
    %579 = vmatpush1.msra.mxu0 %v469
    %580 = vmatprep.subr.mxu0 %v474
    %581 = vmatpush1.msra.mxu0 %v473
    %582 = vmatprep.subr.mxu0 %v478
    %583 = vmatpush1.msra.mxu0 %v477
    %584 = vmatprep.subr.mxu0 %v482
    %585 = vmatpush1.msra.mxu0 %v481
    %586 = vmatprep.subr.mxu0 0.0
    %587 = vmatpush1.msra.mxu0 0.0
    %588 = vmatprep.subr.mxu0 0.0
    %589 = vmatpush1.msra.mxu0 0.0
    %590 = vmatprep.subr.mxu0 0.0
    %591 = vmatpush1.msra.mxu0 0.0
    %592 = vmatprep.subr.mxu0 0.0
    %593 = vmatpush1.msra.mxu0 0.0
    %594 = vmatprep.subr.mxu0 0.0
    %595 = vmatpush1.msra.mxu0 0.0
    %596 = vmatprep.subr.mxu0 0.0
    %597 = vmatpush1.msra.mxu0 0.0
    %598 = vmatprep.subr.mxu0 0.0
    %599 = vmatpush1.msra.mxu0 0.0
    %600 = vmatprep.subr.mxu0 0.0
    %601 = vmatpush1.msra.mxu0 0.0
    %602 = vmatprep.subr.mxu0 0.0
    %603 = vmatpush1.msra.mxu0 0.0
    %604 = vmatprep.subr.mxu0 0.0
    %605 = vmatpush1.msra.mxu0 0.0
    %606 = vmatprep.subr.mxu0 0.0
    %607 = vmatpush1.msra.mxu0 0.0
    %608 = vmatprep.subr.mxu0 0.0
    %609 = vmatpush1.msra.mxu0 0.0
    %610 = vmatprep.subr.mxu0 0.0
    %611 = vmatpush1.msra.mxu0 0.0
    %612 = vmatprep.subr.mxu0 0.0
    %613 = vmatpush1.msra.mxu0 0.0
    %614 = vmatprep.subr.mxu0 0.0
    %615 = vmatpush1.msra.mxu0 0.0
    %616 = vmatprep.subr.mxu0 0.0
    %617 = vmatpush1.msra.mxu0 0.0
    %618 = vmatprep.mubr.f32.mxu0 0.0
    %619 = vmatmul.mubr.f32.gmra.mrb[0].mxu0 0.0
    %v620 = vpop.f32.mrb[0].mxu0
    %v621 = vadd.f32 0.0, %v620
    %v622 = vpop.f32.mrb[0].mxu0
    %v623 = vadd.f32 0.0, %v622
    %624 = vdwg.mxu0
    %v625 = vadd.f32 %v415, %v550
    %v626 = vadd.f32 %v416, %v552
    %v627 = vadd.f32 %v417, %v621
    %v628 = vadd.f32 %v418, %v623
    %v629 = vxor.u32 %v625, 2147483648
    %v630 = vmul.f32 %v629, 1.442695
    %v631 = vpow.pop %v630
    %v632 = vadd.f32 %v631, 1.0
    %v633 = vrcp.pop %v632
    %v634 = vmul.f32 1.0, %v633
    %v635 = vxor.u32 %v626, 2147483648
    %v636 = vmul.f32 %v635, 1.442695
    %v637 = vpow.pop %v636
    %v638 = vadd.f32 %v637, 1.0
    %v639 = vrcp.pop %v638
    %v640 = vmul.f32 1.0, %v639
    %v641 = vtanh.pop %v627
    %v642 = vxor.u32 %v628, 2147483648
    %v643 = vmul.f32 %v642, 1.442695
    %v644 = vpow.pop %v643
    %v645 = vadd.f32 %v644, 1.0
    %v646 = vrcp.pop %v645
    %v647 = vmul.f32 1.0, %v646
    %v648 = vmul.f32 %v640, 0.0
    %v649 = vmul.f32 %v634, %v641
    %v650 = vadd.f32 %v648, %v649
    %v651 = vtanh.pop %v650
    %v652 = vmul.f32 %v647, %v651
    %653 = vst [vmem:[#allocation3] sm:$0xff] %v652
    %v654 = vld [vmem:[#allocation2 + $0x20] sm:$0xff]
    %v655 = vld [vmem:[#allocation2 + $0x28] sm:$0xff]
    %v656 = vld [vmem:[#allocation2 + $0x30] sm:$0xff]
    %v657 = vld [vmem:[#allocation2 + $0x38] sm:$0xff]
    %v658 = vld [vmem:[#allocation4] sm:$0xff]
    %v659 = vld [vmem:[#allocation4 + $0x8] sm:$0xff]
    %v660 = vld [vmem:[#allocation4 + $0x10] sm:$0xff]
    %v661 = vld [vmem:[#allocation4 + $0x18] sm:$0xff]
    %v662 = vld [vmem:[#allocation4 + $0x20] sm:$0xff]
    %v663 = vld [vmem:[#allocation4 + $0x28] sm:$0xff]
    %v664 = vld [vmem:[#allocation4 + $0x30] sm:$0xff]
    %v665 = vld [vmem:[#allocation4 + $0x38] sm:$0xff]
    %v666 = vld [vmem:[#allocation4 + $0x40] sm:$0xff]
    %v667 = vld [vmem:[#allocation4 + $0x48] sm:$0xff]
    %v668 = vld [vmem:[#allocation4 + $0x50] sm:$0xff]
    %v669 = vld [vmem:[#allocation4 + $0x58] sm:$0xff]
    %v670 = vld [vmem:[#allocation4 + $0x60] sm:$0xff]
    %v671 = vld [vmem:[#allocation4 + $0x68] sm:$0xff]
    %v672 = vld [vmem:[#allocation4 + $0x70] sm:$0xff]
    %v673 = vld [vmem:[#allocation4 + $0x78] sm:$0xff]
    %v674 = vld [vmem:[#allocation4 + $0x80] sm:$0xff]
    %v675 = vld [vmem:[#allocation4 + $0x88] sm:$0xff]
    %v676 = vld [vmem:[#allocation4 + $0x90] sm:$0xff]
    %v677 = vld [vmem:[#allocation4 + $0x98] sm:$0xff]
    %v678 = vld [vmem:[#allocation4 + $0xa0] sm:$0xff]
    %v679 = vld [vmem:[#allocation4 + $0xa8] sm:$0xff]
    %v680 = vld [vmem:[#allocation4 + $0xb0] sm:$0xff]
    %v681 = vld [vmem:[#allocation4 + $0xb8] sm:$0xff]
    %v682 = vld [vmem:[#allocation4 + $0xc0] sm:$0xff]
    %v683 = vld [vmem:[#allocation4 + $0xc8] sm:$0xff]
    %v684 = vld [vmem:[#allocation4 + $0xd0] sm:$0xff]
    %v685 = vld [vmem:[#allocation4 + $0xd8] sm:$0xff]
    %v686 = vld [vmem:[#allocation4 + $0xe0] sm:$0xff]
    %v687 = vld [vmem:[#allocation4 + $0xe8] sm:$0xff]
    %v688 = vld [vmem:[#allocation4 + $0xf0] sm:$0xff]
    %v689 = vld [vmem:[#allocation4 + $0xf8] sm:$0xff]
    %v690 = vld [vmem:[#allocation4 + $0x100] sm:$0xff]
    %v691 = vld [vmem:[#allocation4 + $0x108] sm:$0xff]
    %v692 = vld [vmem:[#allocation4 + $0x110] sm:$0xff]
    %v693 = vld [vmem:[#allocation4 + $0x118] sm:$0xff]
    %v694 = vld [vmem:[#allocation4 + $0x120] sm:$0xff]
    %v695 = vld [vmem:[#allocation4 + $0x128] sm:$0xff]
    %v696 = vld [vmem:[#allocation4 + $0x130] sm:$0xff]
    %v697 = vld [vmem:[#allocation4 + $0x138] sm:$0xff]
    %v698 = vld [vmem:[#allocation4 + $0x140] sm:$0xff]
    %v699 = vld [vmem:[#allocation4 + $0x148] sm:$0xff]
    %v700 = vld [vmem:[#allocation4 + $0x150] sm:$0xff]
    %v701 = vld [vmem:[#allocation4 + $0x158] sm:$0xff]
    %v702 = vld [vmem:[#allocation4 + $0x160] sm:$0xff]
    %v703 = vld [vmem:[#allocation4 + $0x168] sm:$0xff]
    %v704 = vld [vmem:[#allocation4 + $0x170] sm:$0xff]
    %v705 = vld [vmem:[#allocation4 + $0x178] sm:$0xff]
    %v706 = vld [vmem:[#allocation4 + $0x180] sm:$0xff]
    %v707 = vld [vmem:[#allocation4 + $0x188] sm:$0xff]
    %v708 = vld [vmem:[#allocation4 + $0x190] sm:$0xff]
    %v709 = vld [vmem:[#allocation4 + $0x198] sm:$0xff]
    %v710 = vld [vmem:[#allocation4 + $0x1a0] sm:$0xff]
    %v711 = vld [vmem:[#allocation4 + $0x1a8] sm:$0xff]
    %v712 = vld [vmem:[#allocation4 + $0x1b0] sm:$0xff]
    %v713 = vld [vmem:[#allocation4 + $0x1b8] sm:$0xff]
    %v714 = vld [vmem:[#allocation4 + $0x1c0] sm:$0xff]
    %v715 = vld [vmem:[#allocation4 + $0x1c8] sm:$0xff]
    %v716 = vld [vmem:[#allocation4 + $0x1d0] sm:$0xff]
    %v717 = vld [vmem:[#allocation4 + $0x1d8] sm:$0xff]
    %v718 = vld [vmem:[#allocation4 + $0x1e0] sm:$0xff]
    %v719 = vld [vmem:[#allocation4 + $0x1e8] sm:$0xff]
    %v720 = vld [vmem:[#allocation4 + $0x1f0] sm:$0xff]
    %v721 = vld [vmem:[#allocation4 + $0x1f8] sm:$0xff]
    %722 = vmatprep.subr.mxu0 %v659
    %723 = vmatpush1.msra.mxu0 %v658
    %724 = vmatprep.subr.mxu0 %v663
    %725 = vmatpush1.msra.mxu0 %v662
    %726 = vmatprep.subr.mxu0 %v667
    %727 = vmatpush1.msra.mxu0 %v666
    %728 = vmatprep.subr.mxu0 %v671
    %729 = vmatpush1.msra.mxu0 %v670
    %730 = vmatprep.subr.mxu0 %v675
    %731 = vmatpush1.msra.mxu0 %v674
    %732 = vmatprep.subr.mxu0 %v679
    %733 = vmatpush1.msra.mxu0 %v678
    %734 = vmatprep.subr.mxu0 %v683
    %735 = vmatpush1.msra.mxu0 %v682
    %736 = vmatprep.subr.mxu0 %v687
    %737 = vmatpush1.msra.mxu0 %v686
    %738 = vmatprep.subr.mxu0 %v691
    %739 = vmatpush1.msra.mxu0 %v690
    %740 = vmatprep.subr.mxu0 %v695
    %741 = vmatpush1.msra.mxu0 %v694
    %742 = vmatprep.subr.mxu0 %v699
    %743 = vmatpush1.msra.mxu0 %v698
    %744 = vmatprep.subr.mxu0 %v703
    %745 = vmatpush1.msra.mxu0 %v702
    %746 = vmatprep.subr.mxu0 %v707
    %747 = vmatpush1.msra.mxu0 %v706
    %748 = vmatprep.subr.mxu0 %v711
    %749 = vmatpush1.msra.mxu0 %v710
    %750 = vmatprep.subr.mxu0 %v715
    %751 = vmatpush1.msra.mxu0 %v714
    %752 = vmatprep.subr.mxu0 %v719
    %753 = vmatpush1.msra.mxu0 %v718
    %754 = vmatprep.subr.mxu0 0.0
    %755 = vmatpush1.msra.mxu0 0.0
    %756 = vmatprep.subr.mxu0 0.0
    %757 = vmatpush1.msra.mxu0 0.0
    %758 = vmatprep.subr.mxu0 0.0
    %759 = vmatpush1.msra.mxu0 0.0
    %760 = vmatprep.subr.mxu0 0.0
    %761 = vmatpush1.msra.mxu0 0.0
    %762 = vmatprep.subr.mxu0 0.0
    %763 = vmatpush1.msra.mxu0 0.0
    %764 = vmatprep.subr.mxu0 0.0
    %765 = vmatpush1.msra.mxu0 0.0
    %766 = vmatprep.subr.mxu0 0.0
    %767 = vmatpush1.msra.mxu0 0.0
    %768 = vmatprep.subr.mxu0 0.0
    %769 = vmatpush1.msra.mxu0 0.0
    %770 = vmatprep.subr.mxu0 0.0
    %771 = vmatpush1.msra.mxu0 0.0
    %772 = vmatprep.subr.mxu0 0.0
    %773 = vmatpush1.msra.mxu0 0.0
    %774 = vmatprep.subr.mxu0 0.0
    %775 = vmatpush1.msra.mxu0 0.0
    %776 = vmatprep.subr.mxu0 0.0
    %777 = vmatpush1.msra.mxu0 0.0
    %778 = vmatprep.subr.mxu0 0.0
    %779 = vmatpush1.msra.mxu0 0.0
    %780 = vmatprep.subr.mxu0 0.0
    %781 = vmatpush1.msra.mxu0 0.0
    %782 = vmatprep.subr.mxu0 0.0
    %783 = vmatpush1.msra.mxu0 0.0
    %784 = vmatprep.subr.mxu0 0.0
    %785 = vmatpush1.msra.mxu0 0.0
    %786 = vmatprep.mubr.f32.mxu0 0.0
    %787 = vmatmul.mubr.f32.gmra.mrb[0].mxu0 %v652
    %v788 = vpop.f32.mrb[0].mxu0
    %v789 = vadd.f32 0.0, %v788
    %v790 = vpop.f32.mrb[0].mxu0
    %v791 = vadd.f32 0.0, %v790
    %792 = vdwg.mxu0
    %793 = vmatprep.subr.mxu0 %v661
    %794 = vmatpush1.msra.mxu0 %v660
    %795 = vmatprep.subr.mxu0 %v665
    %796 = vmatpush1.msra.mxu0 %v664
    %797 = vmatprep.subr.mxu0 %v669
    %798 = vmatpush1.msra.mxu0 %v668
    %799 = vmatprep.subr.mxu0 %v673
    %800 = vmatpush1.msra.mxu0 %v672
    %801 = vmatprep.subr.mxu0 %v677
    %802 = vmatpush1.msra.mxu0 %v676
    %803 = vmatprep.subr.mxu0 %v681
    %804 = vmatpush1.msra.mxu0 %v680
    %805 = vmatprep.subr.mxu0 %v685
    %806 = vmatpush1.msra.mxu0 %v684
    %807 = vmatprep.subr.mxu0 %v689
    %808 = vmatpush1.msra.mxu0 %v688
    %809 = vmatprep.subr.mxu0 %v693
    %810 = vmatpush1.msra.mxu0 %v692
    %811 = vmatprep.subr.mxu0 %v697
    %812 = vmatpush1.msra.mxu0 %v696
    %813 = vmatprep.subr.mxu0 %v701
    %814 = vmatpush1.msra.mxu0 %v700
    %815 = vmatprep.subr.mxu0 %v705
    %816 = vmatpush1.msra.mxu0 %v704
    %817 = vmatprep.subr.mxu0 %v709
    %818 = vmatpush1.msra.mxu0 %v708
    %819 = vmatprep.subr.mxu0 %v713
    %820 = vmatpush1.msra.mxu0 %v712
    %821 = vmatprep.subr.mxu0 %v717
    %822 = vmatpush1.msra.mxu0 %v716
    %823 = vmatprep.subr.mxu0 %v721
    %824 = vmatpush1.msra.mxu0 %v720
    %825 = vmatprep.subr.mxu0 0.0
    %826 = vmatpush1.msra.mxu0 0.0
    %827 = vmatprep.subr.mxu0 0.0
    %828 = vmatpush1.msra.mxu0 0.0
    %829 = vmatprep.subr.mxu0 0.0
    %830 = vmatpush1.msra.mxu0 0.0
    %831 = vmatprep.subr.mxu0 0.0
    %832 = vmatpush1.msra.mxu0 0.0
    %833 = vmatprep.subr.mxu0 0.0
    %834 = vmatpush1.msra.mxu0 0.0
    %835 = vmatprep.subr.mxu0 0.0
    %836 = vmatpush1.msra.mxu0 0.0
    %837 = vmatprep.subr.mxu0 0.0
    %838 = vmatpush1.msra.mxu0 0.0
    %839 = vmatprep.subr.mxu0 0.0
    %840 = vmatpush1.msra.mxu0 0.0
    %841 = vmatprep.subr.mxu0 0.0
    %842 = vmatpush1.msra.mxu0 0.0
    %843 = vmatprep.subr.mxu0 0.0
    %844 = vmatpush1.msra.mxu0 0.0
    %845 = vmatprep.subr.mxu0 0.0
    %846 = vmatpush1.msra.mxu0 0.0
    %847 = vmatprep.subr.mxu0 0.0
    %848 = vmatpush1.msra.mxu0 0.0
    %849 = vmatprep.subr.mxu0 0.0
    %850 = vmatpush1.msra.mxu0 0.0
    %851 = vmatprep.subr.mxu0 0.0
    %852 = vmatpush1.msra.mxu0 0.0
    %853 = vmatprep.subr.mxu0 0.0
    %854 = vmatpush1.msra.mxu0 0.0
    %855 = vmatprep.subr.mxu0 0.0
    %856 = vmatpush1.msra.mxu0 0.0
    %857 = vmatprep.mubr.f32.mxu0 0.0
    %858 = vmatmul.mubr.f32.gmra.mrb[0].mxu0 %v652
    %v859 = vpop.f32.mrb[0].mxu0
    %v860 = vadd.f32 0.0, %v859
    %v861 = vpop.f32.mrb[0].mxu0
    %v862 = vadd.f32 0.0, %v861
    %863 = vdwg.mxu0
    %v864 = vadd.f32 %v654, %v789
    %v865 = vadd.f32 %v655, %v791
    %v866 = vadd.f32 %v656, %v860
    %v867 = vadd.f32 %v657, %v862
    %v868 = vxor.u32 %v864, 2147483648
    %v869 = vmul.f32 %v868, 1.442695
    %v870 = vpow.pop %v869
    %v871 = vadd.f32 %v870, 1.0
    %v872 = vrcp.pop %v871
    %v873 = vmul.f32 1.0, %v872
    %v874 = vxor.u32 %v865, 2147483648
    %v875 = vmul.f32 %v874, 1.442695
    %v876 = vpow.pop %v875
    %v877 = vadd.f32 %v876, 1.0
    %v878 = vrcp.pop %v877
    %v879 = vmul.f32 1.0, %v878
    %v880 = vtanh.pop %v866
    %v881 = vxor.u32 %v867, 2147483648
    %v882 = vmul.f32 %v881, 1.442695
    %v883 = vpow.pop %v882
    %v884 = vadd.f32 %v883, 1.0
    %v885 = vrcp.pop %v884
    %v886 = vmul.f32 1.0, %v885
    %v887 = vmul.f32 %v879, %v650
    %v888 = vmul.f32 %v873, %v880
    %v889 = vadd.f32 %v887, %v888
    %v890 = vtanh.pop %v889
    %v891 = vmul.f32 %v886, %v890
    %892 = vst [vmem:[#allocation3 + $0x8] sm:$0xff] %v891
    %v893 = vld [vmem:[#allocation2 + $0x40] sm:$0xff]
    %v894 = vld [vmem:[#allocation2 + $0x48] sm:$0xff]
    %v895 = vld [vmem:[#allocation2 + $0x50] sm:$0xff]
    %v896 = vld [vmem:[#allocation2 + $0x58] sm:$0xff]
    %v897 = vld [vmem:[#allocation4] sm:$0xff]
    %v898 = vld [vmem:[#allocation4 + $0x8] sm:$0xff]
    %v899 = vld [vmem:[#allocation4 + $0x10] sm:$0xff]
    %v900 = vld [vmem:[#allocation4 + $0x18] sm:$0xff]
    %v901 = vld [vmem:[#allocation4 + $0x20] sm:$0xff]
    %v902 = vld [vmem:[#allocation4 + $0x28] sm:$0xff]
    %v903 = vld [vmem:[#allocation4 + $0x30] sm:$0xff]
    %v904 = vld [vmem:[#allocation4 + $0x38] sm:$0xff]
    %v905 = vld [vmem:[#allocation4 + $0x40] sm:$0xff]
    %v906 = vld [vmem:[#allocation4 + $0x48] sm:$0xff]
    %v907 = vld [vmem:[#allocation4 + $0x50] sm:$0xff]
    %v908 = vld [vmem:[#allocation4 + $0x58] sm:$0xff]
    %v909 = vld [vmem:[#allocation4 + $0x60] sm:$0xff]
    %v910 = vld [vmem:[#allocation4 + $0x68] sm:$0xff]
    %v911 = vld [vmem:[#allocation4 + $0x70] sm:$0xff]
    %v912 = vld [vmem:[#allocation4 + $0x78] sm:$0xff]
    %v913 = vld [vmem:[#allocation4 + $0x80] sm:$0xff]
    %v914 = vld [vmem:[#allocation4 + $0x88] sm:$0xff]
    %v915 = vld [vmem:[#allocation4 + $0x90] sm:$0xff]
    %v916 = vld [vmem:[#allocation4 + $0x98] sm:$0xff]
    %v917 = vld [vmem:[#allocation4 + $0xa0] sm:$0xff]
    %v918 = vld [vmem:[#allocation4 + $0xa8] sm:$0xff]
    %v919 = vld [vmem:[#allocation4 + $0xb0] sm:$0xff]
    %v920 = vld [vmem:[#allocation4 + $0xb8] sm:$0xff]
    %v921 = vld [vmem:[#allocation4 + $0xc0] sm:$0xff]
    %v922 = vld [vmem:[#allocation4 + $0xc8] sm:$0xff]
    %v923 = vld [vmem:[#allocation4 + $0xd0] sm:$0xff]
    %v924 = vld [vmem:[#allocation4 + $0xd8] sm:$0xff]
    %v925 = vld [vmem:[#allocation4 + $0xe0] sm:$0xff]
    %v926 = vld [vmem:[#allocation4 + $0xe8] sm:$0xff]
    %v927 = vld [vmem:[#allocation4 + $0xf0] sm:$0xff]
    %v928 = vld [vmem:[#allocation4 + $0xf8] sm:$0xff]
    %v929 = vld [vmem:[#allocation4 + $0x100] sm:$0xff]
    %v930 = vld [vmem:[#allocation4 + $0x108] sm:$0xff]
    %v931 = vld [vmem:[#allocation4 + $0x110] sm:$0xff]
    %v932 = vld [vmem:[#allocation4 + $0x118] sm:$0xff]
    %v933 = vld [vmem:[#allocation4 + $0x120] sm:$0xff]
    %v934 = vld [vmem:[#allocation4 + $0x128] sm:$0xff]
    %v935 = vld [vmem:[#allocation4 + $0x130] sm:$0xff]
    %v936 = vld [vmem:[#allocation4 + $0x138] sm:$0xff]
    %v937 = vld [vmem:[#allocation4 + $0x140] sm:$0xff]
    %v938 = vld [vmem:[#allocation4 + $0x148] sm:$0xff]
    %v939 = vld [vmem:[#allocation4 + $0x150] sm:$0xff]
    %v940 = vld [vmem:[#allocation4 + $0x158] sm:$0xff]
    %v941 = vld [vmem:[#allocation4 + $0x160] sm:$0xff]
    %v942 = vld [vmem:[#allocation4 + $0x168] sm:$0xff]
    %v943 = vld [vmem:[#allocation4 + $0x170] sm:$0xff]
    %v944 = vld [vmem:[#allocation4 + $0x178] sm:$0xff]
    %v945 = vld [vmem:[#allocation4 + $0x180] sm:$0xff]
    %v946 = vld [vmem:[#allocation4 + $0x188] sm:$0xff]
    %v947 = vld [vmem:[#allocation4 + $0x190] sm:$0xff]
    %v948 = vld [vmem:[#allocation4 + $0x198] sm:$0xff]
    %v949 = vld [vmem:[#allocation4 + $0x1a0] sm:$0xff]
    %v950 = vld [vmem:[#allocation4 + $0x1a8] sm:$0xff]
    %v951 = vld [vmem:[#allocation4 + $0x1b0] sm:$0xff]
    %v952 = vld [vmem:[#allocation4 + $0x1b8] sm:$0xff]
    %v953 = vld [vmem:[#allocation4 + $0x1c0] sm:$0xff]
    %v954 = vld [vmem:[#allocation4 + $0x1c8] sm:$0xff]
    %v955 = vld [vmem:[#allocation4 + $0x1d0] sm:$0xff]
    %v956 = vld [vmem:[#allocation4 + $0x1d8] sm:$0xff]
    %v957 = vld [vmem:[#allocation4 + $0x1e0] sm:$0xff]
    %v958 = vld [vmem:[#allocation4 + $0x1e8] sm:$0xff]
    %v959 = vld [vmem:[#allocation4 + $0x1f0] sm:$0xff]
    %v960 = vld [vmem:[#allocation4 + $0x1f8] sm:$0xff]
    %961 = vmatprep.subr.mxu0 %v898
    %962 = vmatpush1.msra.mxu0 %v897
    %963 = vmatprep.subr.mxu0 %v902
    %964 = vmatpush1.msra.mxu0 %v901
    %965 = vmatprep.subr.mxu0 %v906
    %966 = vmatpush1.msra.mxu0 %v905
    %967 = vmatprep.subr.mxu0 %v910
    %968 = vmatpush1.msra.mxu0 %v909
    %969 = vmatprep.subr.mxu0 %v914
    %970 = vmatpush1.msra.mxu0 %v913
    %971 = vmatprep.subr.mxu0 %v918
    %972 = vmatpush1.msra.mxu0 %v917
    %973 = vmatprep.subr.mxu0 %v922
    %974 = vmatpush1.msra.mxu0 %v921
    %975 = vmatprep.subr.mxu0 %v926
    %976 = vmatpush1.msra.mxu0 %v925
    %977 = vmatprep.subr.mxu0 %v930
    %978 = vmatpush1.msra.mxu0 %v929
    %979 = vmatprep.subr.mxu0 %v934
    %980 = vmatpush1.msra.mxu0 %v933
    %981 = vmatprep.subr.mxu0 %v938
    %982 = vmatpush1.msra.mxu0 %v937
    %983 = vmatprep.subr.mxu0 %v942
    %984 = vmatpush1.msra.mxu0 %v941
    %985 = vmatprep.subr.mxu0 %v946
    %986 = vmatpush1.msra.mxu0 %v945
    %987 = vmatprep.subr.mxu0 %v950
    %988 = vmatpush1.msra.mxu0 %v949
    %989 = vmatprep.subr.mxu0 %v954
    %990 = vmatpush1.msra.mxu0 %v953
    %991 = vmatprep.subr.mxu0 %v958
    %992 = vmatpush1.msra.mxu0 %v957
    %993 = vmatprep.subr.mxu0 0.0
    %994 = vmatpush1.msra.mxu0 0.0
    %995 = vmatprep.subr.mxu0 0.0
    %996 = vmatpush1.msra.mxu0 0.0
    %997 = vmatprep.subr.mxu0 0.0
    %998 = vmatpush1.msra.mxu0 0.0
    %999 = vmatprep.subr.mxu0 0.0
    %1000 = vmatpush1.msra.mxu0 0.0
    %1001 = vmatprep.subr.mxu0 0.0
    %1002 = vmatpush1.msra.mxu0 0.0
    %1003 = vmatprep.subr.mxu0 0.0
    %1004 = vmatpush1.msra.mxu0 0.0
    %1005 = vmatprep.subr.mxu0 0.0
    %1006 = vmatpush1.msra.mxu0 0.0
    %1007 = vmatprep.subr.mxu0 0.0
    %1008 = vmatpush1.msra.mxu0 0.0
    %1009 = vmatprep.subr.mxu0 0.0
    %1010 = vmatpush1.msra.mxu0 0.0
    %1011 = vmatprep.subr.mxu0 0.0
    %1012 = vmatpush1.msra.mxu0 0.0
    %1013 = vmatprep.subr.mxu0 0.0
    %1014 = vmatpush1.msra.mxu0 0.0
    %1015 = vmatprep.subr.mxu0 0.0
    %1016 = vmatpush1.msra.mxu0 0.0
    %1017 = vmatprep.subr.mxu0 0.0
    %1018 = vmatpush1.msra.mxu0 0.0
    %1019 = vmatprep.subr.mxu0 0.0
    %1020 = vmatpush1.msra.mxu0 0.0
    %1021 = vmatprep.subr.mxu0 0.0
    %1022 = vmatpush1.msra.mxu0 0.0
    %1023 = vmatprep.subr.mxu0 0.0
    %1024 = vmatpush1.msra.mxu0 0.0
    %1025 = vmatprep.mubr.f32.mxu0 0.0
    %1026 = vmatmul.mubr.f32.gmra.mrb[0].mxu0 %v891
    %v1027 = vpop.f32.mrb[0].mxu0
    %v1028 = vadd.f32 0.0, %v1027
    %v1029 = vpop.f32.mrb[0].mxu0
    %v1030 = vadd.f32 0.0, %v1029
    %1031 = vdwg.mxu0
    %1032 = vmatprep.subr.mxu0 %v900
    %1033 = vmatpush1.msra.mxu0 %v899
    %1034 = vmatprep.subr.mxu0 %v904
    %1035 = vmatpush1.msra.mxu0 %v903
    %1036 = vmatprep.subr.mxu0 %v908
    %1037 = vmatpush1.msra.mxu0 %v907
    %1038 = vmatprep.subr.mxu0 %v912
    %1039 = vmatpush1.msra.mxu0 %v911
    %1040 = vmatprep.subr.mxu0 %v916
    %1041 = vmatpush1.msra.mxu0 %v915
    %1042 = vmatprep.subr.mxu0 %v920
    %1043 = vmatpush1.msra.mxu0 %v919
    %1044 = vmatprep.subr.mxu0 %v924
    %1045 = vmatpush1.msra.mxu0 %v923
    %1046 = vmatprep.subr.mxu0 %v928
    %1047 = vmatpush1.msra.mxu0 %v927
    %1048 = vmatprep.subr.mxu0 %v932
    %1049 = vmatpush1.msra.mxu0 %v931
    %1050 = vmatprep.subr.mxu0 %v936
    %1051 = vmatpush1.msra.mxu0 %v935
    %1052 = vmatprep.subr.mxu0 %v940
    %1053 = vmatpush1.msra.mxu0 %v939
    %1054 = vmatprep.subr.mxu0 %v944
    %1055 = vmatpush1.msra.mxu0 %v943
    %1056 = vmatprep.subr.mxu0 %v948
    %1057 = vmatpush1.msra.mxu0 %v947
    %1058 = vmatprep.subr.mxu0 %v952
    %1059 = vmatpush1.msra.mxu0 %v951
    %1060 = vmatprep.subr.mxu0 %v956
    %1061 = vmatpush1.msra.mxu0 %v955
    %1062 = vmatprep.subr.mxu0 %v960
    %1063 = vmatpush1.msra.mxu0 %v959
    %1064 = vmatprep.subr.mxu0 0.0
    %1065 = vmatpush1.msra.mxu0 0.0
    %1066 = vmatprep.subr.mxu0 0.0
    %1067 = vmatpush1.msra.mxu0 0.0
    %1068 = vmatprep.subr.mxu0 0.0
    %1069 = vmatpush1.msra.mxu0 0.0
    %1070 = vmatprep.subr.mxu0 0.0
    %1071 = vmatpush1.msra.mxu0 0.0
    %1072 = vmatprep.subr.mxu0 0.0
    %1073 = vmatpush1.msra.mxu0 0.0
    %1074 = vmatprep.subr.mxu0 0.0
    %1075 = vmatpush1.msra.mxu0 0.0
    %1076 = vmatprep.subr.mxu0 0.0
    %1077 = vmatpush1.msra.mxu0 0.0
    %1078 = vmatprep.subr.mxu0 0.0
    %1079 = vmatpush1.msra.mxu0 0.0
    %1080 = vmatprep.subr.mxu0 0.0
    %1081 = vmatpush1.msra.mxu0 0.0
    %1082 = vmatprep.subr.mxu0 0.0
    %1083 = vmatpush1.msra.mxu0 0.0
    %1084 = vmatprep.subr.mxu0 0.0
    %1085 = vmatpush1.msra.mxu0 0.0
    %1086 = vmatprep.subr.mxu0 0.0
    %1087 = vmatpush1.msra.mxu0 0.0
    %1088 = vmatprep.subr.mxu0 0.0
    %1089 = vmatpush1.msra.mxu0 0.0
    %1090 = vmatprep.subr.mxu0 0.0
    %1091 = vmatpush1.msra.mxu0 0.0
    %1092 = vmatprep.subr.mxu0 0.0
    %1093 = vmatpush1.msra.mxu0 0.0
    %1094 = vmatprep.subr.mxu0 0.0
    %1095 = vmatpush1.msra.mxu0 0.0
    %1096 = vmatprep.mubr.f32.mxu0 0.0
    %1097 = vmatmul.mubr.f32.gmra.mrb[0].mxu0 %v891
    %v1098 = vpop.f32.mrb[0].mxu0
    %v1099 = vadd.f32 0.0, %v1098
    %v1100 = vpop.f32.mrb[0].mxu0
    %v1101 = vadd.f32 0.0, %v1100
    %1102 = vdwg.mxu0
    %v1103 = vadd.f32 %v893, %v1028
    %v1104 = vadd.f32 %v894, %v1030
    %v1105 = vadd.f32 %v895, %v1099
    %v1106 = vadd.f32 %v896, %v1101
    %v1107 = vxor.u32 %v1103, 2147483648
    %v1108 = vmul.f32 %v1107, 1.442695
    %v1109 = vpow.pop %v1108
    %v1110 = vadd.f32 %v1109, 1.0
    %v1111 = vrcp.pop %v1110
    %v1112 = vmul.f32 1.0, %v1111
    %v1113 = vxor.u32 %v1104, 2147483648
    %v1114 = vmul.f32 %v1113, 1.442695
    %v1115 = vpow.pop %v1114
    %v1116 = vadd.f32 %v1115, 1.0
    %v1117 = vrcp.pop %v1116
    %v1118 = vmul.f32 1.0, %v1117
    %v1119 = vtanh.pop %v1105
    %v1120 = vxor.u32 %v1106, 2147483648
    %v1121 = vmul.f32 %v1120, 1.442695
    %v1122 = vpow.pop %v1121
    %v1123 = vadd.f32 %v1122, 1.0
    %v1124 = vrcp.pop %v1123
    %v1125 = vmul.f32 1.0, %v1124
    %v1126 = vmul.f32 %v1118, %v889
    %v1127 = vmul.f32 %v1112, %v1119
    %v1128 = vadd.f32 %v1126, %v1127
    %v1129 = vtanh.pop %v1128
    %v1130 = vmul.f32 %v1125, %v1129
    %1131 = vst [vmem:[#allocation3 + $0x10] sm:$0xff] %v1130
    %v1132 = vld [vmem:[#allocation2 + $0x60] sm:$0xff]
    %v1133 = vld [vmem:[#allocation2 + $0x68] sm:$0xff]
    %v1134 = vld [vmem:[#allocation2 + $0x70] sm:$0xff]
    %v1135 = vld [vmem:[#allocation2 + $0x78] sm:$0xff]
    %v1136 = vld [vmem:[#allocation4] sm:$0xff]
    %v1137 = vld [vmem:[#allocation4 + $0x8] sm:$0xff]
    %v1138 = vld [vmem:[#allocation4 + $0x10] sm:$0xff]
    %v1139 = vld [vmem:[#allocation4 + $0x18] sm:$0xff]
    %v1140 = vld [vmem:[#allocation4 + $0x20] sm:$0xff]
    %v1141 = vld [vmem:[#allocation4 + $0x28] sm:$0xff]
    %v1142 = vld [vmem:[#allocation4 + $0x30] sm:$0xff]
    %v1143 = vld [vmem:[#allocation4 + $0x38] sm:$0xff]
    %v1144 = vld [vmem:[#allocation4 + $0x40] sm:$0xff]
    %v1145 = vld [vmem:[#allocation4 + $0x48] sm:$0xff]
    %v1146 = vld [vmem:[#allocation4 + $0x50] sm:$0xff]
    %v1147 = vld [vmem:[#allocation4 + $0x58] sm:$0xff]
    %v1148 = vld [vmem:[#allocation4 + $0x60] sm:$0xff]
    %v1149 = vld [vmem:[#allocation4 + $0x68] sm:$0xff]
    %v1150 = vld [vmem:[#allocation4 + $0x70] sm:$0xff]
    %v1151 = vld [vmem:[#allocation4 + $0x78] sm:$0xff]
    %v1152 = vld [vmem:[#allocation4 + $0x80] sm:$0xff]
    %v1153 = vld [vmem:[#allocation4 + $0x88] sm:$0xff]
    %v1154 = vld [vmem:[#allocation4 + $0x90] sm:$0xff]
    %v1155 = vld [vmem:[#allocation4 + $0x98] sm:$0xff]
    %v1156 = vld [vmem:[#allocation4 + $0xa0] sm:$0xff]
    %v1157 = vld [vmem:[#allocation4 + $0xa8] sm:$0xff]
    %v1158 = vld [vmem:[#allocation4 + $0xb0] sm:$0xff]
    %v1159 = vld [vmem:[#allocation4 + $0xb8] sm:$0xff]
    %v1160 = vld [vmem:[#allocation4 + $0xc0] sm:$0xff]
    %v1161 = vld [vmem:[#allocation4 + $0xc8] sm:$0xff]
    %v1162 = vld [vmem:[#allocation4 + $0xd0] sm:$0xff]
    %v1163 = vld [vmem:[#allocation4 + $0xd8] sm:$0xff]
    %v1164 = vld [vmem:[#allocation4 + $0xe0] sm:$0xff]
    %v1165 = vld [vmem:[#allocation4 + $0xe8] sm:$0xff]
    %v1166 = vld [vmem:[#allocation4 + $0xf0] sm:$0xff]
    %v1167 = vld [vmem:[#allocation4 + $0xf8] sm:$0xff]
    %v1168 = vld [vmem:[#allocation4 + $0x100] sm:$0xff]
    %v1169 = vld [vmem:[#allocation4 + $0x108] sm:$0xff]
    %v1170 = vld [vmem:[#allocation4 + $0x110] sm:$0xff]
    %v1171 = vld [vmem:[#allocation4 + $0x118] sm:$0xff]
    %v1172 = vld [vmem:[#allocation4 + $0x120] sm:$0xff]
    %v1173 = vld [vmem:[#allocation4 + $0x128] sm:$0xff]
    %v1174 = vld [vmem:[#allocation4 + $0x130] sm:$0xff]
    %v1175 = vld [vmem:[#allocation4 + $0x138] sm:$0xff]
    %v1176 = vld [vmem:[#allocation4 + $0x140] sm:$0xff]
    %v1177 = vld [vmem:[#allocation4 + $0x148] sm:$0xff]
    %v1178 = vld [vmem:[#allocation4 + $0x150] sm:$0xff]
    %v1179 = vld [vmem:[#allocation4 + $0x158] sm:$0xff]
    %v1180 = vld [vmem:[#allocation4 + $0x160] sm:$0xff]
    %v1181 = vld [vmem:[#allocation4 + $0x168] sm:$0xff]
    %v1182 = vld [vmem:[#allocation4 + $0x170] sm:$0xff]
    %v1183 = vld [vmem:[#allocation4 + $0x178] sm:$0xff]
    %v1184 = vld [vmem:[#allocation4 + $0x180] sm:$0xff]
    %v1185 = vld [vmem:[#allocation4 + $0x188] sm:$0xff]
    %v1186 = vld [vmem:[#allocation4 + $0x190] sm:$0xff]
    %v1187 = vld [vmem:[#allocation4 + $0x198] sm:$0xff]
    %v1188 = vld [vmem:[#allocation4 + $0x1a0] sm:$0xff]
    %v1189 = vld [vmem:[#allocation4 + $0x1a8] sm:$0xff]
    %v1190 = vld [vmem:[#allocation4 + $0x1b0] sm:$0xff]
    %v1191 = vld [vmem:[#allocation4 + $0x1b8] sm:$0xff]
    %v1192 = vld [vmem:[#allocation4 + $0x1c0] sm:$0xff]
    %v1193 = vld [vmem:[#allocation4 + $0x1c8] sm:$0xff]
    %v1194 = vld [vmem:[#allocation4 + $0x1d0] sm:$0xff]
    %v1195 = vld [vmem:[#allocation4 + $0x1d8] sm:$0xff]
    %v1196 = vld [vmem:[#allocation4 + $0x1e0] sm:$0xff]
    %v1197 = vld [vmem:[#allocation4 + $0x1e8] sm:$0xff]
    %v1198 = vld [vmem:[#allocation4 + $0x1f0] sm:$0xff]
    %v1199 = vld [vmem:[#allocation4 + $0x1f8] sm:$0xff]
    %1200 = vmatprep.subr.mxu0 %v1137
    %1201 = vmatpush1.msra.mxu0 %v1136
    %1202 = vmatprep.subr.mxu0 %v1141
    %1203 = vmatpush1.msra.mxu0 %v1140
    %1204 = vmatprep.subr.mxu0 %v1145
    %1205 = vmatpush1.msra.mxu0 %v1144
    %1206 = vmatprep.subr.mxu0 %v1149
    %1207 = vmatpush1.msra.mxu0 %v1148
    %1208 = vmatprep.subr.mxu0 %v1153
    %1209 = vmatpush1.msra.mxu0 %v1152
    %1210 = vmatprep.subr.mxu0 %v1157
    %1211 = vmatpush1.msra.mxu0 %v1156
    %1212 = vmatprep.subr.mxu0 %v1161
    %1213 = vmatpush1.msra.mxu0 %v1160
    %1214 = vmatprep.subr.mxu0 %v1165
    %1215 = vmatpush1.msra.mxu0 %v1164
    %1216 = vmatprep.subr.mxu0 %v1169
    %1217 = vmatpush1.msra.mxu0 %v1168
    %1218 = vmatprep.subr.mxu0 %v1173
    %1219 = vmatpush1.msra.mxu0 %v1172
    %1220 = vmatprep.subr.mxu0 %v1177
    %1221 = vmatpush1.msra.mxu0 %v1176
    %1222 = vmatprep.subr.mxu0 %v1181
    %1223 = vmatpush1.msra.mxu0 %v1180
    %1224 = vmatprep.subr.mxu0 %v1185
    %1225 = vmatpush1.msra.mxu0 %v1184
    %1226 = vmatprep.subr.mxu0 %v1189
    %1227 = vmatpush1.msra.mxu0 %v1188
    %1228 = vmatprep.subr.mxu0 %v1193
    %1229 = vmatpush1.msra.mxu0 %v1192
    %1230 = vmatprep.subr.mxu0 %v1197
    %1231 = vmatpush1.msra.mxu0 %v1196
    %1232 = vmatprep.subr.mxu0 0.0
    %1233 = vmatpush1.msra.mxu0 0.0
    %1234 = vmatprep.subr.mxu0 0.0
    %1235 = vmatpush1.msra.mxu0 0.0
    %1236 = vmatprep.subr.mxu0 0.0
    %1237 = vmatpush1.msra.mxu0 0.0
    %1238 = vmatprep.subr.mxu0 0.0
    %1239 = vmatpush1.msra.mxu0 0.0
    %1240 = vmatprep.subr.mxu0 0.0
    %1241 = vmatpush1.msra.mxu0 0.0
    %1242 = vmatprep.subr.mxu0 0.0
    %1243 = vmatpush1.msra.mxu0 0.0
    %1244 = vmatprep.subr.mxu0 0.0
    %1245 = vmatpush1.msra.mxu0 0.0
    %1246 = vmatprep.subr.mxu0 0.0
    %1247 = vmatpush1.msra.mxu0 0.0
    %1248 = vmatprep.subr.mxu0 0.0
    %1249 = vmatpush1.msra.mxu0 0.0
    %1250 = vmatprep.subr.mxu0 0.0
    %1251 = vmatpush1.msra.mxu0 0.0
    %1252 = vmatprep.subr.mxu0 0.0
    %1253 = vmatpush1.msra.mxu0 0.0
    %1254 = vmatprep.subr.mxu0 0.0
    %1255 = vmatpush1.msra.mxu0 0.0
    %1256 = vmatprep.subr.mxu0 0.0
    %1257 = vmatpush1.msra.mxu0 0.0
    %1258 = vmatprep.subr.mxu0 0.0
    %1259 = vmatpush1.msra.mxu0 0.0
    %1260 = vmatprep.subr.mxu0 0.0
    %1261 = vmatpush1.msra.mxu0 0.0
    %1262 = vmatprep.subr.mxu0 0.0
    %1263 = vmatpush1.msra.mxu0 0.0
    %1264 = vmatprep.mubr.f32.mxu0 0.0
    %1265 = vmatmul.mubr.f32.gmra.mrb[0].mxu0 %v1130
    %v1266 = vpop.f32.mrb[0].mxu0
    %v1267 = vadd.f32 0.0, %v1266
    %v1268 = vpop.f32.mrb[0].mxu0
    %v1269 = vadd.f32 0.0, %v1268
    %1270 = vdwg.mxu0
    %1271 = vmatprep.subr.mxu0 %v1139
    %1272 = vmatpush1.msra.mxu0 %v1138
    %1273 = vmatprep.subr.mxu0 %v1143
    %1274 = vmatpush1.msra.mxu0 %v1142
    %1275 = vmatprep.subr.mxu0 %v1147
    %1276 = vmatpush1.msra.mxu0 %v1146
    %1277 = vmatprep.subr.mxu0 %v1151
    %1278 = vmatpush1.msra.mxu0 %v1150
    %1279 = vmatprep.subr.mxu0 %v1155
    %1280 = vmatpush1.msra.mxu0 %v1154
    %1281 = vmatprep.subr.mxu0 %v1159
    %1282 = vmatpush1.msra.mxu0 %v1158
    %1283 = vmatprep.subr.mxu0 %v1163
    %1284 = vmatpush1.msra.mxu0 %v1162
    %1285 = vmatprep.subr.mxu0 %v1167
    %1286 = vmatpush1.msra.mxu0 %v1166
    %1287 = vmatprep.subr.mxu0 %v1171
    %1288 = vmatpush1.msra.mxu0 %v1170
    %1289 = vmatprep.subr.mxu0 %v1175
    %1290 = vmatpush1.msra.mxu0 %v1174
    %1291 = vmatprep.subr.mxu0 %v1179
    %1292 = vmatpush1.msra.mxu0 %v1178
    %1293 = vmatprep.subr.mxu0 %v1183
    %1294 = vmatpush1.msra.mxu0 %v1182
    %1295 = vmatprep.subr.mxu0 %v1187
    %1296 = vmatpush1.msra.mxu0 %v1186
    %1297 = vmatprep.subr.mxu0 %v1191
    %1298 = vmatpush1.msra.mxu0 %v1190
    %1299 = vmatprep.subr.mxu0 %v1195
    %1300 = vmatpush1.msra.mxu0 %v1194
    %1301 = vmatprep.subr.mxu0 %v1199
    %1302 = vmatpush1.msra.mxu0 %v1198
    %1303 = vmatprep.subr.mxu0 0.0
    %1304 = vmatpush1.msra.mxu0 0.0
    %1305 = vmatprep.subr.mxu0 0.0
    %1306 = vmatpush1.msra.mxu0 0.0
    %1307 = vmatprep.subr.mxu0 0.0
    %1308 = vmatpush1.msra.mxu0 0.0
    %1309 = vmatprep.subr.mxu0 0.0
    %1310 = vmatpush1.msra.mxu0 0.0
    %1311 = vmatprep.subr.mxu0 0.0
    %1312 = vmatpush1.msra.mxu0 0.0
    %1313 = vmatprep.subr.mxu0 0.0
    %1314 = vmatpush1.msra.mxu0 0.0
    %1315 = vmatprep.subr.mxu0 0.0
    %1316 = vmatpush1.msra.mxu0 0.0
    %1317 = vmatprep.subr.mxu0 0.0
    %1318 = vmatpush1.msra.mxu0 0.0
    %1319 = vmatprep.subr.mxu0 0.0
    %1320 = vmatpush1.msra.mxu0 0.0
    %1321 = vmatprep.subr.mxu0 0.0
    %1322 = vmatpush1.msra.mxu0 0.0
    %1323 = vmatprep.subr.mxu0 0.0
    %1324 = vmatpush1.msra.mxu0 0.0
    %1325 = vmatprep.subr.mxu0 0.0
    %1326 = vmatpush1.msra.mxu0 0.0
    %1327 = vmatprep.subr.mxu0 0.0
    %1328 = vmatpush1.msra.mxu0 0.0
    %1329 = vmatprep.subr.mxu0 0.0
    %1330 = vmatpush1.msra.mxu0 0.0
    %1331 = vmatprep.subr.mxu0 0.0
    %1332 = vmatpush1.msra.mxu0 0.0
    %1333 = vmatprep.subr.mxu0 0.0
    %1334 = vmatpush1.msra.mxu0 0.0
    %1335 = vmatprep.mubr.f32.mxu0 0.0
    %1336 = vmatmul.mubr.f32.gmra.mrb[0].mxu0 %v1130
    %v1337 = vpop.f32.mrb[0].mxu0
    %v1338 = vadd.f32 0.0, %v1337
    %v1339 = vpop.f32.mrb[0].mxu0
    %v1340 = vadd.f32 0.0, %v1339
    %1341 = vdwg.mxu0
    %v1342 = vadd.f32 %v1132, %v1267
    %v1343 = vadd.f32 %v1133, %v1269
    %v1344 = vadd.f32 %v1134, %v1338
    %v1345 = vadd.f32 %v1135, %v1340
    %v1346 = vxor.u32 %v1342, 2147483648
    %v1347 = vmul.f32 %v1346, 1.442695
    %v1348 = vpow.pop %v1347
    %v1349 = vadd.f32 %v1348, 1.0
    %v1350 = vrcp.pop %v1349
    %v1351 = vmul.f32 1.0, %v1350
    %v1352 = vxor.u32 %v1343, 2147483648
    %v1353 = vmul.f32 %v1352, 1.442695
    %v1354 = vpow.pop %v1353
    %v1355 = vadd.f32 %v1354, 1.0
    %v1356 = vrcp.pop %v1355
    %v1357 = vmul.f32 1.0, %v1356
    %v1358 = vtanh.pop %v1344
    %v1359 = vxor.u32 %v1345, 2147483648
    %v1360 = vmul.f32 %v1359, 1.442695
    %v1361 = vpow.pop %v1360
    %v1362 = vadd.f32 %v1361, 1.0
    %v1363 = vrcp.pop %v1362
    %v1364 = vmul.f32 1.0, %v1363
    %v1365 = vmul.f32 %v1357, %v1128
    %v1366 = vmul.f32 %v1351, %v1358
    %v1367 = vadd.f32 %v1365, %v1366
    %v1368 = vtanh.pop %v1367
    %v1369 = vmul.f32 %v1364, %v1368
    %1370 = vst [vmem:[#allocation3 + $0x18] sm:$0xff] %v1369
    %v1371 = vld [vmem:[#allocation2 + $0x80] sm:$0xff]
    %v1372 = vld [vmem:[#allocation2 + $0x88] sm:$0xff]
    %v1373 = vld [vmem:[#allocation2 + $0x90] sm:$0xff]
    %v1374 = vld [vmem:[#allocation2 + $0x98] sm:$0xff]
    %v1375 = vld [vmem:[#allocation4] sm:$0xff]
    %v1376 = vld [vmem:[#allocation4 + $0x8] sm:$0xff]
    %v1377 = vld [vmem:[#allocation4 + $0x10] sm:$0xff]
    %v1378 = vld [vmem:[#allocation4 + $0x18] sm:$0xff]
    %v1379 = vld [vmem:[#allocation4 + $0x20] sm:$0xff]
    %v1380 = vld [vmem:[#allocation4 + $0x28] sm:$0xff]
    %v1381 = vld [vmem:[#allocation4 + $0x30] sm:$0xff]
    %v1382 = vld [vmem:[#allocation4 + $0x38] sm:$0xff]
    %v1383 = vld [vmem:[#allocation4 + $0x40] sm:$0xff]
    %v1384 = vld [vmem:[#allocation4 + $0x48] sm:$0xff]
    %v1385 = vld [vmem:[#allocation4 + $0x50] sm:$0xff]
    %v1386 = vld [vmem:[#allocation4 + $0x58] sm:$0xff]
    %v1387 = vld [vmem:[#allocation4 + $0x60] sm:$0xff]
    %v1388 = vld [vmem:[#allocation4 + $0x68] sm:$0xff]
    %v1389 = vld [vmem:[#allocation4 + $0x70] sm:$0xff]
    %v1390 = vld [vmem:[#allocation4 + $0x78] sm:$0xff]
    %v1391 = vld [vmem:[#allocation4 + $0x80] sm:$0xff]
    %v1392 = vld [vmem:[#allocation4 + $0x88] sm:$0xff]
    %v1393 = vld [vmem:[#allocation4 + $0x90] sm:$0xff]
    %v1394 = vld [vmem:[#allocation4 + $0x98] sm:$0xff]
    %v1395 = vld [vmem:[#allocation4 + $0xa0] sm:$0xff]
    %v1396 = vld [vmem:[#allocation4 + $0xa8] sm:$0xff]
    %v1397 = vld [vmem:[#allocation4 + $0xb0] sm:$0xff]
    %v1398 = vld [vmem:[#allocation4 + $0xb8] sm:$0xff]
    %v1399 = vld [vmem:[#allocation4 + $0xc0] sm:$0xff]
    %v1400 = vld [vmem:[#allocation4 + $0xc8] sm:$0xff]
    %v1401 = vld [vmem:[#allocation4 + $0xd0] sm:$0xff]
    %v1402 = vld [vmem:[#allocation4 + $0xd8] sm:$0xff]
    %v1403 = vld [vmem:[#allocation4 + $0xe0] sm:$0xff]
    %v1404 = vld [vmem:[#allocation4 + $0xe8] sm:$0xff]
    %v1405 = vld [vmem:[#allocation4 + $0xf0] sm:$0xff]
    %v1406 = vld [vmem:[#allocation4 + $0xf8] sm:$0xff]
    %v1407 = vld [vmem:[#allocation4 + $0x100] sm:$0xff]
    %v1408 = vld [vmem:[#allocation4 + $0x108] sm:$0xff]
    %v1409 = vld [vmem:[#allocation4 + $0x110] sm:$0xff]
    %v1410 = vld [vmem:[#allocation4 + $0x118] sm:$0xff]
    %v1411 = vld [vmem:[#allocation4 + $0x120] sm:$0xff]
    %v1412 = vld [vmem:[#allocation4 + $0x128] sm:$0xff]
    %v1413 = vld [vmem:[#allocation4 + $0x130] sm:$0xff]
    %v1414 = vld [vmem:[#allocation4 + $0x138] sm:$0xff]
    %v1415 = vld [vmem:[#allocation4 + $0x140] sm:$0xff]
    %v1416 = vld [vmem:[#allocation4 + $0x148] sm:$0xff]
    %v1417 = vld [vmem:[#allocation4 + $0x150] sm:$0xff]
    %v1418 = vld [vmem:[#allocation4 + $0x158] sm:$0xff]
    %v1419 = vld [vmem:[#allocation4 + $0x160] sm:$0xff]
    %v1420 = vld [vmem:[#allocation4 + $0x168] sm:$0xff]
    %v1421 = vld [vmem:[#allocation4 + $0x170] sm:$0xff]
    %v1422 = vld [vmem:[#allocation4 + $0x178] sm:$0xff]
    %v1423 = vld [vmem:[#allocation4 + $0x180] sm:$0xff]
    %v1424 = vld [vmem:[#allocation4 + $0x188] sm:$0xff]
    %v1425 = vld [vmem:[#allocation4 + $0x190] sm:$0xff]
    %v1426 = vld [vmem:[#allocation4 + $0x198] sm:$0xff]
    %v1427 = vld [vmem:[#allocation4 + $0x1a0] sm:$0xff]
    %v1428 = vld [vmem:[#allocation4 + $0x1a8] sm:$0xff]
    %v1429 = vld [vmem:[#allocation4 + $0x1b0] sm:$0xff]
    %v1430 = vld [vmem:[#allocation4 + $0x1b8] sm:$0xff]
    %v1431 = vld [vmem:[#allocation4 + $0x1c0] sm:$0xff]
    %v1432 = vld [vmem:[#allocation4 + $0x1c8] sm:$0xff]
    %v1433 = vld [vmem:[#allocation4 + $0x1d0] sm:$0xff]
    %v1434 = vld [vmem:[#allocation4 + $0x1d8] sm:$0xff]
    %v1435 = vld [vmem:[#allocation4 + $0x1e0] sm:$0xff]
    %v1436 = vld [vmem:[#allocation4 + $0x1e8] sm:$0xff]
    %v1437 = vld [vmem:[#allocation4 + $0x1f0] sm:$0xff]
    %v1438 = vld [vmem:[#allocation4 + $0x1f8] sm:$0xff]
    %1439 = vmatprep.subr.mxu0 %v1376
    %1440 = vmatpush1.msra.mxu0 %v1375
    %1441 = vmatprep.subr.mxu0 %v1380
    %1442 = vmatpush1.msra.mxu0 %v1379
    %1443 = vmatprep.subr.mxu0 %v1384
    %1444 = vmatpush1.msra.mxu0 %v1383
    %1445 = vmatprep.subr.mxu0 %v1388
    %1446 = vmatpush1.msra.mxu0 %v1387
    %1447 = vmatprep.subr.mxu0 %v1392
    %1448 = vmatpush1.msra.mxu0 %v1391
    %1449 = vmatprep.subr.mxu0 %v1396
    %1450 = vmatpush1.msra.mxu0 %v1395
    %1451 = vmatprep.subr.mxu0 %v1400
    %1452 = vmatpush1.msra.mxu0 %v1399
    %1453 = vmatprep.subr.mxu0 %v1404
    %1454 = vmatpush1.msra.mxu0 %v1403
    %1455 = vmatprep.subr.mxu0 %v1408
    %1456 = vmatpush1.msra.mxu0 %v1407
    %1457 = vmatprep.subr.mxu0 %v1412
    %1458 = vmatpush1.msra.mxu0 %v1411
    %1459 = vmatprep.subr.mxu0 %v1416
    %1460 = vmatpush1.msra.mxu0 %v1415
    %1461 = vmatprep.subr.mxu0 %v1420
    %1462 = vmatpush1.msra.mxu0 %v1419
    %1463 = vmatprep.subr.mxu0 %v1424
    %1464 = vmatpush1.msra.mxu0 %v1423
    %1465 = vmatprep.subr.mxu0 %v1428
    %1466 = vmatpush1.msra.mxu0 %v1427
    %1467 = vmatprep.subr.mxu0 %v1432
    %1468 = vmatpush1.msra.mxu0 %v1431
    %1469 = vmatprep.subr.mxu0 %v1436
    %1470 = vmatpush1.msra.mxu0 %v1435
    %1471 = vmatprep.subr.mxu0 0.0
    %1472 = vmatpush1.msra.mxu0 0.0
    %1473 = vmatprep.subr.mxu0 0.0
    %1474 = vmatpush1.msra.mxu0 0.0
    %1475 = vmatprep.subr.mxu0 0.0
    %1476 = vmatpush1.msra.mxu0 0.0
    %1477 = vmatprep.subr.mxu0 0.0
    %1478 = vmatpush1.msra.mxu0 0.0
    %1479 = vmatprep.subr.mxu0 0.0
    %1480 = vmatpush1.msra.mxu0 0.0
    %1481 = vmatprep.subr.mxu0 0.0
    %1482 = vmatpush1.msra.mxu0 0.0
    %1483 = vmatprep.subr.mxu0 0.0
    %1484 = vmatpush1.msra.mxu0 0.0
    %1485 = vmatprep.subr.mxu0 0.0
    %1486 = vmatpush1.msra.mxu0 0.0
    %1487 = vmatprep.subr.mxu0 0.0
    %1488 = vmatpush1.msra.mxu0 0.0
    %1489 = vmatprep.subr.mxu0 0.0
    %1490 = vmatpush1.msra.mxu0 0.0
    %1491 = vmatprep.subr.mxu0 0.0
    %1492 = vmatpush1.msra.mxu0 0.0
    %1493 = vmatprep.subr.mxu0 0.0
    %1494 = vmatpush1.msra.mxu0 0.0
    %1495 = vmatprep.subr.mxu0 0.0
    %1496 = vmatpush1.msra.mxu0 0.0
    %1497 = vmatprep.subr.mxu0 0.0
    %1498 = vmatpush1.msra.mxu0 0.0
    %1499 = vmatprep.subr.mxu0 0.0
    %1500 = vmatpush1.msra.mxu0 0.0
    %1501 = vmatprep.subr.mxu0 0.0
    %1502 = vmatpush1.msra.mxu0 0.0
    %1503 = vmatprep.mubr.f32.mxu0 0.0
    %1504 = vmatmul.mubr.f32.gmra.mrb[0].mxu0 %v1369
    %v1505 = vpop.f32.mrb[0].mxu0
    %v1506 = vadd.f32 0.0, %v1505
    %v1507 = vpop.f32.mrb[0].mxu0
    %v1508 = vadd.f32 0.0, %v1507
    %1509 = vdwg.mxu0
    %1510 = vmatprep.subr.mxu0 %v1378
    %1511 = vmatpush1.msra.mxu0 %v1377
    %1512 = vmatprep.subr.mxu0 %v1382
    %1513 = vmatpush1.msra.mxu0 %v1381
    %1514 = vmatprep.subr.mxu0 %v1386
    %1515 = vmatpush1.msra.mxu0 %v1385
    %1516 = vmatprep.subr.mxu0 %v1390
    %1517 = vmatpush1.msra.mxu0 %v1389
    %1518 = vmatprep.subr.mxu0 %v1394
    %1519 = vmatpush1.msra.mxu0 %v1393
    %1520 = vmatprep.subr.mxu0 %v1398
    %1521 = vmatpush1.msra.mxu0 %v1397
    %1522 = vmatprep.subr.mxu0 %v1402
    %1523 = vmatpush1.msra.mxu0 %v1401
    %1524 = vmatprep.subr.mxu0 %v1406
    %1525 = vmatpush1.msra.mxu0 %v1405
    %1526 = vmatprep.subr.mxu0 %v1410
    %1527 = vmatpush1.msra.mxu0 %v1409
    %1528 = vmatprep.subr.mxu0 %v1414
    %1529 = vmatpush1.msra.mxu0 %v1413
    %1530 = vmatprep.subr.mxu0 %v1418
    %1531 = vmatpush1.msra.mxu0 %v1417
    %1532 = vmatprep.subr.mxu0 %v1422
    %1533 = vmatpush1.msra.mxu0 %v1421
    %1534 = vmatprep.subr.mxu0 %v1426
    %1535 = vmatpush1.msra.mxu0 %v1425
    %1536 = vmatprep.subr.mxu0 %v1430
    %1537 = vmatpush1.msra.mxu0 %v1429
    %1538 = vmatprep.subr.mxu0 %v1434
    %1539 = vmatpush1.msra.mxu0 %v1433
    %1540 = vmatprep.subr.mxu0 %v1438
    %1541 = vmatpush1.msra.mxu0 %v1437
    %1542 = vmatprep.subr.mxu0 0.0
    %1543 = vmatpush1.msra.mxu0 0.0
    %1544 = vmatprep.subr.mxu0 0.0
    %1545 = vmatpush1.msra.mxu0 0.0
    %1546 = vmatprep.subr.mxu0 0.0
    %1547 = vmatpush1.msra.mxu0 0.0
    %1548 = vmatprep.subr.mxu0 0.0
    %1549 = vmatpush1.msra.mxu0 0.0
    %1550 = vmatprep.subr.mxu0 0.0
    %1551 = vmatpush1.msra.mxu0 0.0
    %1552 = vmatprep.subr.mxu0 0.0
    %1553 = vmatpush1.msra.mxu0 0.0
    %1554 = vmatprep.subr.mxu0 0.0
    %1555 = vmatpush1.msra.mxu0 0.0
    %1556 = vmatprep.subr.mxu0 0.0
    %1557 = vmatpush1.msra.mxu0 0.0
    %1558 = vmatprep.subr.mxu0 0.0
    %1559 = vmatpush1.msra.mxu0 0.0
    %1560 = vmatprep.subr.mxu0 0.0
    %1561 = vmatpush1.msra.mxu0 0.0
    %1562 = vmatprep.subr.mxu0 0.0
    %1563 = vmatpush1.msra.mxu0 0.0
    %1564 = vmatprep.subr.mxu0 0.0
    %1565 = vmatpush1.msra.mxu0 0.0
    %1566 = vmatprep.subr.mxu0 0.0
    %1567 = vmatpush1.msra.mxu0 0.0
    %1568 = vmatprep.subr.mxu0 0.0
    %1569 = vmatpush1.msra.mxu0 0.0
    %1570 = vmatprep.subr.mxu0 0.0
    %1571 = vmatpush1.msra.mxu0 0.0
    %1572 = vmatprep.subr.mxu0 0.0
    %1573 = vmatpush1.msra.mxu0 0.0
    %1574 = vmatprep.mubr.f32.mxu0 0.0
    %1575 = vmatmul.mubr.f32.gmra.mrb[0].mxu0 %v1369
    %v1576 = vpop.f32.mrb[0].mxu0
    %v1577 = vadd.f32 0.0, %v1576
    %v1578 = vpop.f32.mrb[0].mxu0
    %v1579 = vadd.f32 0.0, %v1578
    %1580 = vdwg.mxu0
    %v1581 = vadd.f32 %v1371, %v1506
    %v1582 = vadd.f32 %v1372, %v1508
    %v1583 = vadd.f32 %v1373, %v1577
    %v1584 = vadd.f32 %v1374, %v1579
    %v1585 = vxor.u32 %v1581, 2147483648
    %v1586 = vmul.f32 %v1585, 1.442695
    %v1587 = vpow.pop %v1586
    %v1588 = vadd.f32 %v1587, 1.0
    %v1589 = vrcp.pop %v1588
    %v1590 = vmul.f32 1.0, %v1589
    %v1591 = vxor.u32 %v1582, 2147483648
    %v1592 = vmul.f32 %v1591, 1.442695
    %v1593 = vpow.pop %v1592
    %v1594 = vadd.f32 %v1593, 1.0
    %v1595 = vrcp.pop %v1594
    %v1596 = vmul.f32 1.0, %v1595
    %v1597 = vtanh.pop %v1583
    %v1598 = vxor.u32 %v1584, 2147483648
    %v1599 = vmul.f32 %v1598, 1.442695
    %v1600 = vpow.pop %v1599
    %v1601 = vadd.f32 %v1600, 1.0
    %v1602 = vrcp.pop %v1601
    %v1603 = vmul.f32 1.0, %v1602
    %v1604 = vmul.f32 %v1596, %v1367
    %v1605 = vmul.f32 %v1590, %v1597
    %v1606 = vadd.f32 %v1604, %v1605
    %v1607 = vtanh.pop %v1606
    %v1608 = vmul.f32 %v1603, %v1607
    %1609 = vst [vmem:[#allocation3 + $0x20] sm:$0xff] %v1608
    %v1610 = vld [vmem:[#allocation2 + $0xa0] sm:$0xff]
    %v1611 = vld [vmem:[#allocation2 + $0xa8] sm:$0xff]
    %v1612 = vld [vmem:[#allocation2 + $0xb0] sm:$0xff]
    %v1613 = vld [vmem:[#allocation2 + $0xb8] sm:$0xff]
    %v1614 = vld [vmem:[#allocation4] sm:$0xff]
    %v1615 = vld [vmem:[#allocation4 + $0x8] sm:$0xff]
    %v1616 = vld [vmem:[#allocation4 + $0x10] sm:$0xff]
    %v1617 = vld [vmem:[#allocation4 + $0x18] sm:$0xff]
    %v1618 = vld [vmem:[#allocation4 + $0x20] sm:$0xff]
    %v1619 = vld [vmem:[#allocation4 + $0x28] sm:$0xff]
    %v1620 = vld [vmem:[#allocation4 + $0x30] sm:$0xff]
    %v1621 = vld [vmem:[#allocation4 + $0x38] sm:$0xff]
    %v1622 = vld [vmem:[#allocation4 + $0x40] sm:$0xff]
    %v1623 = vld [vmem:[#allocation4 + $0x48] sm:$0xff]
    %v1624 = vld [vmem:[#allocation4 + $0x50] sm:$0xff]
    %v1625 = vld [vmem:[#allocation4 + $0x58] sm:$0xff]
    %v1626 = vld [vmem:[#allocation4 + $0x60] sm:$0xff]
    %v1627 = vld [vmem:[#allocation4 + $0x68] sm:$0xff]
    %v1628 = vld [vmem:[#allocation4 + $0x70] sm:$0xff]
    %v1629 = vld [vmem:[#allocation4 + $0x78] sm:$0xff]
    %v1630 = vld [vmem:[#allocation4 + $0x80] sm:$0xff]
    %v1631 = vld [vmem:[#allocation4 + $0x88] sm:$0xff]
    %v1632 = vld [vmem:[#allocation4 + $0x90] sm:$0xff]
    %v1633 = vld [vmem:[#allocation4 + $0x98] sm:$0xff]
    %v1634 = vld [vmem:[#allocation4 + $0xa0] sm:$0xff]
    %v1635 = vld [vmem:[#allocation4 + $0xa8] sm:$0xff]
    %v1636 = vld [vmem:[#allocation4 + $0xb0] sm:$0xff]
    %v1637 = vld [vmem:[#allocation4 + $0xb8] sm:$0xff]
    %v1638 = vld [vmem:[#allocation4 + $0xc0] sm:$0xff]
    %v1639 = vld [vmem:[#allocation4 + $0xc8] sm:$0xff]
    %v1640 = vld [vmem:[#allocation4 + $0xd0] sm:$0xff]
    %v1641 = vld [vmem:[#allocation4 + $0xd8] sm:$0xff]
    %v1642 = vld [vmem:[#allocation4 + $0xe0] sm:$0xff]
    %v1643 = vld [vmem:[#allocation4 + $0xe8] sm:$0xff]
    %v1644 = vld [vmem:[#allocation4 + $0xf0] sm:$0xff]
    %v1645 = vld [vmem:[#allocation4 + $0xf8] sm:$0xff]
    %v1646 = vld [vmem:[#allocation4 + $0x100] sm:$0xff]
    %v1647 = vld [vmem:[#allocation4 + $0x108] sm:$0xff]
    %v1648 = vld [vmem:[#allocation4 + $0x110] sm:$0xff]
    %v1649 = vld [vmem:[#allocation4 + $0x118] sm:$0xff]
    %v1650 = vld [vmem:[#allocation4 + $0x120] sm:$0xff]
    %v1651 = vld [vmem:[#allocation4 + $0x128] sm:$0xff]
    %v1652 = vld [vmem:[#allocation4 + $0x130] sm:$0xff]
    %v1653 = vld [vmem:[#allocation4 + $0x138] sm:$0xff]
    %v1654 = vld [vmem:[#allocation4 + $0x140] sm:$0xff]
    %v1655 = vld [vmem:[#allocation4 + $0x148] sm:$0xff]
    %v1656 = vld [vmem:[#allocation4 + $0x150] sm:$0xff]
    %v1657 = vld [vmem:[#allocation4 + $0x158] sm:$0xff]
    %v1658 = vld [vmem:[#allocation4 + $0x160] sm:$0xff]
    %v1659 = vld [vmem:[#allocation4 + $0x168] sm:$0xff]
    %v1660 = vld [vmem:[#allocation4 + $0x170] sm:$0xff]
    %v1661 = vld [vmem:[#allocation4 + $0x178] sm:$0xff]
    %v1662 = vld [vmem:[#allocation4 + $0x180] sm:$0xff]
    %v1663 = vld [vmem:[#allocation4 + $0x188] sm:$0xff]
    %v1664 = vld [vmem:[#allocation4 + $0x190] sm:$0xff]
    %v1665 = vld [vmem:[#allocation4 + $0x198] sm:$0xff]
    %v1666 = vld [vmem:[#allocation4 + $0x1a0] sm:$0xff]
    %v1667 = vld [vmem:[#allocation4 + $0x1a8] sm:$0xff]
    %v1668 = vld [vmem:[#allocation4 + $0x1b0] sm:$0xff]
    %v1669 = vld [vmem:[#allocation4 + $0x1b8] sm:$0xff]
    %v1670 = vld [vmem:[#allocation4 + $0x1c0] sm:$0xff]
    %v1671 = vld [vmem:[#allocation4 + $0x1c8] sm:$0xff]
    %v1672 = vld [vmem:[#allocation4 + $0x1d0] sm:$0xff]
    %v1673 = vld [vmem:[#allocation4 + $0x1d8] sm:$0xff]
    %v1674 = vld [vmem:[#allocation4 + $0x1e0] sm:$0xff]
    %v1675 = vld [vmem:[#allocation4 + $0x1e8] sm:$0xff]
    %v1676 = vld [vmem:[#allocation4 + $0x1f0] sm:$0xff]
    %v1677 = vld [vmem:[#allocation4 + $0x1f8] sm:$0xff]
    %1678 = vmatprep.subr.mxu0 %v1615
    %1679 = vmatpush1.msra.mxu0 %v1614
    %1680 = vmatprep.subr.mxu0 %v1619
    %1681 = vmatpush1.msra.mxu0 %v1618
    %1682 = vmatprep.subr.mxu0 %v1623
    %1683 = vmatpush1.msra.mxu0 %v1622
    %1684 = vmatprep.subr.mxu0 %v1627
    %1685 = vmatpush1.msra.mxu0 %v1626
    %1686 = vmatprep.subr.mxu0 %v1631
    %1687 = vmatpush1.msra.mxu0 %v1630
    %1688 = vmatprep.subr.mxu0 %v1635
    %1689 = vmatpush1.msra.mxu0 %v1634
    %1690 = vmatprep.subr.mxu0 %v1639
    %1691 = vmatpush1.msra.mxu0 %v1638
    %1692 = vmatprep.subr.mxu0 %v1643
    %1693 = vmatpush1.msra.mxu0 %v1642
    %1694 = vmatprep.subr.mxu0 %v1647
    %1695 = vmatpush1.msra.mxu0 %v1646
    %1696 = vmatprep.subr.mxu0 %v1651
    %1697 = vmatpush1.msra.mxu0 %v1650
    %1698 = vmatprep.subr.mxu0 %v1655
    %1699 = vmatpush1.msra.mxu0 %v1654
    %1700 = vmatprep.subr.mxu0 %v1659
    %1701 = vmatpush1.msra.mxu0 %v1658
    %1702 = vmatprep.subr.mxu0 %v1663
    %1703 = vmatpush1.msra.mxu0 %v1662
    %1704 = vmatprep.subr.mxu0 %v1667
    %1705 = vmatpush1.msra.mxu0 %v1666
    %1706 = vmatprep.subr.mxu0 %v1671
    %1707 = vmatpush1.msra.mxu0 %v1670
    %1708 = vmatprep.subr.mxu0 %v1675
    %1709 = vmatpush1.msra.mxu0 %v1674
    %1710 = vmatprep.subr.mxu0 0.0
    %1711 = vmatpush1.msra.mxu0 0.0
    %1712 = vmatprep.subr.mxu0 0.0
    %1713 = vmatpush1.msra.mxu0 0.0
    %1714 = vmatprep.subr.mxu0 0.0
    %1715 = vmatpush1.msra.mxu0 0.0
    %1716 = vmatprep.subr.mxu0 0.0
    %1717 = vmatpush1.msra.mxu0 0.0
    %1718 = vmatprep.subr.mxu0 0.0
    %1719 = vmatpush1.msra.mxu0 0.0
    %1720 = vmatprep.subr.mxu0 0.0
    %1721 = vmatpush1.msra.mxu0 0.0
    %1722 = vmatprep.subr.mxu0 0.0
    %1723 = vmatpush1.msra.mxu0 0.0
    %1724 = vmatprep.subr.mxu0 0.0
    %1725 = vmatpush1.msra.mxu0 0.0
    %1726 = vmatprep.subr.mxu0 0.0
    %1727 = vmatpush1.msra.mxu0 0.0
    %1728 = vmatprep.subr.mxu0 0.0
    %1729 = vmatpush1.msra.mxu0 0.0
    %1730 = vmatprep.subr.mxu0 0.0
    %1731 = vmatpush1.msra.mxu0 0.0
    %1732 = vmatprep.subr.mxu0 0.0
    %1733 = vmatpush1.msra.mxu0 0.0
    %1734 = vmatprep.subr.mxu0 0.0
    %1735 = vmatpush1.msra.mxu0 0.0
    %1736 = vmatprep.subr.mxu0 0.0
    %1737 = vmatpush1.msra.mxu0 0.0
    %1738 = vmatprep.subr.mxu0 0.0
    %1739 = vmatpush1.msra.mxu0 0.0
    %1740 = vmatprep.subr.mxu0 0.0
    %1741 = vmatpush1.msra.mxu0 0.0
    %1742 = vmatprep.mubr.f32.mxu0 0.0
    %1743 = vmatmul.mubr.f32.gmra.mrb[0].mxu0 %v1608
    %v1744 = vpop.f32.mrb[0].mxu0
    %v1745 = vadd.f32 0.0, %v1744
    %v1746 = vpop.f32.mrb[0].mxu0
    %v1747 = vadd.f32 0.0, %v1746
    %1748 = vdwg.mxu0
    %1749 = vmatprep.subr.mxu0 %v1617
    %1750 = vmatpush1.msra.mxu0 %v1616
    %1751 = vmatprep.subr.mxu0 %v1621
    %1752 = vmatpush1.msra.mxu0 %v1620
    %1753 = vmatprep.subr.mxu0 %v1625
    %1754 = vmatpush1.msra.mxu0 %v1624
    %1755 = vmatprep.subr.mxu0 %v1629
    %1756 = vmatpush1.msra.mxu0 %v1628
    %1757 = vmatprep.subr.mxu0 %v1633
    %1758 = vmatpush1.msra.mxu0 %v1632
    %1759 = vmatprep.subr.mxu0 %v1637
    %1760 = vmatpush1.msra.mxu0 %v1636
    %1761 = vmatprep.subr.mxu0 %v1641
    %1762 = vmatpush1.msra.mxu0 %v1640
    %1763 = vmatprep.subr.mxu0 %v1645
    %1764 = vmatpush1.msra.mxu0 %v1644
    %1765 = vmatprep.subr.mxu0 %v1649
    %1766 = vmatpush1.msra.mxu0 %v1648
    %1767 = vmatprep.subr.mxu0 %v1653
    %1768 = vmatpush1.msra.mxu0 %v1652
    %1769 = vmatprep.subr.mxu0 %v1657
    %1770 = vmatpush1.msra.mxu0 %v1656
    %1771 = vmatprep.subr.mxu0 %v1661
    %1772 = vmatpush1.msra.mxu0 %v1660
    %1773 = vmatprep.subr.mxu0 %v1665
    %1774 = vmatpush1.msra.mxu0 %v1664
    %1775 = vmatprep.subr.mxu0 %v1669
    %1776 = vmatpush1.msra.mxu0 %v1668
    %1777 = vmatprep.subr.mxu0 %v1673
    %1778 = vmatpush1.msra.mxu0 %v1672
    %1779 = vmatprep.subr.mxu0 %v1677
    %1780 = vmatpush1.msra.mxu0 %v1676
    %1781 = vmatprep.subr.mxu0 0.0
    %1782 = vmatpush1.msra.mxu0 0.0
    %1783 = vmatprep.subr.mxu0 0.0
    %1784 = vmatpush1.msra.mxu0 0.0
    %1785 = vmatprep.subr.mxu0 0.0
    %1786 = vmatpush1.msra.mxu0 0.0
    %1787 = vmatprep.subr.mxu0 0.0
    %1788 = vmatpush1.msra.mxu0 0.0
    %1789 = vmatprep.subr.mxu0 0.0
    %1790 = vmatpush1.msra.mxu0 0.0
    %1791 = vmatprep.subr.mxu0 0.0
    %1792 = vmatpush1.msra.mxu0 0.0
    %1793 = vmatprep.subr.mxu0 0.0
    %1794 = vmatpush1.msra.mxu0 0.0
    %1795 = vmatprep.subr.mxu0 0.0
    %1796 = vmatpush1.msra.mxu0 0.0
    %1797 = vmatprep.subr.mxu0 0.0
    %1798 = vmatpush1.msra.mxu0 0.0
    %1799 = vmatprep.subr.mxu0 0.0
    %1800 = vmatpush1.msra.mxu0 0.0
    %1801 = vmatprep.subr.mxu0 0.0
    %1802 = vmatpush1.msra.mxu0 0.0
    %1803 = vmatprep.subr.mxu0 0.0
    %1804 = vmatpush1.msra.mxu0 0.0
    %1805 = vmatprep.subr.mxu0 0.0
    %1806 = vmatpush1.msra.mxu0 0.0
    %1807 = vmatprep.subr.mxu0 0.0
    %1808 = vmatpush1.msra.mxu0 0.0
    %1809 = vmatprep.subr.mxu0 0.0
    %1810 = vmatpush1.msra.mxu0 0.0
    %1811 = vmatprep.subr.mxu0 0.0
    %1812 = vmatpush1.msra.mxu0 0.0
    %1813 = vmatprep.mubr.f32.mxu0 0.0
    %1814 = vmatmul.mubr.f32.gmra.mrb[0].mxu0 %v1608
    %v1815 = vpop.f32.mrb[0].mxu0
    %v1816 = vadd.f32 0.0, %v1815
    %v1817 = vpop.f32.mrb[0].mxu0
    %v1818 = vadd.f32 0.0, %v1817
    %1819 = vdwg.mxu0
    %v1820 = vadd.f32 %v1610, %v1745
    %v1821 = vadd.f32 %v1611, %v1747
    %v1822 = vadd.f32 %v1612, %v1816
    %v1823 = vadd.f32 %v1613, %v1818
    %v1824 = vxor.u32 %v1820, 2147483648
    %v1825 = vmul.f32 %v1824, 1.442695
    %v1826 = vpow.pop %v1825
    %v1827 = vadd.f32 %v1826, 1.0
    %v1828 = vrcp.pop %v1827
    %v1829 = vmul.f32 1.0, %v1828
    %v1830 = vxor.u32 %v1821, 2147483648
    %v1831 = vmul.f32 %v1830, 1.442695
    %v1832 = vpow.pop %v1831
    %v1833 = vadd.f32 %v1832, 1.0
    %v1834 = vrcp.pop %v1833
    %v1835 = vmul.f32 1.0, %v1834
    %v1836 = vtanh.pop %v1822
    %v1837 = vxor.u32 %v1823, 2147483648
    %v1838 = vmul.f32 %v1837, 1.442695
    %v1839 = vpow.pop %v1838
    %v1840 = vadd.f32 %v1839, 1.0
    %v1841 = vrcp.pop %v1840
    %v1842 = vmul.f32 1.0, %v1841
    %v1843 = vmul.f32 %v1835, %v1606
    %v1844 = vmul.f32 %v1829, %v1836
    %v1845 = vadd.f32 %v1843, %v1844
    %v1846 = vtanh.pop %v1845
    %v1847 = vmul.f32 %v1842, %v1846
    %1848 = vst [vmem:[#allocation3 + $0x28] sm:$0xff] %v1847
    %v1849 = vld [vmem:[#allocation2 + $0xc0] sm:$0xff]
    %v1850 = vld [vmem:[#allocation2 + $0xc8] sm:$0xff]
    %v1851 = vld [vmem:[#allocation2 + $0xd0] sm:$0xff]
    %v1852 = vld [vmem:[#allocation2 + $0xd8] sm:$0xff]
    %v1853 = vld [vmem:[#allocation4] sm:$0xff]
    %v1854 = vld [vmem:[#allocation4 + $0x8] sm:$0xff]
    %v1855 = vld [vmem:[#allocation4 + $0x10] sm:$0xff]
    %v1856 = vld [vmem:[#allocation4 + $0x18] sm:$0xff]
    %v1857 = vld [vmem:[#allocation4 + $0x20] sm:$0xff]
    %v1858 = vld [vmem:[#allocation4 + $0x28] sm:$0xff]
    %v1859 = vld [vmem:[#allocation4 + $0x30] sm:$0xff]
    %v1860 = vld [vmem:[#allocation4 + $0x38] sm:$0xff]
    %v1861 = vld [vmem:[#allocation4 + $0x40] sm:$0xff]
    %v1862 = vld [vmem:[#allocation4 + $0x48] sm:$0xff]
    %v1863 = vld [vmem:[#allocation4 + $0x50] sm:$0xff]
    %v1864 = vld [vmem:[#allocation4 + $0x58] sm:$0xff]
    %v1865 = vld [vmem:[#allocation4 + $0x60] sm:$0xff]
    %v1866 = vld [vmem:[#allocation4 + $0x68] sm:$0xff]
    %v1867 = vld [vmem:[#allocation4 + $0x70] sm:$0xff]
    %v1868 = vld [vmem:[#allocation4 + $0x78] sm:$0xff]
    %v1869 = vld [vmem:[#allocation4 + $0x80] sm:$0xff]
    %v1870 = vld [vmem:[#allocation4 + $0x88] sm:$0xff]
    %v1871 = vld [vmem:[#allocation4 + $0x90] sm:$0xff]
    %v1872 = vld [vmem:[#allocation4 + $0x98] sm:$0xff]
    %v1873 = vld [vmem:[#allocation4 + $0xa0] sm:$0xff]
    %v1874 = vld [vmem:[#allocation4 + $0xa8] sm:$0xff]
    %v1875 = vld [vmem:[#allocation4 + $0xb0] sm:$0xff]
    %v1876 = vld [vmem:[#allocation4 + $0xb8] sm:$0xff]
    %v1877 = vld [vmem:[#allocation4 + $0xc0] sm:$0xff]
    %v1878 = vld [vmem:[#allocation4 + $0xc8] sm:$0xff]
    %v1879 = vld [vmem:[#allocation4 + $0xd0] sm:$0xff]
    %v1880 = vld [vmem:[#allocation4 + $0xd8] sm:$0xff]
    %v1881 = vld [vmem:[#allocation4 + $0xe0] sm:$0xff]
    %v1882 = vld [vmem:[#allocation4 + $0xe8] sm:$0xff]
    %v1883 = vld [vmem:[#allocation4 + $0xf0] sm:$0xff]
    %v1884 = vld [vmem:[#allocation4 + $0xf8] sm:$0xff]
    %v1885 = vld [vmem:[#allocation4 + $0x100] sm:$0xff]
    %v1886 = vld [vmem:[#allocation4 + $0x108] sm:$0xff]
    %v1887 = vld [vmem:[#allocation4 + $0x110] sm:$0xff]
    %v1888 = vld [vmem:[#allocation4 + $0x118] sm:$0xff]
    %v1889 = vld [vmem:[#allocation4 + $0x120] sm:$0xff]
    %v1890 = vld [vmem:[#allocation4 + $0x128] sm:$0xff]
    %v1891 = vld [vmem:[#allocation4 + $0x130] sm:$0xff]
    %v1892 = vld [vmem:[#allocation4 + $0x138] sm:$0xff]
    %v1893 = vld [vmem:[#allocation4 + $0x140] sm:$0xff]
    %v1894 = vld [vmem:[#allocation4 + $0x148] sm:$0xff]
    %v1895 = vld [vmem:[#allocation4 + $0x150] sm:$0xff]
    %v1896 = vld [vmem:[#allocation4 + $0x158] sm:$0xff]
    %v1897 = vld [vmem:[#allocation4 + $0x160] sm:$0xff]
    %v1898 = vld [vmem:[#allocation4 + $0x168] sm:$0xff]
    %v1899 = vld [vmem:[#allocation4 + $0x170] sm:$0xff]
    %v1900 = vld [vmem:[#allocation4 + $0x178] sm:$0xff]
    %v1901 = vld [vmem:[#allocation4 + $0x180] sm:$0xff]
    %v1902 = vld [vmem:[#allocation4 + $0x188] sm:$0xff]
    %v1903 = vld [vmem:[#allocation4 + $0x190] sm:$0xff]
    %v1904 = vld [vmem:[#allocation4 + $0x198] sm:$0xff]
    %v1905 = vld [vmem:[#allocation4 + $0x1a0] sm:$0xff]
    %v1906 = vld [vmem:[#allocation4 + $0x1a8] sm:$0xff]
    %v1907 = vld [vmem:[#allocation4 + $0x1b0] sm:$0xff]
    %v1908 = vld [vmem:[#allocation4 + $0x1b8] sm:$0xff]
    %v1909 = vld [vmem:[#allocation4 + $0x1c0] sm:$0xff]
    %v1910 = vld [vmem:[#allocation4 + $0x1c8] sm:$0xff]
    %v1911 = vld [vmem:[#allocation4 + $0x1d0] sm:$0xff]
    %v1912 = vld [vmem:[#allocation4 + $0x1d8] sm:$0xff]
    %v1913 = vld [vmem:[#allocation4 + $0x1e0] sm:$0xff]
    %v1914 = vld [vmem:[#allocation4 + $0x1e8] sm:$0xff]
    %v1915 = vld [vmem:[#allocation4 + $0x1f0] sm:$0xff]
    %v1916 = vld [vmem:[#allocation4 + $0x1f8] sm:$0xff]
    %1917 = vmatprep.subr.mxu0 %v1854
    %1918 = vmatpush1.msra.mxu0 %v1853
    %1919 = vmatprep.subr.mxu0 %v1858
    %1920 = vmatpush1.msra.mxu0 %v1857
    %1921 = vmatprep.subr.mxu0 %v1862
    %1922 = vmatpush1.msra.mxu0 %v1861
    %1923 = vmatprep.subr.mxu0 %v1866
    %1924 = vmatpush1.msra.mxu0 %v1865
    %1925 = vmatprep.subr.mxu0 %v1870
    %1926 = vmatpush1.msra.mxu0 %v1869
    %1927 = vmatprep.subr.mxu0 %v1874
    %1928 = vmatpush1.msra.mxu0 %v1873
    %1929 = vmatprep.subr.mxu0 %v1878
    %1930 = vmatpush1.msra.mxu0 %v1877
    %1931 = vmatprep.subr.mxu0 %v1882
    %1932 = vmatpush1.msra.mxu0 %v1881
    %1933 = vmatprep.subr.mxu0 %v1886
    %1934 = vmatpush1.msra.mxu0 %v1885
    %1935 = vmatprep.subr.mxu0 %v1890
    %1936 = vmatpush1.msra.mxu0 %v1889
    %1937 = vmatprep.subr.mxu0 %v1894
    %1938 = vmatpush1.msra.mxu0 %v1893
    %1939 = vmatprep.subr.mxu0 %v1898
    %1940 = vmatpush1.msra.mxu0 %v1897
    %1941 = vmatprep.subr.mxu0 %v1902
    %1942 = vmatpush1.msra.mxu0 %v1901
    %1943 = vmatprep.subr.mxu0 %v1906
    %1944 = vmatpush1.msra.mxu0 %v1905
    %1945 = vmatprep.subr.mxu0 %v1910
    %1946 = vmatpush1.msra.mxu0 %v1909
    %1947 = vmatprep.subr.mxu0 %v1914
    %1948 = vmatpush1.msra.mxu0 %v1913
    %1949 = vmatprep.subr.mxu0 0.0
    %1950 = vmatpush1.msra.mxu0 0.0
    %1951 = vmatprep.subr.mxu0 0.0
    %1952 = vmatpush1.msra.mxu0 0.0
    %1953 = vmatprep.subr.mxu0 0.0
    %1954 = vmatpush1.msra.mxu0 0.0
    %1955 = vmatprep.subr.mxu0 0.0
    %1956 = vmatpush1.msra.mxu0 0.0
    %1957 = vmatprep.subr.mxu0 0.0
    %1958 = vmatpush1.msra.mxu0 0.0
    %1959 = vmatprep.subr.mxu0 0.0
    %1960 = vmatpush1.msra.mxu0 0.0
    %1961 = vmatprep.subr.mxu0 0.0
    %1962 = vmatpush1.msra.mxu0 0.0
    %1963 = vmatprep.subr.mxu0 0.0
    %1964 = vmatpush1.msra.mxu0 0.0
    %1965 = vmatprep.subr.mxu0 0.0
    %1966 = vmatpush1.msra.mxu0 0.0
    %1967 = vmatprep.subr.mxu0 0.0
    %1968 = vmatpush1.msra.mxu0 0.0
    %1969 = vmatprep.subr.mxu0 0.0
    %1970 = vmatpush1.msra.mxu0 0.0
    %1971 = vmatprep.subr.mxu0 0.0
    %1972 = vmatpush1.msra.mxu0 0.0
    %1973 = vmatprep.subr.mxu0 0.0
    %1974 = vmatpush1.msra.mxu0 0.0
    %1975 = vmatprep.subr.mxu0 0.0
    %1976 = vmatpush1.msra.mxu0 0.0
    %1977 = vmatprep.subr.mxu0 0.0
    %1978 = vmatpush1.msra.mxu0 0.0
    %1979 = vmatprep.subr.mxu0 0.0
    %1980 = vmatpush1.msra.mxu0 0.0
    %1981 = vmatprep.mubr.f32.mxu0 0.0
    %1982 = vmatmul.mubr.f32.gmra.mrb[0].mxu0 %v1847
    %v1983 = vpop.f32.mrb[0].mxu0
    %v1984 = vadd.f32 0.0, %v1983
    %v1985 = vpop.f32.mrb[0].mxu0
    %v1986 = vadd.f32 0.0, %v1985
    %1987 = vdwg.mxu0
    %1988 = vmatprep.subr.mxu0 %v1856
    %1989 = vmatpush1.msra.mxu0 %v1855
    %1990 = vmatprep.subr.mxu0 %v1860
    %1991 = vmatpush1.msra.mxu0 %v1859
    %1992 = vmatprep.subr.mxu0 %v1864
    %1993 = vmatpush1.msra.mxu0 %v1863
    %1994 = vmatprep.subr.mxu0 %v1868
    %1995 = vmatpush1.msra.mxu0 %v1867
    %1996 = vmatprep.subr.mxu0 %v1872
    %1997 = vmatpush1.msra.mxu0 %v1871
    %1998 = vmatprep.subr.mxu0 %v1876
    %1999 = vmatpush1.msra.mxu0 %v1875
    %2000 = vmatprep.subr.mxu0 %v1880
    %2001 = vmatpush1.msra.mxu0 %v1879
    %2002 = vmatprep.subr.mxu0 %v1884
    %2003 = vmatpush1.msra.mxu0 %v1883
    %2004 = vmatprep.subr.mxu0 %v1888
    %2005 = vmatpush1.msra.mxu0 %v1887
    %2006 = vmatprep.subr.mxu0 %v1892
    %2007 = vmatpush1.msra.mxu0 %v1891
    %2008 = vmatprep.subr.mxu0 %v1896
    %2009 = vmatpush1.msra.mxu0 %v1895
    %2010 = vmatprep.subr.mxu0 %v1900
    %2011 = vmatpush1.msra.mxu0 %v1899
    %2012 = vmatprep.subr.mxu0 %v1904
    %2013 = vmatpush1.msra.mxu0 %v1903
    %2014 = vmatprep.subr.mxu0 %v1908
    %2015 = vmatpush1.msra.mxu0 %v1907
    %2016 = vmatprep.subr.mxu0 %v1912
    %2017 = vmatpush1.msra.mxu0 %v1911
    %2018 = vmatprep.subr.mxu0 %v1916
    %2019 = vmatpush1.msra.mxu0 %v1915
    %2020 = vmatprep.subr.mxu0 0.0
    %2021 = vmatpush1.msra.mxu0 0.0
    %2022 = vmatprep.subr.mxu0 0.0
    %2023 = vmatpush1.msra.mxu0 0.0
    %2024 = vmatprep.subr.mxu0 0.0
    %2025 = vmatpush1.msra.mxu0 0.0
    %2026 = vmatprep.subr.mxu0 0.0
    %2027 = vmatpush1.msra.mxu0 0.0
    %2028 = vmatprep.subr.mxu0 0.0
    %2029 = vmatpush1.msra.mxu0 0.0
    %2030 = vmatprep.subr.mxu0 0.0
    %2031 = vmatpush1.msra.mxu0 0.0
    %2032 = vmatprep.subr.mxu0 0.0
    %2033 = vmatpush1.msra.mxu0 0.0
    %2034 = vmatprep.subr.mxu0 0.0
    %2035 = vmatpush1.msra.mxu0 0.0
    %2036 = vmatprep.subr.mxu0 0.0
    %2037 = vmatpush1.msra.mxu0 0.0
    %2038 = vmatprep.subr.mxu0 0.0
    %2039 = vmatpush1.msra.mxu0 0.0
    %2040 = vmatprep.subr.mxu0 0.0
    %2041 = vmatpush1.msra.mxu0 0.0
    %2042 = vmatprep.subr.mxu0 0.0
    %2043 = vmatpush1.msra.mxu0 0.0
    %2044 = vmatprep.subr.mxu0 0.0
    %2045 = vmatpush1.msra.mxu0 0.0
    %2046 = vmatprep.subr.mxu0 0.0
    %2047 = vmatpush1.msra.mxu0 0.0
    %2048 = vmatprep.subr.mxu0 0.0
    %2049 = vmatpush1.msra.mxu0 0.0
    %2050 = vmatprep.subr.mxu0 0.0
    %2051 = vmatpush1.msra.mxu0 0.0
    %2052 = vmatprep.mubr.f32.mxu0 0.0
    %2053 = vmatmul.mubr.f32.gmra.mrb[0].mxu0 %v1847
    %v2054 = vpop.f32.mrb[0].mxu0
    %v2055 = vadd.f32 0.0, %v2054
    %v2056 = vpop.f32.mrb[0].mxu0
    %v2057 = vadd.f32 0.0, %v2056
    %2058 = vdwg.mxu0
    %v2059 = vadd.f32 %v1849, %v1984
    %v2060 = vadd.f32 %v1850, %v1986
    %v2061 = vadd.f32 %v1851, %v2055
    %v2062 = vadd.f32 %v1852, %v2057
    %v2063 = vxor.u32 %v2059, 2147483648
    %v2064 = vmul.f32 %v2063, 1.442695
    %v2065 = vpow.pop %v2064
    %v2066 = vadd.f32 %v2065, 1.0
    %v2067 = vrcp.pop %v2066
    %v2068 = vmul.f32 1.0, %v2067
    %v2069 = vxor.u32 %v2060, 2147483648
    %v2070 = vmul.f32 %v2069, 1.442695
    %v2071 = vpow.pop %v2070
    %v2072 = vadd.f32 %v2071, 1.0
    %v2073 = vrcp.pop %v2072
    %v2074 = vmul.f32 1.0, %v2073
    %v2075 = vtanh.pop %v2061
    %v2076 = vxor.u32 %v2062, 2147483648
    %v2077 = vmul.f32 %v2076, 1.442695
    %v2078 = vpow.pop %v2077
    %v2079 = vadd.f32 %v2078, 1.0
    %v2080 = vrcp.pop %v2079
    %v2081 = vmul.f32 1.0, %v2080
    %v2082 = vmul.f32 %v2074, %v1845
    %v2083 = vmul.f32 %v2068, %v2075
    %v2084 = vadd.f32 %v2082, %v2083
    %v2085 = vtanh.pop %v2084
    %v2086 = vmul.f32 %v2081, %v2085
    %2087 = vst [vmem:[#allocation3 + $0x30] sm:$0xff] %v2086
    %v2088 = vld [vmem:[#allocation2 + $0xe0] sm:$0xff]
    %v2089 = vld [vmem:[#allocation2 + $0xe8] sm:$0xff]
    %v2090 = vld [vmem:[#allocation2 + $0xf0] sm:$0xff]
    %v2091 = vld [vmem:[#allocation2 + $0xf8] sm:$0xff]
    %v2092 = vld [vmem:[#allocation4] sm:$0xff]
    %v2093 = vld [vmem:[#allocation4 + $0x8] sm:$0xff]
    %v2094 = vld [vmem:[#allocation4 + $0x10] sm:$0xff]
    %v2095 = vld [vmem:[#allocation4 + $0x18] sm:$0xff]
    %v2096 = vld [vmem:[#allocation4 + $0x20] sm:$0xff]
    %v2097 = vld [vmem:[#allocation4 + $0x28] sm:$0xff]
    %v2098 = vld [vmem:[#allocation4 + $0x30] sm:$0xff]
    %v2099 = vld [vmem:[#allocation4 + $0x38] sm:$0xff]
    %v2100 = vld [vmem:[#allocation4 + $0x40] sm:$0xff]
    %v2101 = vld [vmem:[#allocation4 + $0x48] sm:$0xff]
    %v2102 = vld [vmem:[#allocation4 + $0x50] sm:$0xff]
    %v2103 = vld [vmem:[#allocation4 + $0x58] sm:$0xff]
    %v2104 = vld [vmem:[#allocation4 + $0x60] sm:$0xff]
    %v2105 = vld [vmem:[#allocation4 + $0x68] sm:$0xff]
    %v2106 = vld [vmem:[#allocation4 + $0x70] sm:$0xff]
    %v2107 = vld [vmem:[#allocation4 + $0x78] sm:$0xff]
    %v2108 = vld [vmem:[#allocation4 + $0x80] sm:$0xff]
    %v2109 = vld [vmem:[#allocation4 + $0x88] sm:$0xff]
    %v2110 = vld [vmem:[#allocation4 + $0x90] sm:$0xff]
    %v2111 = vld [vmem:[#allocation4 + $0x98] sm:$0xff]
    %v2112 = vld [vmem:[#allocation4 + $0xa0] sm:$0xff]
    %v2113 = vld [vmem:[#allocation4 + $0xa8] sm:$0xff]
    %v2114 = vld [vmem:[#allocation4 + $0xb0] sm:$0xff]
    %v2115 = vld [vmem:[#allocation4 + $0xb8] sm:$0xff]
    %v2116 = vld [vmem:[#allocation4 + $0xc0] sm:$0xff]
    %v2117 = vld [vmem:[#allocation4 + $0xc8] sm:$0xff]
    %v2118 = vld [vmem:[#allocation4 + $0xd0] sm:$0xff]
    %v2119 = vld [vmem:[#allocation4 + $0xd8] sm:$0xff]
    %v2120 = vld [vmem:[#allocation4 + $0xe0] sm:$0xff]
    %v2121 = vld [vmem:[#allocation4 + $0xe8] sm:$0xff]
    %v2122 = vld [vmem:[#allocation4 + $0xf0] sm:$0xff]
    %v2123 = vld [vmem:[#allocation4 + $0xf8] sm:$0xff]
    %v2124 = vld [vmem:[#allocation4 + $0x100] sm:$0xff]
    %v2125 = vld [vmem:[#allocation4 + $0x108] sm:$0xff]
    %v2126 = vld [vmem:[#allocation4 + $0x110] sm:$0xff]
    %v2127 = vld [vmem:[#allocation4 + $0x118] sm:$0xff]
    %v2128 = vld [vmem:[#allocation4 + $0x120] sm:$0xff]
    %v2129 = vld [vmem:[#allocation4 + $0x128] sm:$0xff]
    %v2130 = vld [vmem:[#allocation4 + $0x130] sm:$0xff]
    %v2131 = vld [vmem:[#allocation4 + $0x138] sm:$0xff]
    %v2132 = vld [vmem:[#allocation4 + $0x140] sm:$0xff]
    %v2133 = vld [vmem:[#allocation4 + $0x148] sm:$0xff]
    %v2134 = vld [vmem:[#allocation4 + $0x150] sm:$0xff]
    %v2135 = vld [vmem:[#allocation4 + $0x158] sm:$0xff]
    %v2136 = vld [vmem:[#allocation4 + $0x160] sm:$0xff]
    %v2137 = vld [vmem:[#allocation4 + $0x168] sm:$0xff]
    %v2138 = vld [vmem:[#allocation4 + $0x170] sm:$0xff]
    %v2139 = vld [vmem:[#allocation4 + $0x178] sm:$0xff]
    %v2140 = vld [vmem:[#allocation4 + $0x180] sm:$0xff]
    %v2141 = vld [vmem:[#allocation4 + $0x188] sm:$0xff]
    %v2142 = vld [vmem:[#allocation4 + $0x190] sm:$0xff]
    %v2143 = vld [vmem:[#allocation4 + $0x198] sm:$0xff]
    %v2144 = vld [vmem:[#allocation4 + $0x1a0] sm:$0xff]
    %v2145 = vld [vmem:[#allocation4 + $0x1a8] sm:$0xff]
    %v2146 = vld [vmem:[#allocation4 + $0x1b0] sm:$0xff]
    %v2147 = vld [vmem:[#allocation4 + $0x1b8] sm:$0xff]
    %v2148 = vld [vmem:[#allocation4 + $0x1c0] sm:$0xff]
    %v2149 = vld [vmem:[#allocation4 + $0x1c8] sm:$0xff]
    %v2150 = vld [vmem:[#allocation4 + $0x1d0] sm:$0xff]
    %v2151 = vld [vmem:[#allocation4 + $0x1d8] sm:$0xff]
    %v2152 = vld [vmem:[#allocation4 + $0x1e0] sm:$0xff]
    %v2153 = vld [vmem:[#allocation4 + $0x1e8] sm:$0xff]
    %v2154 = vld [vmem:[#allocation4 + $0x1f0] sm:$0xff]
    %v2155 = vld [vmem:[#allocation4 + $0x1f8] sm:$0xff]
    %2156 = vmatprep.subr.mxu0 %v2093
    %2157 = vmatpush1.msra.mxu0 %v2092
    %2158 = vmatprep.subr.mxu0 %v2097
    %2159 = vmatpush1.msra.mxu0 %v2096
    %2160 = vmatprep.subr.mxu0 %v2101
    %2161 = vmatpush1.msra.mxu0 %v2100
    %2162 = vmatprep.subr.mxu0 %v2105
    %2163 = vmatpush1.msra.mxu0 %v2104
    %2164 = vmatprep.subr.mxu0 %v2109
    %2165 = vmatpush1.msra.mxu0 %v2108
    %2166 = vmatprep.subr.mxu0 %v2113
    %2167 = vmatpush1.msra.mxu0 %v2112
    %2168 = vmatprep.subr.mxu0 %v2117
    %2169 = vmatpush1.msra.mxu0 %v2116
    %2170 = vmatprep.subr.mxu0 %v2121
    %2171 = vmatpush1.msra.mxu0 %v2120
    %2172 = vmatprep.subr.mxu0 %v2125
    %2173 = vmatpush1.msra.mxu0 %v2124
    %2174 = vmatprep.subr.mxu0 %v2129
    %2175 = vmatpush1.msra.mxu0 %v2128
    %2176 = vmatprep.subr.mxu0 %v2133
    %2177 = vmatpush1.msra.mxu0 %v2132
    %2178 = vmatprep.subr.mxu0 %v2137
    %2179 = vmatpush1.msra.mxu0 %v2136
    %2180 = vmatprep.subr.mxu0 %v2141
    %2181 = vmatpush1.msra.mxu0 %v2140
    %2182 = vmatprep.subr.mxu0 %v2145
    %2183 = vmatpush1.msra.mxu0 %v2144
    %2184 = vmatprep.subr.mxu0 %v2149
    %2185 = vmatpush1.msra.mxu0 %v2148
    %2186 = vmatprep.subr.mxu0 %v2153
    %2187 = vmatpush1.msra.mxu0 %v2152
    %2188 = vmatprep.subr.mxu0 0.0
    %2189 = vmatpush1.msra.mxu0 0.0
    %2190 = vmatprep.subr.mxu0 0.0
    %2191 = vmatpush1.msra.mxu0 0.0
    %2192 = vmatprep.subr.mxu0 0.0
    %2193 = vmatpush1.msra.mxu0 0.0
    %2194 = vmatprep.subr.mxu0 0.0
    %2195 = vmatpush1.msra.mxu0 0.0
    %2196 = vmatprep.subr.mxu0 0.0
    %2197 = vmatpush1.msra.mxu0 0.0
    %2198 = vmatprep.subr.mxu0 0.0
    %2199 = vmatpush1.msra.mxu0 0.0
    %2200 = vmatprep.subr.mxu0 0.0
    %2201 = vmatpush1.msra.mxu0 0.0
    %2202 = vmatprep.subr.mxu0 0.0
    %2203 = vmatpush1.msra.mxu0 0.0
    %2204 = vmatprep.subr.mxu0 0.0
    %2205 = vmatpush1.msra.mxu0 0.0
    %2206 = vmatprep.subr.mxu0 0.0
    %2207 = vmatpush1.msra.mxu0 0.0
    %2208 = vmatprep.subr.mxu0 0.0
    %2209 = vmatpush1.msra.mxu0 0.0
    %2210 = vmatprep.subr.mxu0 0.0
    %2211 = vmatpush1.msra.mxu0 0.0
    %2212 = vmatprep.subr.mxu0 0.0
    %2213 = vmatpush1.msra.mxu0 0.0
    %2214 = vmatprep.subr.mxu0 0.0
    %2215 = vmatpush1.msra.mxu0 0.0
    %2216 = vmatprep.subr.mxu0 0.0
    %2217 = vmatpush1.msra.mxu0 0.0
    %2218 = vmatprep.subr.mxu0 0.0
    %2219 = vmatpush1.msra.mxu0 0.0
    %2220 = vmatprep.mubr.f32.mxu0 0.0
    %2221 = vmatmul.mubr.f32.gmra.mrb[0].mxu0 %v2086
    %v2222 = vpop.f32.mrb[0].mxu0
    %v2223 = vadd.f32 0.0, %v2222
    %v2224 = vpop.f32.mrb[0].mxu0
    %v2225 = vadd.f32 0.0, %v2224
    %2226 = vdwg.mxu0
    %2227 = vmatprep.subr.mxu0 %v2095
    %2228 = vmatpush1.msra.mxu0 %v2094
    %2229 = vmatprep.subr.mxu0 %v2099
    %2230 = vmatpush1.msra.mxu0 %v2098
    %2231 = vmatprep.subr.mxu0 %v2103
    %2232 = vmatpush1.msra.mxu0 %v2102
    %2233 = vmatprep.subr.mxu0 %v2107
    %2234 = vmatpush1.msra.mxu0 %v2106
    %2235 = vmatprep.subr.mxu0 %v2111
    %2236 = vmatpush1.msra.mxu0 %v2110
    %2237 = vmatprep.subr.mxu0 %v2115
    %2238 = vmatpush1.msra.mxu0 %v2114
    %2239 = vmatprep.subr.mxu0 %v2119
    %2240 = vmatpush1.msra.mxu0 %v2118
    %2241 = vmatprep.subr.mxu0 %v2123
    %2242 = vmatpush1.msra.mxu0 %v2122
    %2243 = vmatprep.subr.mxu0 %v2127
    %2244 = vmatpush1.msra.mxu0 %v2126
    %2245 = vmatprep.subr.mxu0 %v2131
    %2246 = vmatpush1.msra.mxu0 %v2130
    %2247 = vmatprep.subr.mxu0 %v2135
    %2248 = vmatpush1.msra.mxu0 %v2134
    %2249 = vmatprep.subr.mxu0 %v2139
    %2250 = vmatpush1.msra.mxu0 %v2138
    %2251 = vmatprep.subr.mxu0 %v2143
    %2252 = vmatpush1.msra.mxu0 %v2142
    %2253 = vmatprep.subr.mxu0 %v2147
    %2254 = vmatpush1.msra.mxu0 %v2146
    %2255 = vmatprep.subr.mxu0 %v2151
    %2256 = vmatpush1.msra.mxu0 %v2150
    %2257 = vmatprep.subr.mxu0 %v2155
    %2258 = vmatpush1.msra.mxu0 %v2154
    %2259 = vmatprep.subr.mxu0 0.0
    %2260 = vmatpush1.msra.mxu0 0.0
    %2261 = vmatprep.subr.mxu0 0.0
    %2262 = vmatpush1.msra.mxu0 0.0
    %2263 = vmatprep.subr.mxu0 0.0
    %2264 = vmatpush1.msra.mxu0 0.0
    %2265 = vmatprep.subr.mxu0 0.0
    %2266 = vmatpush1.msra.mxu0 0.0
    %2267 = vmatprep.subr.mxu0 0.0
    %2268 = vmatpush1.msra.mxu0 0.0
    %2269 = vmatprep.subr.mxu0 0.0
    %2270 = vmatpush1.msra.mxu0 0.0
    %2271 = vmatprep.subr.mxu0 0.0
    %2272 = vmatpush1.msra.mxu0 0.0
    %2273 = vmatprep.subr.mxu0 0.0
    %2274 = vmatpush1.msra.mxu0 0.0
    %2275 = vmatprep.subr.mxu0 0.0
    %2276 = vmatpush1.msra.mxu0 0.0
    %2277 = vmatprep.subr.mxu0 0.0
    %2278 = vmatpush1.msra.mxu0 0.0
    %2279 = vmatprep.subr.mxu0 0.0
    %2280 = vmatpush1.msra.mxu0 0.0
    %2281 = vmatprep.subr.mxu0 0.0
    %2282 = vmatpush1.msra.mxu0 0.0
    %2283 = vmatprep.subr.mxu0 0.0
    %2284 = vmatpush1.msra.mxu0 0.0
    %2285 = vmatprep.subr.mxu0 0.0
    %2286 = vmatpush1.msra.mxu0 0.0
    %2287 = vmatprep.subr.mxu0 0.0
    %2288 = vmatpush1.msra.mxu0 0.0
    %2289 = vmatprep.subr.mxu0 0.0
    %2290 = vmatpush1.msra.mxu0 0.0
    %2291 = vmatprep.mubr.f32.mxu0 0.0
    %2292 = vmatmul.mubr.f32.gmra.mrb[0].mxu0 %v2086
    %v2293 = vpop.f32.mrb[0].mxu0
    %v2294 = vadd.f32 0.0, %v2293
    %v2295 = vpop.f32.mrb[0].mxu0
    %v2296 = vadd.f32 0.0, %v2295
    %2297 = vdwg.mxu0
    %v2298 = vadd.f32 %v2088, %v2223
    %v2299 = vadd.f32 %v2089, %v2225
    %v2300 = vadd.f32 %v2090, %v2294
    %v2301 = vadd.f32 %v2091, %v2296
    %v2302 = vxor.u32 %v2298, 2147483648
    %v2303 = vmul.f32 %v2302, 1.442695
    %v2304 = vpow.pop %v2303
    %v2305 = vadd.f32 %v2304, 1.0
    %v2306 = vrcp.pop %v2305
    %v2307 = vmul.f32 1.0, %v2306
    %v2308 = vxor.u32 %v2299, 2147483648
    %v2309 = vmul.f32 %v2308, 1.442695
    %v2310 = vpow.pop %v2309
    %v2311 = vadd.f32 %v2310, 1.0
    %v2312 = vrcp.pop %v2311
    %v2313 = vmul.f32 1.0, %v2312
    %v2314 = vtanh.pop %v2300
    %v2315 = vxor.u32 %v2301, 2147483648
    %v2316 = vmul.f32 %v2315, 1.442695
    %v2317 = vpow.pop %v2316
    %v2318 = vadd.f32 %v2317, 1.0
    %v2319 = vrcp.pop %v2318
    %v2320 = vmul.f32 1.0, %v2319
    %v2321 = vmul.f32 %v2313, %v2084
    %v2322 = vmul.f32 %v2307, %v2314
    %v2323 = vadd.f32 %v2321, %v2322
    %v2324 = vtanh.pop %v2323
    %v2325 = vmul.f32 %v2320, %v2324
    %2326 = vst [vmem:[#allocation3 + $0x38] sm:$0xff] %v2325
    %v2327 = vld [vmem:[#allocation3] sm:$0xff]
    %v2328 = vld [vmem:[#allocation3 + $0x8] sm:$0xff]
    %v2329 = vld [vmem:[#allocation3 + $0x10] sm:$0xff]
    %v2330 = vld [vmem:[#allocation3 + $0x18] sm:$0xff]
    %v2331 = vld [vmem:[#allocation3 + $0x20] sm:$0xff]
    %v2332 = vld [vmem:[#allocation3 + $0x28] sm:$0xff]
    %v2333 = vld [vmem:[#allocation3 + $0x30] sm:$0xff]
    %v2334 = vld [vmem:[#allocation3 + $0x38] sm:$0xff]
    %v2335 = vld [vmem:[#allocation6] sm:$0xff]
    %v2336 = vld [vmem:[#allocation6 + $0x8] sm:$0xff]
    %v2337 = vld [vmem:[#allocation6 + $0x10] sm:$0xff]
    %v2338 = vld [vmem:[#allocation6 + $0x18] sm:$0xff]
    %v2339 = vld [vmem:[#allocation6 + $0x20] sm:$0xff]
    %v2340 = vld [vmem:[#allocation6 + $0x28] sm:$0xff]
    %v2341 = vld [vmem:[#allocation6 + $0x30] sm:$0xff]
    %v2342 = vld [vmem:[#allocation6 + $0x38] sm:$0xff]
    %v2343 = vld [vmem:[#allocation6 + $0x40] sm:$0xff]
    %v2344 = vld [vmem:[#allocation6 + $0x48] sm:$0xff]
    %v2345 = vld [vmem:[#allocation6 + $0x50] sm:$0xff]
    %v2346 = vld [vmem:[#allocation6 + $0x58] sm:$0xff]
    %v2347 = vld [vmem:[#allocation6 + $0x60] sm:$0xff]
    %v2348 = vld [vmem:[#allocation6 + $0x68] sm:$0xff]
    %v2349 = vld [vmem:[#allocation6 + $0x70] sm:$0xff]
    %v2350 = vld [vmem:[#allocation6 + $0x78] sm:$0xff]
    %v2351 = vld [vmem:[#allocation6 + $0x80] sm:$0xff]
    %v2352 = vld [vmem:[#allocation6 + $0x88] sm:$0xff]
    %v2353 = vld [vmem:[#allocation6 + $0x90] sm:$0xff]
    %v2354 = vld [vmem:[#allocation6 + $0x98] sm:$0xff]
    %v2355 = vld [vmem:[#allocation6 + $0xa0] sm:$0xff]
    %v2356 = vld [vmem:[#allocation6 + $0xa8] sm:$0xff]
    %v2357 = vld [vmem:[#allocation6 + $0xb0] sm:$0xff]
    %v2358 = vld [vmem:[#allocation6 + $0xb8] sm:$0xff]
    %v2359 = vld [vmem:[#allocation6 + $0xc0] sm:$0xff]
    %v2360 = vld [vmem:[#allocation6 + $0xc8] sm:$0xff]
    %v2361 = vld [vmem:[#allocation6 + $0xd0] sm:$0xff]
    %v2362 = vld [vmem:[#allocation6 + $0xd8] sm:$0xff]
    %v2363 = vld [vmem:[#allocation6 + $0xe0] sm:$0xff]
    %v2364 = vld [vmem:[#allocation6 + $0xe8] sm:$0xff]
    %v2365 = vld [vmem:[#allocation6 + $0xf0] sm:$0xff]
    %v2366 = vld [vmem:[#allocation6 + $0xf8] sm:$0xff]
    %v2367 = vld [vmem:[#allocation6 + $0x100] sm:$0xff]
    %v2368 = vld [vmem:[#allocation6 + $0x108] sm:$0xff]
    %v2369 = vld [vmem:[#allocation6 + $0x110] sm:$0xff]
    %v2370 = vld [vmem:[#allocation6 + $0x118] sm:$0xff]
    %v2371 = vld [vmem:[#allocation6 + $0x120] sm:$0xff]
    %v2372 = vld [vmem:[#allocation6 + $0x128] sm:$0xff]
    %v2373 = vld [vmem:[#allocation6 + $0x130] sm:$0xff]
    %v2374 = vld [vmem:[#allocation6 + $0x138] sm:$0xff]
    %v2375 = vld [vmem:[#allocation6 + $0x140] sm:$0xff]
    %v2376 = vld [vmem:[#allocation6 + $0x148] sm:$0xff]
    %v2377 = vld [vmem:[#allocation6 + $0x150] sm:$0xff]
    %v2378 = vld [vmem:[#allocation6 + $0x158] sm:$0xff]
    %v2379 = vld [vmem:[#allocation6 + $0x160] sm:$0xff]
    %v2380 = vld [vmem:[#allocation6 + $0x168] sm:$0xff]
    %v2381 = vld [vmem:[#allocation6 + $0x170] sm:$0xff]
    %v2382 = vld [vmem:[#allocation6 + $0x178] sm:$0xff]
    %v2383 = vld [vmem:[#allocation6 + $0x180] sm:$0xff]
    %v2384 = vld [vmem:[#allocation6 + $0x188] sm:$0xff]
    %v2385 = vld [vmem:[#allocation6 + $0x190] sm:$0xff]
    %v2386 = vld [vmem:[#allocation6 + $0x198] sm:$0xff]
    %v2387 = vld [vmem:[#allocation6 + $0x1a0] sm:$0xff]
    %v2388 = vld [vmem:[#allocation6 + $0x1a8] sm:$0xff]
    %v2389 = vld [vmem:[#allocation6 + $0x1b0] sm:$0xff]
    %v2390 = vld [vmem:[#allocation6 + $0x1b8] sm:$0xff]
    %v2391 = vld [vmem:[#allocation6 + $0x1c0] sm:$0xff]
    %v2392 = vld [vmem:[#allocation6 + $0x1c8] sm:$0xff]
    %v2393 = vld [vmem:[#allocation6 + $0x1d0] sm:$0xff]
    %v2394 = vld [vmem:[#allocation6 + $0x1d8] sm:$0xff]
    %v2395 = vld [vmem:[#allocation6 + $0x1e0] sm:$0xff]
    %v2396 = vld [vmem:[#allocation6 + $0x1e8] sm:$0xff]
    %v2397 = vld [vmem:[#allocation6 + $0x1f0] sm:$0xff]
    %v2398 = vld [vmem:[#allocation6 + $0x1f8] sm:$0xff]
    %v2399 = vld [vmem:[%s6] sm:$0xf]
    %v2401 = vlaneseq
    %v2402 = vshrl.u32 %v2401, 7
    %v2403 = vsub.s32 0, %v2402
    %v2404 = vrot.slane %v2399, %v2403
    %v2405 = vlaneseq
    %v2406 = vshrl.u32 %v2405, 7
    %v2407 = vsub.s32 1, %v2406
    %v2408 = vrot.slane %v2399, %v2407
    %v2409 = vlaneseq
    %v2410 = vshrl.u32 %v2409, 7
    %v2411 = vsub.s32 2, %v2410
    %v2412 = vrot.slane %v2399, %v2411
    %v2413 = vlaneseq
    %v2414 = vshrl.u32 %v2413, 7
    %v2415 = vsub.s32 3, %v2414
    %v2416 = vrot.slane %v2399, %v2415
    %2421 = vmatprep.subr.mxu0 %v2336
    %2422 = vmatpush1.msra.mxu0 %v2335
    %2423 = vmatprep.subr.mxu0 %v2340
    %2424 = vmatpush1.msra.mxu0 %v2339
    %2425 = vmatprep.subr.mxu0 %v2344
    %2426 = vmatpush1.msra.mxu0 %v2343
    %2427 = vmatprep.subr.mxu0 %v2348
    %2428 = vmatpush1.msra.mxu0 %v2347
    %2429 = vmatprep.subr.mxu0 %v2352
    %2430 = vmatpush1.msra.mxu0 %v2351
    %2431 = vmatprep.subr.mxu0 %v2356
    %2432 = vmatpush1.msra.mxu0 %v2355
    %2433 = vmatprep.subr.mxu0 %v2360
    %2434 = vmatpush1.msra.mxu0 %v2359
    %2435 = vmatprep.subr.mxu0 %v2364
    %2436 = vmatpush1.msra.mxu0 %v2363
    %2437 = vmatprep.subr.mxu0 %v2368
    %2438 = vmatpush1.msra.mxu0 %v2367
    %2439 = vmatprep.subr.mxu0 %v2372
    %2440 = vmatpush1.msra.mxu0 %v2371
    %2441 = vmatprep.subr.mxu0 %v2376
    %2442 = vmatpush1.msra.mxu0 %v2375
    %2443 = vmatprep.subr.mxu0 %v2380
    %2444 = vmatpush1.msra.mxu0 %v2379
    %2445 = vmatprep.subr.mxu0 %v2384
    %2446 = vmatpush1.msra.mxu0 %v2383
    %2447 = vmatprep.subr.mxu0 %v2388
    %2448 = vmatpush1.msra.mxu0 %v2387
    %2449 = vmatprep.subr.mxu0 %v2392
    %2450 = vmatpush1.msra.mxu0 %v2391
    %2451 = vmatprep.subr.mxu0 %v2396
    %2452 = vmatpush1.msra.mxu0 %v2395
    %2453 = vmatprep.subr.mxu0 0.0
    %2454 = vmatpush1.msra.mxu0 0.0
    %2455 = vmatprep.subr.mxu0 0.0
    %2456 = vmatpush1.msra.mxu0 0.0
    %2457 = vmatprep.subr.mxu0 0.0
    %2458 = vmatpush1.msra.mxu0 0.0
    %2459 = vmatprep.subr.mxu0 0.0
    %2460 = vmatpush1.msra.mxu0 0.0
    %2461 = vmatprep.subr.mxu0 0.0
    %2462 = vmatpush1.msra.mxu0 0.0
    %2463 = vmatprep.subr.mxu0 0.0
    %2464 = vmatpush1.msra.mxu0 0.0
    %2465 = vmatprep.subr.mxu0 0.0
    %2466 = vmatpush1.msra.mxu0 0.0
    %2467 = vmatprep.subr.mxu0 0.0
    %2468 = vmatpush1.msra.mxu0 0.0
    %2469 = vmatprep.subr.mxu0 0.0
    %2470 = vmatpush1.msra.mxu0 0.0
    %2471 = vmatprep.subr.mxu0 0.0
    %2472 = vmatpush1.msra.mxu0 0.0
    %2473 = vmatprep.subr.mxu0 0.0
    %2474 = vmatpush1.msra.mxu0 0.0
    %2475 = vmatprep.subr.mxu0 0.0
    %2476 = vmatpush1.msra.mxu0 0.0
    %2477 = vmatprep.subr.mxu0 0.0
    %2478 = vmatpush1.msra.mxu0 0.0
    %2479 = vmatprep.subr.mxu0 0.0
    %2480 = vmatpush1.msra.mxu0 0.0
    %2481 = vmatprep.subr.mxu0 0.0
    %2482 = vmatpush1.msra.mxu0 0.0
    %2483 = vmatprep.subr.mxu0 0.0
    %2484 = vmatpush1.msra.mxu0 0.0
    %2485 = vmatprep.mubr.f32.mxu0 0.0
    %2486 = vmatmul.mubr.f32.gmra.mrb[0].mxu0 %v2327
    %v2487 = vpop.f32.mrb[0].mxu0
    %v2488 = vadd.f32 %v2404, %v2487
    %v2489 = vpop.f32.mrb[0].mxu0
    %v2490 = vadd.f32 %v2408, %v2489
    %2491 = vmatprep.mubr.f32.mxu0 0.0
    %2492 = vmatmul.mubr.f32.gmra.mrb[0].mxu0 %v2328
    %v2493 = vpop.f32.mrb[0].mxu0
    %v2494 = vadd.f32 %v2404, %v2493
    %v2495 = vpop.f32.mrb[0].mxu0
    %v2496 = vadd.f32 %v2408, %v2495
    %2497 = vmatprep.mubr.f32.mxu0 0.0
    %2498 = vmatmul.mubr.f32.gmra.mrb[0].mxu0 %v2329
    %v2499 = vpop.f32.mrb[0].mxu0
    %v2500 = vadd.f32 %v2404, %v2499
    %v2501 = vpop.f32.mrb[0].mxu0
    %v2502 = vadd.f32 %v2408, %v2501
    %2503 = vmatprep.mubr.f32.mxu0 0.0
    %2504 = vmatmul.mubr.f32.gmra.mrb[0].mxu0 %v2330
    %v2505 = vpop.f32.mrb[0].mxu0
    %v2506 = vadd.f32 %v2404, %v2505
    %v2507 = vpop.f32.mrb[0].mxu0
    %v2508 = vadd.f32 %v2408, %v2507
    %2509 = vmatprep.mubr.f32.mxu0 0.0
    %2510 = vmatmul.mubr.f32.gmra.mrb[0].mxu0 %v2331
    %v2511 = vpop.f32.mrb[0].mxu0
    %v2512 = vadd.f32 %v2404, %v2511
    %v2513 = vpop.f32.mrb[0].mxu0
    %v2514 = vadd.f32 %v2408, %v2513
    %2515 = vmatprep.mubr.f32.mxu0 0.0
    %2516 = vmatmul.mubr.f32.gmra.mrb[0].mxu0 %v2332
    %v2517 = vpop.f32.mrb[0].mxu0
    %v2518 = vadd.f32 %v2404, %v2517
    %v2519 = vpop.f32.mrb[0].mxu0
    %v2520 = vadd.f32 %v2408, %v2519
    %2521 = vmatprep.mubr.f32.mxu0 0.0
    %2522 = vmatmul.mubr.f32.gmra.mrb[0].mxu0 %v2333
    %v2523 = vpop.f32.mrb[0].mxu0
    %v2524 = vadd.f32 %v2404, %v2523
    %v2525 = vpop.f32.mrb[0].mxu0
    %v2526 = vadd.f32 %v2408, %v2525
    %2527 = vmatprep.mubr.f32.mxu0 0.0
    %2528 = vmatmul.mubr.f32.gmra.mrb[0].mxu0 %v2334
    %v2529 = vpop.f32.mrb[0].mxu0
    %v2530 = vadd.f32 %v2404, %v2529
    %v2531 = vpop.f32.mrb[0].mxu0
    %v2532 = vadd.f32 %v2408, %v2531
    %2533 = vdwg.mxu0
    %2534 = vmatprep.subr.mxu0 %v2338
    %2535 = vmatpush1.msra.mxu0 %v2337
    %2536 = vmatprep.subr.mxu0 %v2342
    %2537 = vmatpush1.msra.mxu0 %v2341
    %2538 = vmatprep.subr.mxu0 %v2346
    %2539 = vmatpush1.msra.mxu0 %v2345
    %2540 = vmatprep.subr.mxu0 %v2350
    %2541 = vmatpush1.msra.mxu0 %v2349
    %2542 = vmatprep.subr.mxu0 %v2354
    %2543 = vmatpush1.msra.mxu0 %v2353
    %2544 = vmatprep.subr.mxu0 %v2358
    %2545 = vmatpush1.msra.mxu0 %v2357
    %2546 = vmatprep.subr.mxu0 %v2362
    %2547 = vmatpush1.msra.mxu0 %v2361
    %2548 = vmatprep.subr.mxu0 %v2366
    %2549 = vmatpush1.msra.mxu0 %v2365
    %2550 = vmatprep.subr.mxu0 %v2370
    %2551 = vmatpush1.msra.mxu0 %v2369
    %2552 = vmatprep.subr.mxu0 %v2374
    %2553 = vmatpush1.msra.mxu0 %v2373
    %2554 = vmatprep.subr.mxu0 %v2378
    %2555 = vmatpush1.msra.mxu0 %v2377
    %2556 = vmatprep.subr.mxu0 %v2382
    %2557 = vmatpush1.msra.mxu0 %v2381
    %2558 = vmatprep.subr.mxu0 %v2386
    %2559 = vmatpush1.msra.mxu0 %v2385
    %2560 = vmatprep.subr.mxu0 %v2390
    %2561 = vmatpush1.msra.mxu0 %v2389
    %2562 = vmatprep.subr.mxu0 %v2394
    %2563 = vmatpush1.msra.mxu0 %v2393
    %2564 = vmatprep.subr.mxu0 %v2398
    %2565 = vmatpush1.msra.mxu0 %v2397
    %2566 = vmatprep.subr.mxu0 0.0
    %2567 = vmatpush1.msra.mxu0 0.0
    %2568 = vmatprep.subr.mxu0 0.0
    %2569 = vmatpush1.msra.mxu0 0.0
    %2570 = vmatprep.subr.mxu0 0.0
    %2571 = vmatpush1.msra.mxu0 0.0
    %2572 = vmatprep.subr.mxu0 0.0
    %2573 = vmatpush1.msra.mxu0 0.0
    %2574 = vmatprep.subr.mxu0 0.0
    %2575 = vmatpush1.msra.mxu0 0.0
    %2576 = vmatprep.subr.mxu0 0.0
    %2577 = vmatpush1.msra.mxu0 0.0
    %2578 = vmatprep.subr.mxu0 0.0
    %2579 = vmatpush1.msra.mxu0 0.0
    %2580 = vmatprep.subr.mxu0 0.0
    %2581 = vmatpush1.msra.mxu0 0.0
    %2582 = vmatprep.subr.mxu0 0.0
    %2583 = vmatpush1.msra.mxu0 0.0
    %2584 = vmatprep.subr.mxu0 0.0
    %2585 = vmatpush1.msra.mxu0 0.0
    %2586 = vmatprep.subr.mxu0 0.0
    %2587 = vmatpush1.msra.mxu0 0.0
    %2588 = vmatprep.subr.mxu0 0.0
    %2589 = vmatpush1.msra.mxu0 0.0
    %2590 = vmatprep.subr.mxu0 0.0
    %2591 = vmatpush1.msra.mxu0 0.0
    %2592 = vmatprep.subr.mxu0 0.0
    %2593 = vmatpush1.msra.mxu0 0.0
    %2594 = vmatprep.subr.mxu0 0.0
    %2595 = vmatpush1.msra.mxu0 0.0
    %2596 = vmatprep.subr.mxu0 0.0
    %2597 = vmatpush1.msra.mxu0 0.0
    %2598 = vmatprep.mubr.f32.mxu0 0.0
    %2599 = vmatmul.mubr.f32.gmra.mrb[0].mxu0 %v2327
    %v2600 = vpop.f32.mrb[0].mxu0
    %v2601 = vadd.f32 %v2412, %v2600
    %v2602 = vpop.f32.mrb[0].mxu0
    %v2603 = vadd.f32 %v2416, %v2602
    %2604 = vmatprep.mubr.f32.mxu0 0.0
    %2605 = vmatmul.mubr.f32.gmra.mrb[0].mxu0 %v2328
    %v2606 = vpop.f32.mrb[0].mxu0
    %v2607 = vadd.f32 %v2412, %v2606
    %v2608 = vpop.f32.mrb[0].mxu0
    %v2609 = vadd.f32 %v2416, %v2608
    %2610 = vmatprep.mubr.f32.mxu0 0.0
    %2611 = vmatmul.mubr.f32.gmra.mrb[0].mxu0 %v2329
    %v2612 = vpop.f32.mrb[0].mxu0
    %v2613 = vadd.f32 %v2412, %v2612
    %v2614 = vpop.f32.mrb[0].mxu0
    %v2615 = vadd.f32 %v2416, %v2614
    %2616 = vmatprep.mubr.f32.mxu0 0.0
    %2617 = vmatmul.mubr.f32.gmra.mrb[0].mxu0 %v2330
    %v2618 = vpop.f32.mrb[0].mxu0
    %v2619 = vadd.f32 %v2412, %v2618
    %v2620 = vpop.f32.mrb[0].mxu0
    %v2621 = vadd.f32 %v2416, %v2620
    %2622 = vmatprep.mubr.f32.mxu0 0.0
    %2623 = vmatmul.mubr.f32.gmra.mrb[0].mxu0 %v2331
    %v2624 = vpop.f32.mrb[0].mxu0
    %v2625 = vadd.f32 %v2412, %v2624
    %v2626 = vpop.f32.mrb[0].mxu0
    %v2627 = vadd.f32 %v2416, %v2626
    %2628 = vmatprep.mubr.f32.mxu0 0.0
    %2629 = vmatmul.mubr.f32.gmra.mrb[0].mxu0 %v2332
    %v2630 = vpop.f32.mrb[0].mxu0
    %v2631 = vadd.f32 %v2412, %v2630
    %v2632 = vpop.f32.mrb[0].mxu0
    %v2633 = vadd.f32 %v2416, %v2632
    %2634 = vmatprep.mubr.f32.mxu0 0.0
    %2635 = vmatmul.mubr.f32.gmra.mrb[0].mxu0 %v2333
    %v2636 = vpop.f32.mrb[0].mxu0
    %v2637 = vadd.f32 %v2412, %v2636
    %v2638 = vpop.f32.mrb[0].mxu0
    %v2639 = vadd.f32 %v2416, %v2638
    %2640 = vmatprep.mubr.f32.mxu0 0.0
    %2641 = vmatmul.mubr.f32.gmra.mrb[0].mxu0 %v2334
    %v2642 = vpop.f32.mrb[0].mxu0
    %v2643 = vadd.f32 %v2412, %v2642
    %v2644 = vpop.f32.mrb[0].mxu0
    %v2645 = vadd.f32 %v2416, %v2644
    %2646 = vdwg.mxu0
    %2647 = vst [vmem:[#allocation2] sm:$0xff] %v2488
    %2648 = vst [vmem:[#allocation2 + $0x8] sm:$0xff] %v2490
    %2649 = vst [vmem:[#allocation2 + $0x10] sm:$0xff] %v2601
    %2650 = vst [vmem:[#allocation2 + $0x18] sm:$0xff] %v2603
    %2651 = vst [vmem:[#allocation2 + $0x20] sm:$0xff] %v2494
    %2652 = vst [vmem:[#allocation2 + $0x28] sm:$0xff] %v2496
    %2653 = vst [vmem:[#allocation2 + $0x30] sm:$0xff] %v2607
    %2654 = vst [vmem:[#allocation2 + $0x38] sm:$0xff] %v2609
    %2655 = vst [vmem:[#allocation2 + $0x40] sm:$0xff] %v2500
    %2656 = vst [vmem:[#allocation2 + $0x48] sm:$0xff] %v2502
    %2657 = vst [vmem:[#allocation2 + $0x50] sm:$0xff] %v2613
    %2658 = vst [vmem:[#allocation2 + $0x58] sm:$0xff] %v2615
    %2659 = vst [vmem:[#allocation2 + $0x60] sm:$0xff] %v2506
    %2660 = vst [vmem:[#allocation2 + $0x68] sm:$0xff] %v2508
    %2661 = vst [vmem:[#allocation2 + $0x70] sm:$0xff] %v2619
    %2662 = vst [vmem:[#allocation2 + $0x78] sm:$0xff] %v2621
    %2663 = vst [vmem:[#allocation2 + $0x80] sm:$0xff] %v2512
    %2664 = vst [vmem:[#allocation2 + $0x88] sm:$0xff] %v2514
    %2665 = vst [vmem:[#allocation2 + $0x90] sm:$0xff] %v2625
    %2666 = vst [vmem:[#allocation2 + $0x98] sm:$0xff] %v2627
    %2667 = vst [vmem:[#allocation2 + $0xa0] sm:$0xff] %v2518
    %2668 = vst [vmem:[#allocation2 + $0xa8] sm:$0xff] %v2520
    %2669 = vst [vmem:[#allocation2 + $0xb0] sm:$0xff] %v2631
    %2670 = vst [vmem:[#allocation2 + $0xb8] sm:$0xff] %v2633
    %2671 = vst [vmem:[#allocation2 + $0xc0] sm:$0xff] %v2524
    %2672 = vst [vmem:[#allocation2 + $0xc8] sm:$0xff] %v2526
    %2673 = vst [vmem:[#allocation2 + $0xd0] sm:$0xff] %v2637
    %2674 = vst [vmem:[#allocation2 + $0xd8] sm:$0xff] %v2639
    %2675 = vst [vmem:[#allocation2 + $0xe0] sm:$0xff] %v2530
    %2676 = vst [vmem:[#allocation2 + $0xe8] sm:$0xff] %v2532
    %2677 = vst [vmem:[#allocation2 + $0xf0] sm:$0xff] %v2643
    %2678 = vst [vmem:[#allocation2 + $0xf8] sm:$0xff] %v2645
    %v2679 = vld [vmem:[#allocation2] sm:$0xff]
    %v2680 = vld [vmem:[#allocation2 + $0x8] sm:$0xff]
    %v2681 = vld [vmem:[#allocation2 + $0x10] sm:$0xff]
    %v2682 = vld [vmem:[#allocation2 + $0x18] sm:$0xff]
    %v2683 = vld [vmem:[#allocation8] sm:$0xff]
    %v2684 = vld [vmem:[#allocation8 + $0x8] sm:$0xff]
    %v2685 = vld [vmem:[#allocation8 + $0x10] sm:$0xff]
    %v2686 = vld [vmem:[#allocation8 + $0x18] sm:$0xff]
    %v2687 = vld [vmem:[#allocation8 + $0x20] sm:$0xff]
    %v2688 = vld [vmem:[#allocation8 + $0x28] sm:$0xff]
    %v2689 = vld [vmem:[#allocation8 + $0x30] sm:$0xff]
    %v2690 = vld [vmem:[#allocation8 + $0x38] sm:$0xff]
    %v2691 = vld [vmem:[#allocation8 + $0x40] sm:$0xff]
    %v2692 = vld [vmem:[#allocation8 + $0x48] sm:$0xff]
    %v2693 = vld [vmem:[#allocation8 + $0x50] sm:$0xff]
    %v2694 = vld [vmem:[#allocation8 + $0x58] sm:$0xff]
    %v2695 = vld [vmem:[#allocation8 + $0x60] sm:$0xff]
    %v2696 = vld [vmem:[#allocation8 + $0x68] sm:$0xff]
    %v2697 = vld [vmem:[#allocation8 + $0x70] sm:$0xff]
    %v2698 = vld [vmem:[#allocation8 + $0x78] sm:$0xff]
    %v2699 = vld [vmem:[#allocation8 + $0x80] sm:$0xff]
    %v2700 = vld [vmem:[#allocation8 + $0x88] sm:$0xff]
    %v2701 = vld [vmem:[#allocation8 + $0x90] sm:$0xff]
    %v2702 = vld [vmem:[#allocation8 + $0x98] sm:$0xff]
    %v2703 = vld [vmem:[#allocation8 + $0xa0] sm:$0xff]
    %v2704 = vld [vmem:[#allocation8 + $0xa8] sm:$0xff]
    %v2705 = vld [vmem:[#allocation8 + $0xb0] sm:$0xff]
    %v2706 = vld [vmem:[#allocation8 + $0xb8] sm:$0xff]
    %v2707 = vld [vmem:[#allocation8 + $0xc0] sm:$0xff]
    %v2708 = vld [vmem:[#allocation8 + $0xc8] sm:$0xff]
    %v2709 = vld [vmem:[#allocation8 + $0xd0] sm:$0xff]
    %v2710 = vld [vmem:[#allocation8 + $0xd8] sm:$0xff]
    %v2711 = vld [vmem:[#allocation8 + $0xe0] sm:$0xff]
    %v2712 = vld [vmem:[#allocation8 + $0xe8] sm:$0xff]
    %v2713 = vld [vmem:[#allocation8 + $0xf0] sm:$0xff]
    %v2714 = vld [vmem:[#allocation8 + $0xf8] sm:$0xff]
    %v2715 = vld [vmem:[#allocation8 + $0x100] sm:$0xff]
    %v2716 = vld [vmem:[#allocation8 + $0x108] sm:$0xff]
    %v2717 = vld [vmem:[#allocation8 + $0x110] sm:$0xff]
    %v2718 = vld [vmem:[#allocation8 + $0x118] sm:$0xff]
    %v2719 = vld [vmem:[#allocation8 + $0x120] sm:$0xff]
    %v2720 = vld [vmem:[#allocation8 + $0x128] sm:$0xff]
    %v2721 = vld [vmem:[#allocation8 + $0x130] sm:$0xff]
    %v2722 = vld [vmem:[#allocation8 + $0x138] sm:$0xff]
    %v2723 = vld [vmem:[#allocation8 + $0x140] sm:$0xff]
    %v2724 = vld [vmem:[#allocation8 + $0x148] sm:$0xff]
    %v2725 = vld [vmem:[#allocation8 + $0x150] sm:$0xff]
    %v2726 = vld [vmem:[#allocation8 + $0x158] sm:$0xff]
    %v2727 = vld [vmem:[#allocation8 + $0x160] sm:$0xff]
    %v2728 = vld [vmem:[#allocation8 + $0x168] sm:$0xff]
    %v2729 = vld [vmem:[#allocation8 + $0x170] sm:$0xff]
    %v2730 = vld [vmem:[#allocation8 + $0x178] sm:$0xff]
    %v2731 = vld [vmem:[#allocation8 + $0x180] sm:$0xff]
    %v2732 = vld [vmem:[#allocation8 + $0x188] sm:$0xff]
    %v2733 = vld [vmem:[#allocation8 + $0x190] sm:$0xff]
    %v2734 = vld [vmem:[#allocation8 + $0x198] sm:$0xff]
    %v2735 = vld [vmem:[#allocation8 + $0x1a0] sm:$0xff]
    %v2736 = vld [vmem:[#allocation8 + $0x1a8] sm:$0xff]
    %v2737 = vld [vmem:[#allocation8 + $0x1b0] sm:$0xff]
    %v2738 = vld [vmem:[#allocation8 + $0x1b8] sm:$0xff]
    %v2739 = vld [vmem:[#allocation8 + $0x1c0] sm:$0xff]
    %v2740 = vld [vmem:[#allocation8 + $0x1c8] sm:$0xff]
    %v2741 = vld [vmem:[#allocation8 + $0x1d0] sm:$0xff]
    %v2742 = vld [vmem:[#allocation8 + $0x1d8] sm:$0xff]
    %v2743 = vld [vmem:[#allocation8 + $0x1e0] sm:$0xff]
    %v2744 = vld [vmem:[#allocation8 + $0x1e8] sm:$0xff]
    %v2745 = vld [vmem:[#allocation8 + $0x1f0] sm:$0xff]
    %v2746 = vld [vmem:[#allocation8 + $0x1f8] sm:$0xff]
    %2747 = vmatprep.subr.mxu0 %v2684
    %2748 = vmatpush1.msra.mxu0 %v2683
    %2749 = vmatprep.subr.mxu0 %v2688
    %2750 = vmatpush1.msra.mxu0 %v2687
    %2751 = vmatprep.subr.mxu0 %v2692
    %2752 = vmatpush1.msra.mxu0 %v2691
    %2753 = vmatprep.subr.mxu0 %v2696
    %2754 = vmatpush1.msra.mxu0 %v2695
    %2755 = vmatprep.subr.mxu0 %v2700
    %2756 = vmatpush1.msra.mxu0 %v2699
    %2757 = vmatprep.subr.mxu0 %v2704
    %2758 = vmatpush1.msra.mxu0 %v2703
    %2759 = vmatprep.subr.mxu0 %v2708
    %2760 = vmatpush1.msra.mxu0 %v2707
    %2761 = vmatprep.subr.mxu0 %v2712
    %2762 = vmatpush1.msra.mxu0 %v2711
    %2763 = vmatprep.subr.mxu0 %v2716
    %2764 = vmatpush1.msra.mxu0 %v2715
    %2765 = vmatprep.subr.mxu0 %v2720
    %2766 = vmatpush1.msra.mxu0 %v2719
    %2767 = vmatprep.subr.mxu0 %v2724
    %2768 = vmatpush1.msra.mxu0 %v2723
    %2769 = vmatprep.subr.mxu0 %v2728
    %2770 = vmatpush1.msra.mxu0 %v2727
    %2771 = vmatprep.subr.mxu0 %v2732
    %2772 = vmatpush1.msra.mxu0 %v2731
    %2773 = vmatprep.subr.mxu0 %v2736
    %2774 = vmatpush1.msra.mxu0 %v2735
    %2775 = vmatprep.subr.mxu0 %v2740
    %2776 = vmatpush1.msra.mxu0 %v2739
    %2777 = vmatprep.subr.mxu0 %v2744
    %2778 = vmatpush1.msra.mxu0 %v2743
    %2779 = vmatprep.subr.mxu0 0.0
    %2780 = vmatpush1.msra.mxu0 0.0
    %2781 = vmatprep.subr.mxu0 0.0
    %2782 = vmatpush1.msra.mxu0 0.0
    %2783 = vmatprep.subr.mxu0 0.0
    %2784 = vmatpush1.msra.mxu0 0.0
    %2785 = vmatprep.subr.mxu0 0.0
    %2786 = vmatpush1.msra.mxu0 0.0
    %2787 = vmatprep.subr.mxu0 0.0
    %2788 = vmatpush1.msra.mxu0 0.0
    %2789 = vmatprep.subr.mxu0 0.0
    %2790 = vmatpush1.msra.mxu0 0.0
    %2791 = vmatprep.subr.mxu0 0.0
    %2792 = vmatpush1.msra.mxu0 0.0
    %2793 = vmatprep.subr.mxu0 0.0
    %2794 = vmatpush1.msra.mxu0 0.0
    %2795 = vmatprep.subr.mxu0 0.0
    %2796 = vmatpush1.msra.mxu0 0.0
    %2797 = vmatprep.subr.mxu0 0.0
    %2798 = vmatpush1.msra.mxu0 0.0
    %2799 = vmatprep.subr.mxu0 0.0
    %2800 = vmatpush1.msra.mxu0 0.0
    %2801 = vmatprep.subr.mxu0 0.0
    %2802 = vmatpush1.msra.mxu0 0.0
    %2803 = vmatprep.subr.mxu0 0.0
    %2804 = vmatpush1.msra.mxu0 0.0
    %2805 = vmatprep.subr.mxu0 0.0
    %2806 = vmatpush1.msra.mxu0 0.0
    %2807 = vmatprep.subr.mxu0 0.0
    %2808 = vmatpush1.msra.mxu0 0.0
    %2809 = vmatprep.subr.mxu0 0.0
    %2810 = vmatpush1.msra.mxu0 0.0
    %2811 = vmatprep.mubr.f32.mxu0 0.0
    %2812 = vmatmul.mubr.f32.gmra.mrb[0].mxu0 0.0
    %v2813 = vpop.f32.mrb[0].mxu0
    %v2814 = vadd.f32 0.0, %v2813
    %v2815 = vpop.f32.mrb[0].mxu0
    %v2816 = vadd.f32 0.0, %v2815
    %2817 = vdwg.mxu0
    %2818 = vmatprep.subr.mxu0 %v2686
    %2819 = vmatpush1.msra.mxu0 %v2685
    %2820 = vmatprep.subr.mxu0 %v2690
    %2821 = vmatpush1.msra.mxu0 %v2689
    %2822 = vmatprep.subr.mxu0 %v2694
    %2823 = vmatpush1.msra.mxu0 %v2693
    %2824 = vmatprep.subr.mxu0 %v2698
    %2825 = vmatpush1.msra.mxu0 %v2697
    %2826 = vmatprep.subr.mxu0 %v2702
    %2827 = vmatpush1.msra.mxu0 %v2701
    %2828 = vmatprep.subr.mxu0 %v2706
    %2829 = vmatpush1.msra.mxu0 %v2705
    %2830 = vmatprep.subr.mxu0 %v2710
    %2831 = vmatpush1.msra.mxu0 %v2709
    %2832 = vmatprep.subr.mxu0 %v2714
    %2833 = vmatpush1.msra.mxu0 %v2713
    %2834 = vmatprep.subr.mxu0 %v2718
    %2835 = vmatpush1.msra.mxu0 %v2717
    %2836 = vmatprep.subr.mxu0 %v2722
    %2837 = vmatpush1.msra.mxu0 %v2721
    %2838 = vmatprep.subr.mxu0 %v2726
    %2839 = vmatpush1.msra.mxu0 %v2725
    %2840 = vmatprep.subr.mxu0 %v2730
    %2841 = vmatpush1.msra.mxu0 %v2729
    %2842 = vmatprep.subr.mxu0 %v2734
    %2843 = vmatpush1.msra.mxu0 %v2733
    %2844 = vmatprep.subr.mxu0 %v2738
    %2845 = vmatpush1.msra.mxu0 %v2737
    %2846 = vmatprep.subr.mxu0 %v2742
    %2847 = vmatpush1.msra.mxu0 %v2741
    %2848 = vmatprep.subr.mxu0 %v2746
    %2849 = vmatpush1.msra.mxu0 %v2745
    %2850 = vmatprep.subr.mxu0 0.0
    %2851 = vmatpush1.msra.mxu0 0.0
    %2852 = vmatprep.subr.mxu0 0.0
    %2853 = vmatpush1.msra.mxu0 0.0
    %2854 = vmatprep.subr.mxu0 0.0
    %2855 = vmatpush1.msra.mxu0 0.0
    %2856 = vmatprep.subr.mxu0 0.0
    %2857 = vmatpush1.msra.mxu0 0.0
    %2858 = vmatprep.subr.mxu0 0.0
    %2859 = vmatpush1.msra.mxu0 0.0
    %2860 = vmatprep.subr.mxu0 0.0
    %2861 = vmatpush1.msra.mxu0 0.0
    %2862 = vmatprep.subr.mxu0 0.0
    %2863 = vmatpush1.msra.mxu0 0.0
    %2864 = vmatprep.subr.mxu0 0.0
    %2865 = vmatpush1.msra.mxu0 0.0
    %2866 = vmatprep.subr.mxu0 0.0
    %2867 = vmatpush1.msra.mxu0 0.0
    %2868 = vmatprep.subr.mxu0 0.0
    %2869 = vmatpush1.msra.mxu0 0.0
    %2870 = vmatprep.subr.mxu0 0.0
    %2871 = vmatpush1.msra.mxu0 0.0
    %2872 = vmatprep.subr.mxu0 0.0
    %2873 = vmatpush1.msra.mxu0 0.0
    %2874 = vmatprep.subr.mxu0 0.0
    %2875 = vmatpush1.msra.mxu0 0.0
    %2876 = vmatprep.subr.mxu0 0.0
    %2877 = vmatpush1.msra.mxu0 0.0
    %2878 = vmatprep.subr.mxu0 0.0
    %2879 = vmatpush1.msra.mxu0 0.0
    %2880 = vmatprep.subr.mxu0 0.0
    %2881 = vmatpush1.msra.mxu0 0.0
    %2882 = vmatprep.mubr.f32.mxu0 0.0
    %2883 = vmatmul.mubr.f32.gmra.mrb[0].mxu0 0.0
    %v2884 = vpop.f32.mrb[0].mxu0
    %v2885 = vadd.f32 0.0, %v2884
    %v2886 = vpop.f32.mrb[0].mxu0
    %v2887 = vadd.f32 0.0, %v2886
    %2888 = vdwg.mxu0
    %v2889 = vadd.f32 %v2679, %v2814
    %v2890 = vadd.f32 %v2680, %v2816
    %v2891 = vadd.f32 %v2681, %v2885
    %v2892 = vadd.f32 %v2682, %v2887
    %v2893 = vxor.u32 %v2889, 2147483648
    %v2894 = vmul.f32 %v2893, 1.442695
    %v2895 = vpow.pop %v2894
    %v2896 = vadd.f32 %v2895, 1.0
    %v2897 = vrcp.pop %v2896
    %v2898 = vmul.f32 1.0, %v2897
    %v2899 = vxor.u32 %v2890, 2147483648
    %v2900 = vmul.f32 %v2899, 1.442695
    %v2901 = vpow.pop %v2900
    %v2902 = vadd.f32 %v2901, 1.0
    %v2903 = vrcp.pop %v2902
    %v2904 = vmul.f32 1.0, %v2903
    %v2905 = vtanh.pop %v2891
    %v2906 = vxor.u32 %v2892, 2147483648
    %v2907 = vmul.f32 %v2906, 1.442695
    %v2908 = vpow.pop %v2907
    %v2909 = vadd.f32 %v2908, 1.0
    %v2910 = vrcp.pop %v2909
    %v2911 = vmul.f32 1.0, %v2910
    %v2912 = vmul.f32 %v2904, 0.0
    %v2913 = vmul.f32 %v2898, %v2905
    %v2914 = vadd.f32 %v2912, %v2913
    %v2915 = vtanh.pop %v2914
    %v2916 = vmul.f32 %v2911, %v2915
    %v2917 = vld [vmem:[#allocation2 + $0x20] sm:$0xff]
    %v2918 = vld [vmem:[#allocation2 + $0x28] sm:$0xff]
    %v2919 = vld [vmem:[#allocation2 + $0x30] sm:$0xff]
    %v2920 = vld [vmem:[#allocation2 + $0x38] sm:$0xff]
    %2921 = vmatprep.subr.mxu0 %v2684
    %2922 = vmatpush1.msra.mxu0 %v2683
    %2923 = vmatprep.subr.mxu0 %v2688
    %2924 = vmatpush1.msra.mxu0 %v2687
    %2925 = vmatprep.subr.mxu0 %v2692
    %2926 = vmatpush1.msra.mxu0 %v2691
    %2927 = vmatprep.subr.mxu0 %v2696
    %2928 = vmatpush1.msra.mxu0 %v2695
    %2929 = vmatprep.subr.mxu0 %v2700
    %2930 = vmatpush1.msra.mxu0 %v2699
    %2931 = vmatprep.subr.mxu0 %v2704
    %2932 = vmatpush1.msra.mxu0 %v2703
    %2933 = vmatprep.subr.mxu0 %v2708
    %2934 = vmatpush1.msra.mxu0 %v2707
    %2935 = vmatprep.subr.mxu0 %v2712
    %2936 = vmatpush1.msra.mxu0 %v2711
    %2937 = vmatprep.subr.mxu0 %v2716
    %2938 = vmatpush1.msra.mxu0 %v2715
    %2939 = vmatprep.subr.mxu0 %v2720
    %2940 = vmatpush1.msra.mxu0 %v2719
    %2941 = vmatprep.subr.mxu0 %v2724
    %2942 = vmatpush1.msra.mxu0 %v2723
    %2943 = vmatprep.subr.mxu0 %v2728
    %2944 = vmatpush1.msra.mxu0 %v2727
    %2945 = vmatprep.subr.mxu0 %v2732
    %2946 = vmatpush1.msra.mxu0 %v2731
    %2947 = vmatprep.subr.mxu0 %v2736
    %2948 = vmatpush1.msra.mxu0 %v2735
    %2949 = vmatprep.subr.mxu0 %v2740
    %2950 = vmatpush1.msra.mxu0 %v2739
    %2951 = vmatprep.subr.mxu0 %v2744
    %2952 = vmatpush1.msra.mxu0 %v2743
    %2953 = vmatprep.subr.mxu0 0.0
    %2954 = vmatpush1.msra.mxu0 0.0
    %2955 = vmatprep.subr.mxu0 0.0
    %2956 = vmatpush1.msra.mxu0 0.0
    %2957 = vmatprep.subr.mxu0 0.0
    %2958 = vmatpush1.msra.mxu0 0.0
    %2959 = vmatprep.subr.mxu0 0.0
    %2960 = vmatpush1.msra.mxu0 0.0
    %2961 = vmatprep.subr.mxu0 0.0
    %2962 = vmatpush1.msra.mxu0 0.0
    %2963 = vmatprep.subr.mxu0 0.0
    %2964 = vmatpush1.msra.mxu0 0.0
    %2965 = vmatprep.subr.mxu0 0.0
    %2966 = vmatpush1.msra.mxu0 0.0
    %2967 = vmatprep.subr.mxu0 0.0
    %2968 = vmatpush1.msra.mxu0 0.0
    %2969 = vmatprep.subr.mxu0 0.0
    %2970 = vmatpush1.msra.mxu0 0.0
    %2971 = vmatprep.subr.mxu0 0.0
    %2972 = vmatpush1.msra.mxu0 0.0
    %2973 = vmatprep.subr.mxu0 0.0
    %2974 = vmatpush1.msra.mxu0 0.0
    %2975 = vmatprep.subr.mxu0 0.0
    %2976 = vmatpush1.msra.mxu0 0.0
    %2977 = vmatprep.subr.mxu0 0.0
    %2978 = vmatpush1.msra.mxu0 0.0
    %2979 = vmatprep.subr.mxu0 0.0
    %2980 = vmatpush1.msra.mxu0 0.0
    %2981 = vmatprep.subr.mxu0 0.0
    %2982 = vmatpush1.msra.mxu0 0.0
    %2983 = vmatprep.subr.mxu0 0.0
    %2984 = vmatpush1.msra.mxu0 0.0
    %2985 = vmatprep.mubr.f32.mxu0 0.0
    %2986 = vmatmul.mubr.f32.gmra.mrb[0].mxu0 %v2916
    %v2987 = vpop.f32.mrb[0].mxu0
    %v2988 = vadd.f32 0.0, %v2987
    %v2989 = vpop.f32.mrb[0].mxu0
    %v2990 = vadd.f32 0.0, %v2989
    %2991 = vdwg.mxu0
    %2992 = vmatprep.subr.mxu0 %v2686
    %2993 = vmatpush1.msra.mxu0 %v2685
    %2994 = vmatprep.subr.mxu0 %v2690
    %2995 = vmatpush1.msra.mxu0 %v2689
    %2996 = vmatprep.subr.mxu0 %v2694
    %2997 = vmatpush1.msra.mxu0 %v2693
    %2998 = vmatprep.subr.mxu0 %v2698
    %2999 = vmatpush1.msra.mxu0 %v2697
    %3000 = vmatprep.subr.mxu0 %v2702
    %3001 = vmatpush1.msra.mxu0 %v2701
    %3002 = vmatprep.subr.mxu0 %v2706
    %3003 = vmatpush1.msra.mxu0 %v2705
    %3004 = vmatprep.subr.mxu0 %v2710
    %3005 = vmatpush1.msra.mxu0 %v2709
    %3006 = vmatprep.subr.mxu0 %v2714
    %3007 = vmatpush1.msra.mxu0 %v2713
    %3008 = vmatprep.subr.mxu0 %v2718
    %3009 = vmatpush1.msra.mxu0 %v2717
    %3010 = vmatprep.subr.mxu0 %v2722
    %3011 = vmatpush1.msra.mxu0 %v2721
    %3012 = vmatprep.subr.mxu0 %v2726
    %3013 = vmatpush1.msra.mxu0 %v2725
    %3014 = vmatprep.subr.mxu0 %v2730
    %3015 = vmatpush1.msra.mxu0 %v2729
    %3016 = vmatprep.subr.mxu0 %v2734
    %3017 = vmatpush1.msra.mxu0 %v2733
    %3018 = vmatprep.subr.mxu0 %v2738
    %3019 = vmatpush1.msra.mxu0 %v2737
    %3020 = vmatprep.subr.mxu0 %v2742
    %3021 = vmatpush1.msra.mxu0 %v2741
    %3022 = vmatprep.subr.mxu0 %v2746
    %3023 = vmatpush1.msra.mxu0 %v2745
    %3024 = vmatprep.subr.mxu0 0.0
    %3025 = vmatpush1.msra.mxu0 0.0
    %3026 = vmatprep.subr.mxu0 0.0
    %3027 = vmatpush1.msra.mxu0 0.0
    %3028 = vmatprep.subr.mxu0 0.0
    %3029 = vmatpush1.msra.mxu0 0.0
    %3030 = vmatprep.subr.mxu0 0.0
    %3031 = vmatpush1.msra.mxu0 0.0
    %3032 = vmatprep.subr.mxu0 0.0
    %3033 = vmatpush1.msra.mxu0 0.0
    %3034 = vmatprep.subr.mxu0 0.0
    %3035 = vmatpush1.msra.mxu0 0.0
    %3036 = vmatprep.subr.mxu0 0.0
    %3037 = vmatpush1.msra.mxu0 0.0
    %3038 = vmatprep.subr.mxu0 0.0
    %3039 = vmatpush1.msra.mxu0 0.0
    %3040 = vmatprep.subr.mxu0 0.0
    %3041 = vmatpush1.msra.mxu0 0.0
    %3042 = vmatprep.subr.mxu0 0.0
    %3043 = vmatpush1.msra.mxu0 0.0
    %3044 = vmatprep.subr.mxu0 0.0
    %3045 = vmatpush1.msra.mxu0 0.0
    %3046 = vmatprep.subr.mxu0 0.0
    %3047 = vmatpush1.msra.mxu0 0.0
    %3048 = vmatprep.subr.mxu0 0.0
    %3049 = vmatpush1.msra.mxu0 0.0
    %3050 = vmatprep.subr.mxu0 0.0
    %3051 = vmatpush1.msra.mxu0 0.0
    %3052 = vmatprep.subr.mxu0 0.0
    %3053 = vmatpush1.msra.mxu0 0.0
    %3054 = vmatprep.subr.mxu0 0.0
    %3055 = vmatpush1.msra.mxu0 0.0
    %3056 = vmatprep.mubr.f32.mxu0 0.0
    %3057 = vmatmul.mubr.f32.gmra.mrb[0].mxu0 %v2916
    %v3058 = vpop.f32.mrb[0].mxu0
    %v3059 = vadd.f32 0.0, %v3058
    %v3060 = vpop.f32.mrb[0].mxu0
    %v3061 = vadd.f32 0.0, %v3060
    %3062 = vdwg.mxu0
    %v3063 = vadd.f32 %v2917, %v2988
    %v3064 = vadd.f32 %v2918, %v2990
    %v3065 = vadd.f32 %v2919, %v3059
    %v3066 = vadd.f32 %v2920, %v3061
    %v3067 = vxor.u32 %v3063, 2147483648
    %v3068 = vmul.f32 %v3067, 1.442695
    %v3069 = vpow.pop %v3068
    %v3070 = vadd.f32 %v3069, 1.0
    %v3071 = vrcp.pop %v3070
    %v3072 = vmul.f32 1.0, %v3071
    %v3073 = vxor.u32 %v3064, 2147483648
    %v3074 = vmul.f32 %v3073, 1.442695
    %v3075 = vpow.pop %v3074
    %v3076 = vadd.f32 %v3075, 1.0
    %v3077 = vrcp.pop %v3076
    %v3078 = vmul.f32 1.0, %v3077
    %v3079 = vtanh.pop %v3065
    %v3080 = vxor.u32 %v3066, 2147483648
    %v3081 = vmul.f32 %v3080, 1.442695
    %v3082 = vpow.pop %v3081
    %v3083 = vadd.f32 %v3082, 1.0
    %v3084 = vrcp.pop %v3083
    %v3085 = vmul.f32 1.0, %v3084
    %v3086 = vmul.f32 %v3078, %v2914
    %v3087 = vmul.f32 %v3072, %v3079
    %v3088 = vadd.f32 %v3086, %v3087
    %v3089 = vtanh.pop %v3088
    %v3090 = vmul.f32 %v3085, %v3089
    %v3091 = vld [vmem:[#allocation2 + $0x40] sm:$0xff]
    %v3092 = vld [vmem:[#allocation2 + $0x48] sm:$0xff]
    %v3093 = vld [vmem:[#allocation2 + $0x50] sm:$0xff]
    %v3094 = vld [vmem:[#allocation2 + $0x58] sm:$0xff]
    %3095 = vmatprep.subr.mxu0 %v2684
    %3096 = vmatpush1.msra.mxu0 %v2683
    %3097 = vmatprep.subr.mxu0 %v2688
    %3098 = vmatpush1.msra.mxu0 %v2687
    %3099 = vmatprep.subr.mxu0 %v2692
    %3100 = vmatpush1.msra.mxu0 %v2691
    %3101 = vmatprep.subr.mxu0 %v2696
    %3102 = vmatpush1.msra.mxu0 %v2695
    %3103 = vmatprep.subr.mxu0 %v2700
    %3104 = vmatpush1.msra.mxu0 %v2699
    %3105 = vmatprep.subr.mxu0 %v2704
    %3106 = vmatpush1.msra.mxu0 %v2703
    %3107 = vmatprep.subr.mxu0 %v2708
    %3108 = vmatpush1.msra.mxu0 %v2707
    %3109 = vmatprep.subr.mxu0 %v2712
    %3110 = vmatpush1.msra.mxu0 %v2711
    %3111 = vmatprep.subr.mxu0 %v2716
    %3112 = vmatpush1.msra.mxu0 %v2715
    %3113 = vmatprep.subr.mxu0 %v2720
    %3114 = vmatpush1.msra.mxu0 %v2719
    %3115 = vmatprep.subr.mxu0 %v2724
    %3116 = vmatpush1.msra.mxu0 %v2723
    %3117 = vmatprep.subr.mxu0 %v2728
    %3118 = vmatpush1.msra.mxu0 %v2727
    %3119 = vmatprep.subr.mxu0 %v2732
    %3120 = vmatpush1.msra.mxu0 %v2731
    %3121 = vmatprep.subr.mxu0 %v2736
    %3122 = vmatpush1.msra.mxu0 %v2735
    %3123 = vmatprep.subr.mxu0 %v2740
    %3124 = vmatpush1.msra.mxu0 %v2739
    %3125 = vmatprep.subr.mxu0 %v2744
    %3126 = vmatpush1.msra.mxu0 %v2743
    %3127 = vmatprep.subr.mxu0 0.0
    %3128 = vmatpush1.msra.mxu0 0.0
    %3129 = vmatprep.subr.mxu0 0.0
    %3130 = vmatpush1.msra.mxu0 0.0
    %3131 = vmatprep.subr.mxu0 0.0
    %3132 = vmatpush1.msra.mxu0 0.0
    %3133 = vmatprep.subr.mxu0 0.0
    %3134 = vmatpush1.msra.mxu0 0.0
    %3135 = vmatprep.subr.mxu0 0.0
    %3136 = vmatpush1.msra.mxu0 0.0
    %3137 = vmatprep.subr.mxu0 0.0
    %3138 = vmatpush1.msra.mxu0 0.0
    %3139 = vmatprep.subr.mxu0 0.0
    %3140 = vmatpush1.msra.mxu0 0.0
    %3141 = vmatprep.subr.mxu0 0.0
    %3142 = vmatpush1.msra.mxu0 0.0
    %3143 = vmatprep.subr.mxu0 0.0
    %3144 = vmatpush1.msra.mxu0 0.0
    %3145 = vmatprep.subr.mxu0 0.0
    %3146 = vmatpush1.msra.mxu0 0.0
    %3147 = vmatprep.subr.mxu0 0.0
    %3148 = vmatpush1.msra.mxu0 0.0
    %3149 = vmatprep.subr.mxu0 0.0
    %3150 = vmatpush1.msra.mxu0 0.0
    %3151 = vmatprep.subr.mxu0 0.0
    %3152 = vmatpush1.msra.mxu0 0.0
    %3153 = vmatprep.subr.mxu0 0.0
    %3154 = vmatpush1.msra.mxu0 0.0
    %3155 = vmatprep.subr.mxu0 0.0
    %3156 = vmatpush1.msra.mxu0 0.0
    %3157 = vmatprep.subr.mxu0 0.0
    %3158 = vmatpush1.msra.mxu0 0.0
    %3159 = vmatprep.mubr.f32.mxu0 0.0
    %3160 = vmatmul.mubr.f32.gmra.mrb[0].mxu0 %v3090
    %v3161 = vpop.f32.mrb[0].mxu0
    %v3162 = vadd.f32 0.0, %v3161
    %v3163 = vpop.f32.mrb[0].mxu0
    %v3164 = vadd.f32 0.0, %v3163
    %3165 = vdwg.mxu0
    %3166 = vmatprep.subr.mxu0 %v2686
    %3167 = vmatpush1.msra.mxu0 %v2685
    %3168 = vmatprep.subr.mxu0 %v2690
    %3169 = vmatpush1.msra.mxu0 %v2689
    %3170 = vmatprep.subr.mxu0 %v2694
    %3171 = vmatpush1.msra.mxu0 %v2693
    %3172 = vmatprep.subr.mxu0 %v2698
    %3173 = vmatpush1.msra.mxu0 %v2697
    %3174 = vmatprep.subr.mxu0 %v2702
    %3175 = vmatpush1.msra.mxu0 %v2701
    %3176 = vmatprep.subr.mxu0 %v2706
    %3177 = vmatpush1.msra.mxu0 %v2705
    %3178 = vmatprep.subr.mxu0 %v2710
    %3179 = vmatpush1.msra.mxu0 %v2709
    %3180 = vmatprep.subr.mxu0 %v2714
    %3181 = vmatpush1.msra.mxu0 %v2713
    %3182 = vmatprep.subr.mxu0 %v2718
    %3183 = vmatpush1.msra.mxu0 %v2717
    %3184 = vmatprep.subr.mxu0 %v2722
    %3185 = vmatpush1.msra.mxu0 %v2721
    %3186 = vmatprep.subr.mxu0 %v2726
    %3187 = vmatpush1.msra.mxu0 %v2725
    %3188 = vmatprep.subr.mxu0 %v2730
    %3189 = vmatpush1.msra.mxu0 %v2729
    %3190 = vmatprep.subr.mxu0 %v2734
    %3191 = vmatpush1.msra.mxu0 %v2733
    %3192 = vmatprep.subr.mxu0 %v2738
    %3193 = vmatpush1.msra.mxu0 %v2737
    %3194 = vmatprep.subr.mxu0 %v2742
    %3195 = vmatpush1.msra.mxu0 %v2741
    %3196 = vmatprep.subr.mxu0 %v2746
    %3197 = vmatpush1.msra.mxu0 %v2745
    %3198 = vmatprep.subr.mxu0 0.0
    %3199 = vmatpush1.msra.mxu0 0.0
    %3200 = vmatprep.subr.mxu0 0.0
    %3201 = vmatpush1.msra.mxu0 0.0
    %3202 = vmatprep.subr.mxu0 0.0
    %3203 = vmatpush1.msra.mxu0 0.0
    %3204 = vmatprep.subr.mxu0 0.0
    %3205 = vmatpush1.msra.mxu0 0.0
    %3206 = vmatprep.subr.mxu0 0.0
    %3207 = vmatpush1.msra.mxu0 0.0
    %3208 = vmatprep.subr.mxu0 0.0
    %3209 = vmatpush1.msra.mxu0 0.0
    %3210 = vmatprep.subr.mxu0 0.0
    %3211 = vmatpush1.msra.mxu0 0.0
    %3212 = vmatprep.subr.mxu0 0.0
    %3213 = vmatpush1.msra.mxu0 0.0
    %3214 = vmatprep.subr.mxu0 0.0
    %3215 = vmatpush1.msra.mxu0 0.0
    %3216 = vmatprep.subr.mxu0 0.0
    %3217 = vmatpush1.msra.mxu0 0.0
    %3218 = vmatprep.subr.mxu0 0.0
    %3219 = vmatpush1.msra.mxu0 0.0
    %3220 = vmatprep.subr.mxu0 0.0
    %3221 = vmatpush1.msra.mxu0 0.0
    %3222 = vmatprep.subr.mxu0 0.0
    %3223 = vmatpush1.msra.mxu0 0.0
    %3224 = vmatprep.subr.mxu0 0.0
    %3225 = vmatpush1.msra.mxu0 0.0
    %3226 = vmatprep.subr.mxu0 0.0
    %3227 = vmatpush1.msra.mxu0 0.0
    %3228 = vmatprep.subr.mxu0 0.0
    %3229 = vmatpush1.msra.mxu0 0.0
    %3230 = vmatprep.mubr.f32.mxu0 0.0
    %3231 = vmatmul.mubr.f32.gmra.mrb[0].mxu0 %v3090
    %v3232 = vpop.f32.mrb[0].mxu0
    %v3233 = vadd.f32 0.0, %v3232
    %v3234 = vpop.f32.mrb[0].mxu0
    %v3235 = vadd.f32 0.0, %v3234
    %3236 = vdwg.mxu0
    %v3237 = vadd.f32 %v3091, %v3162
    %v3238 = vadd.f32 %v3092, %v3164
    %v3239 = vadd.f32 %v3093, %v3233
    %v3240 = vadd.f32 %v3094, %v3235
    %v3241 = vxor.u32 %v3237, 2147483648
    %v3242 = vmul.f32 %v3241, 1.442695
    %v3243 = vpow.pop %v3242
    %v3244 = vadd.f32 %v3243, 1.0
    %v3245 = vrcp.pop %v3244
    %v3246 = vmul.f32 1.0, %v3245
    %v3247 = vxor.u32 %v3238, 2147483648
    %v3248 = vmul.f32 %v3247, 1.442695
    %v3249 = vpow.pop %v3248
    %v3250 = vadd.f32 %v3249, 1.0
    %v3251 = vrcp.pop %v3250
    %v3252 = vmul.f32 1.0, %v3251
    %v3253 = vtanh.pop %v3239
    %v3254 = vxor.u32 %v3240, 2147483648
    %v3255 = vmul.f32 %v3254, 1.442695
    %v3256 = vpow.pop %v3255
    %v3257 = vadd.f32 %v3256, 1.0
    %v3258 = vrcp.pop %v3257
    %v3259 = vmul.f32 1.0, %v3258
    %v3260 = vmul.f32 %v3252, %v3088
    %v3261 = vmul.f32 %v3246, %v3253
    %v3262 = vadd.f32 %v3260, %v3261
    %v3263 = vtanh.pop %v3262
    %v3264 = vmul.f32 %v3259, %v3263
    %v3265 = vld [vmem:[#allocation2 + $0x60] sm:$0xff]
    %v3266 = vld [vmem:[#allocation2 + $0x68] sm:$0xff]
    %v3267 = vld [vmem:[#allocation2 + $0x70] sm:$0xff]
    %v3268 = vld [vmem:[#allocation2 + $0x78] sm:$0xff]
    %3269 = vmatprep.subr.mxu0 %v2684
    %3270 = vmatpush1.msra.mxu0 %v2683
    %3271 = vmatprep.subr.mxu0 %v2688
    %3272 = vmatpush1.msra.mxu0 %v2687
    %3273 = vmatprep.subr.mxu0 %v2692
    %3274 = vmatpush1.msra.mxu0 %v2691
    %3275 = vmatprep.subr.mxu0 %v2696
    %3276 = vmatpush1.msra.mxu0 %v2695
    %3277 = vmatprep.subr.mxu0 %v2700
    %3278 = vmatpush1.msra.mxu0 %v2699
    %3279 = vmatprep.subr.mxu0 %v2704
    %3280 = vmatpush1.msra.mxu0 %v2703
    %3281 = vmatprep.subr.mxu0 %v2708
    %3282 = vmatpush1.msra.mxu0 %v2707
    %3283 = vmatprep.subr.mxu0 %v2712
    %3284 = vmatpush1.msra.mxu0 %v2711
    %3285 = vmatprep.subr.mxu0 %v2716
    %3286 = vmatpush1.msra.mxu0 %v2715
    %3287 = vmatprep.subr.mxu0 %v2720
    %3288 = vmatpush1.msra.mxu0 %v2719
    %3289 = vmatprep.subr.mxu0 %v2724
    %3290 = vmatpush1.msra.mxu0 %v2723
    %3291 = vmatprep.subr.mxu0 %v2728
    %3292 = vmatpush1.msra.mxu0 %v2727
    %3293 = vmatprep.subr.mxu0 %v2732
    %3294 = vmatpush1.msra.mxu0 %v2731
    %3295 = vmatprep.subr.mxu0 %v2736
    %3296 = vmatpush1.msra.mxu0 %v2735
    %3297 = vmatprep.subr.mxu0 %v2740
    %3298 = vmatpush1.msra.mxu0 %v2739
    %3299 = vmatprep.subr.mxu0 %v2744
    %3300 = vmatpush1.msra.mxu0 %v2743
    %3301 = vmatprep.subr.mxu0 0.0
    %3302 = vmatpush1.msra.mxu0 0.0
    %3303 = vmatprep.subr.mxu0 0.0
    %3304 = vmatpush1.msra.mxu0 0.0
    %3305 = vmatprep.subr.mxu0 0.0
    %3306 = vmatpush1.msra.mxu0 0.0
    %3307 = vmatprep.subr.mxu0 0.0
    %3308 = vmatpush1.msra.mxu0 0.0
    %3309 = vmatprep.subr.mxu0 0.0
    %3310 = vmatpush1.msra.mxu0 0.0
    %3311 = vmatprep.subr.mxu0 0.0
    %3312 = vmatpush1.msra.mxu0 0.0
    %3313 = vmatprep.subr.mxu0 0.0
    %3314 = vmatpush1.msra.mxu0 0.0
    %3315 = vmatprep.subr.mxu0 0.0
    %3316 = vmatpush1.msra.mxu0 0.0
    %3317 = vmatprep.subr.mxu0 0.0
    %3318 = vmatpush1.msra.mxu0 0.0
    %3319 = vmatprep.subr.mxu0 0.0
    %3320 = vmatpush1.msra.mxu0 0.0
    %3321 = vmatprep.subr.mxu0 0.0
    %3322 = vmatpush1.msra.mxu0 0.0
    %3323 = vmatprep.subr.mxu0 0.0
    %3324 = vmatpush1.msra.mxu0 0.0
    %3325 = vmatprep.subr.mxu0 0.0
    %3326 = vmatpush1.msra.mxu0 0.0
    %3327 = vmatprep.subr.mxu0 0.0
    %3328 = vmatpush1.msra.mxu0 0.0
    %3329 = vmatprep.subr.mxu0 0.0
    %3330 = vmatpush1.msra.mxu0 0.0
    %3331 = vmatprep.subr.mxu0 0.0
    %3332 = vmatpush1.msra.mxu0 0.0
    %3333 = vmatprep.mubr.f32.mxu0 0.0
    %3334 = vmatmul.mubr.f32.gmra.mrb[0].mxu0 %v3264
    %v3335 = vpop.f32.mrb[0].mxu0
    %v3336 = vadd.f32 0.0, %v3335
    %v3337 = vpop.f32.mrb[0].mxu0
    %v3338 = vadd.f32 0.0, %v3337
    %3339 = vdwg.mxu0
    %3340 = vmatprep.subr.mxu0 %v2686
    %3341 = vmatpush1.msra.mxu0 %v2685
    %3342 = vmatprep.subr.mxu0 %v2690
    %3343 = vmatpush1.msra.mxu0 %v2689
    %3344 = vmatprep.subr.mxu0 %v2694
    %3345 = vmatpush1.msra.mxu0 %v2693
    %3346 = vmatprep.subr.mxu0 %v2698
    %3347 = vmatpush1.msra.mxu0 %v2697
    %3348 = vmatprep.subr.mxu0 %v2702
    %3349 = vmatpush1.msra.mxu0 %v2701
    %3350 = vmatprep.subr.mxu0 %v2706
    %3351 = vmatpush1.msra.mxu0 %v2705
    %3352 = vmatprep.subr.mxu0 %v2710
    %3353 = vmatpush1.msra.mxu0 %v2709
    %3354 = vmatprep.subr.mxu0 %v2714
    %3355 = vmatpush1.msra.mxu0 %v2713
    %3356 = vmatprep.subr.mxu0 %v2718
    %3357 = vmatpush1.msra.mxu0 %v2717
    %3358 = vmatprep.subr.mxu0 %v2722
    %3359 = vmatpush1.msra.mxu0 %v2721
    %3360 = vmatprep.subr.mxu0 %v2726
    %3361 = vmatpush1.msra.mxu0 %v2725
    %3362 = vmatprep.subr.mxu0 %v2730
    %3363 = vmatpush1.msra.mxu0 %v2729
    %3364 = vmatprep.subr.mxu0 %v2734
    %3365 = vmatpush1.msra.mxu0 %v2733
    %3366 = vmatprep.subr.mxu0 %v2738
    %3367 = vmatpush1.msra.mxu0 %v2737
    %3368 = vmatprep.subr.mxu0 %v2742
    %3369 = vmatpush1.msra.mxu0 %v2741
    %3370 = vmatprep.subr.mxu0 %v2746
    %3371 = vmatpush1.msra.mxu0 %v2745
    %3372 = vmatprep.subr.mxu0 0.0
    %3373 = vmatpush1.msra.mxu0 0.0
    %3374 = vmatprep.subr.mxu0 0.0
    %3375 = vmatpush1.msra.mxu0 0.0
    %3376 = vmatprep.subr.mxu0 0.0
    %3377 = vmatpush1.msra.mxu0 0.0
    %3378 = vmatprep.subr.mxu0 0.0
    %3379 = vmatpush1.msra.mxu0 0.0
    %3380 = vmatprep.subr.mxu0 0.0
    %3381 = vmatpush1.msra.mxu0 0.0
    %3382 = vmatprep.subr.mxu0 0.0
    %3383 = vmatpush1.msra.mxu0 0.0
    %3384 = vmatprep.subr.mxu0 0.0
    %3385 = vmatpush1.msra.mxu0 0.0
    %3386 = vmatprep.subr.mxu0 0.0
    %3387 = vmatpush1.msra.mxu0 0.0
    %3388 = vmatprep.subr.mxu0 0.0
    %3389 = vmatpush1.msra.mxu0 0.0
    %3390 = vmatprep.subr.mxu0 0.0
    %3391 = vmatpush1.msra.mxu0 0.0
    %3392 = vmatprep.subr.mxu0 0.0
    %3393 = vmatpush1.msra.mxu0 0.0
    %3394 = vmatprep.subr.mxu0 0.0
    %3395 = vmatpush1.msra.mxu0 0.0
    %3396 = vmatprep.subr.mxu0 0.0
    %3397 = vmatpush1.msra.mxu0 0.0
    %3398 = vmatprep.subr.mxu0 0.0
    %3399 = vmatpush1.msra.mxu0 0.0
    %3400 = vmatprep.subr.mxu0 0.0
    %3401 = vmatpush1.msra.mxu0 0.0
    %3402 = vmatprep.subr.mxu0 0.0
    %3403 = vmatpush1.msra.mxu0 0.0
    %3404 = vmatprep.mubr.f32.mxu0 0.0
    %3405 = vmatmul.mubr.f32.gmra.mrb[0].mxu0 %v3264
    %v3406 = vpop.f32.mrb[0].mxu0
    %v3407 = vadd.f32 0.0, %v3406
    %v3408 = vpop.f32.mrb[0].mxu0
    %v3409 = vadd.f32 0.0, %v3408
    %3410 = vdwg.mxu0
    %v3411 = vadd.f32 %v3265, %v3336
    %v3412 = vadd.f32 %v3266, %v3338
    %v3413 = vadd.f32 %v3267, %v3407
    %v3414 = vadd.f32 %v3268, %v3409
    %v3415 = vxor.u32 %v3411, 2147483648
    %v3416 = vmul.f32 %v3415, 1.442695
    %v3417 = vpow.pop %v3416
    %v3418 = vadd.f32 %v3417, 1.0
    %v3419 = vrcp.pop %v3418
    %v3420 = vmul.f32 1.0, %v3419
    %v3421 = vxor.u32 %v3412, 2147483648
    %v3422 = vmul.f32 %v3421, 1.442695
    %v3423 = vpow.pop %v3422
    %v3424 = vadd.f32 %v3423, 1.0
    %v3425 = vrcp.pop %v3424
    %v3426 = vmul.f32 1.0, %v3425
    %v3427 = vtanh.pop %v3413
    %v3428 = vxor.u32 %v3414, 2147483648
    %v3429 = vmul.f32 %v3428, 1.442695
    %v3430 = vpow.pop %v3429
    %v3431 = vadd.f32 %v3430, 1.0
    %v3432 = vrcp.pop %v3431
    %v3433 = vmul.f32 1.0, %v3432
    %v3434 = vmul.f32 %v3426, %v3262
    %v3435 = vmul.f32 %v3420, %v3427
    %v3436 = vadd.f32 %v3434, %v3435
    %v3437 = vtanh.pop %v3436
    %v3438 = vmul.f32 %v3433, %v3437
    %v3439 = vld [vmem:[#allocation2 + $0x80] sm:$0xff]
    %v3440 = vld [vmem:[#allocation2 + $0x88] sm:$0xff]
    %v3441 = vld [vmem:[#allocation2 + $0x90] sm:$0xff]
    %v3442 = vld [vmem:[#allocation2 + $0x98] sm:$0xff]
    %3443 = vmatprep.subr.mxu0 %v2684
    %3444 = vmatpush1.msra.mxu0 %v2683
    %3445 = vmatprep.subr.mxu0 %v2688
    %3446 = vmatpush1.msra.mxu0 %v2687
    %3447 = vmatprep.subr.mxu0 %v2692
    %3448 = vmatpush1.msra.mxu0 %v2691
    %3449 = vmatprep.subr.mxu0 %v2696
    %3450 = vmatpush1.msra.mxu0 %v2695
    %3451 = vmatprep.subr.mxu0 %v2700
    %3452 = vmatpush1.msra.mxu0 %v2699
    %3453 = vmatprep.subr.mxu0 %v2704
    %3454 = vmatpush1.msra.mxu0 %v2703
    %3455 = vmatprep.subr.mxu0 %v2708
    %3456 = vmatpush1.msra.mxu0 %v2707
    %3457 = vmatprep.subr.mxu0 %v2712
    %3458 = vmatpush1.msra.mxu0 %v2711
    %3459 = vmatprep.subr.mxu0 %v2716
    %3460 = vmatpush1.msra.mxu0 %v2715
    %3461 = vmatprep.subr.mxu0 %v2720
    %3462 = vmatpush1.msra.mxu0 %v2719
    %3463 = vmatprep.subr.mxu0 %v2724
    %3464 = vmatpush1.msra.mxu0 %v2723
    %3465 = vmatprep.subr.mxu0 %v2728
    %3466 = vmatpush1.msra.mxu0 %v2727
    %3467 = vmatprep.subr.mxu0 %v2732
    %3468 = vmatpush1.msra.mxu0 %v2731
    %3469 = vmatprep.subr.mxu0 %v2736
    %3470 = vmatpush1.msra.mxu0 %v2735
    %3471 = vmatprep.subr.mxu0 %v2740
    %3472 = vmatpush1.msra.mxu0 %v2739
    %3473 = vmatprep.subr.mxu0 %v2744
    %3474 = vmatpush1.msra.mxu0 %v2743
    %3475 = vmatprep.subr.mxu0 0.0
    %3476 = vmatpush1.msra.mxu0 0.0
    %3477 = vmatprep.subr.mxu0 0.0
    %3478 = vmatpush1.msra.mxu0 0.0
    %3479 = vmatprep.subr.mxu0 0.0
    %3480 = vmatpush1.msra.mxu0 0.0
    %3481 = vmatprep.subr.mxu0 0.0
    %3482 = vmatpush1.msra.mxu0 0.0
    %3483 = vmatprep.subr.mxu0 0.0
    %3484 = vmatpush1.msra.mxu0 0.0
    %3485 = vmatprep.subr.mxu0 0.0
    %3486 = vmatpush1.msra.mxu0 0.0
    %3487 = vmatprep.subr.mxu0 0.0
    %3488 = vmatpush1.msra.mxu0 0.0
    %3489 = vmatprep.subr.mxu0 0.0
    %3490 = vmatpush1.msra.mxu0 0.0
    %3491 = vmatprep.subr.mxu0 0.0
    %3492 = vmatpush1.msra.mxu0 0.0
    %3493 = vmatprep.subr.mxu0 0.0
    %3494 = vmatpush1.msra.mxu0 0.0
    %3495 = vmatprep.subr.mxu0 0.0
    %3496 = vmatpush1.msra.mxu0 0.0
    %3497 = vmatprep.subr.mxu0 0.0
    %3498 = vmatpush1.msra.mxu0 0.0
    %3499 = vmatprep.subr.mxu0 0.0
    %3500 = vmatpush1.msra.mxu0 0.0
    %3501 = vmatprep.subr.mxu0 0.0
    %3502 = vmatpush1.msra.mxu0 0.0
    %3503 = vmatprep.subr.mxu0 0.0
    %3504 = vmatpush1.msra.mxu0 0.0
    %3505 = vmatprep.subr.mxu0 0.0
    %3506 = vmatpush1.msra.mxu0 0.0
    %3507 = vmatprep.mubr.f32.mxu0 0.0
    %3508 = vmatmul.mubr.f32.gmra.mrb[0].mxu0 %v3438
    %v3509 = vpop.f32.mrb[0].mxu0
    %v3510 = vadd.f32 0.0, %v3509
    %v3511 = vpop.f32.mrb[0].mxu0
    %v3512 = vadd.f32 0.0, %v3511
    %3513 = vdwg.mxu0
    %3514 = vmatprep.subr.mxu0 %v2686
    %3515 = vmatpush1.msra.mxu0 %v2685
    %3516 = vmatprep.subr.mxu0 %v2690
    %3517 = vmatpush1.msra.mxu0 %v2689
    %3518 = vmatprep.subr.mxu0 %v2694
    %3519 = vmatpush1.msra.mxu0 %v2693
    %3520 = vmatprep.subr.mxu0 %v2698
    %3521 = vmatpush1.msra.mxu0 %v2697
    %3522 = vmatprep.subr.mxu0 %v2702
    %3523 = vmatpush1.msra.mxu0 %v2701
    %3524 = vmatprep.subr.mxu0 %v2706
    %3525 = vmatpush1.msra.mxu0 %v2705
    %3526 = vmatprep.subr.mxu0 %v2710
    %3527 = vmatpush1.msra.mxu0 %v2709
    %3528 = vmatprep.subr.mxu0 %v2714
    %3529 = vmatpush1.msra.mxu0 %v2713
    %3530 = vmatprep.subr.mxu0 %v2718
    %3531 = vmatpush1.msra.mxu0 %v2717
    %3532 = vmatprep.subr.mxu0 %v2722
    %3533 = vmatpush1.msra.mxu0 %v2721
    %3534 = vmatprep.subr.mxu0 %v2726
    %3535 = vmatpush1.msra.mxu0 %v2725
    %3536 = vmatprep.subr.mxu0 %v2730
    %3537 = vmatpush1.msra.mxu0 %v2729
    %3538 = vmatprep.subr.mxu0 %v2734
    %3539 = vmatpush1.msra.mxu0 %v2733
    %3540 = vmatprep.subr.mxu0 %v2738
    %3541 = vmatpush1.msra.mxu0 %v2737
    %3542 = vmatprep.subr.mxu0 %v2742
    %3543 = vmatpush1.msra.mxu0 %v2741
    %3544 = vmatprep.subr.mxu0 %v2746
    %3545 = vmatpush1.msra.mxu0 %v2745
    %3546 = vmatprep.subr.mxu0 0.0
    %3547 = vmatpush1.msra.mxu0 0.0
    %3548 = vmatprep.subr.mxu0 0.0
    %3549 = vmatpush1.msra.mxu0 0.0
    %3550 = vmatprep.subr.mxu0 0.0
    %3551 = vmatpush1.msra.mxu0 0.0
    %3552 = vmatprep.subr.mxu0 0.0
    %3553 = vmatpush1.msra.mxu0 0.0
    %3554 = vmatprep.subr.mxu0 0.0
    %3555 = vmatpush1.msra.mxu0 0.0
    %3556 = vmatprep.subr.mxu0 0.0
    %3557 = vmatpush1.msra.mxu0 0.0
    %3558 = vmatprep.subr.mxu0 0.0
    %3559 = vmatpush1.msra.mxu0 0.0
    %3560 = vmatprep.subr.mxu0 0.0
    %3561 = vmatpush1.msra.mxu0 0.0
    %3562 = vmatprep.subr.mxu0 0.0
    %3563 = vmatpush1.msra.mxu0 0.0
    %3564 = vmatprep.subr.mxu0 0.0
    %3565 = vmatpush1.msra.mxu0 0.0
    %3566 = vmatprep.subr.mxu0 0.0
    %3567 = vmatpush1.msra.mxu0 0.0
    %3568 = vmatprep.subr.mxu0 0.0
    %3569 = vmatpush1.msra.mxu0 0.0
    %3570 = vmatprep.subr.mxu0 0.0
    %3571 = vmatpush1.msra.mxu0 0.0
    %3572 = vmatprep.subr.mxu0 0.0
    %3573 = vmatpush1.msra.mxu0 0.0
    %3574 = vmatprep.subr.mxu0 0.0
    %3575 = vmatpush1.msra.mxu0 0.0
    %3576 = vmatprep.subr.mxu0 0.0
    %3577 = vmatpush1.msra.mxu0 0.0
    %3578 = vmatprep.mubr.f32.mxu0 0.0
    %3579 = vmatmul.mubr.f32.gmra.mrb[0].mxu0 %v3438
    %v3580 = vpop.f32.mrb[0].mxu0
    %v3581 = vadd.f32 0.0, %v3580
    %v3582 = vpop.f32.mrb[0].mxu0
    %v3583 = vadd.f32 0.0, %v3582
    %3584 = vdwg.mxu0
    %v3585 = vadd.f32 %v3439, %v3510
    %v3586 = vadd.f32 %v3440, %v3512
    %v3587 = vadd.f32 %v3441, %v3581
    %v3588 = vadd.f32 %v3442, %v3583
    %v3589 = vxor.u32 %v3585, 2147483648
    %v3590 = vmul.f32 %v3589, 1.442695
    %v3591 = vpow.pop %v3590
    %v3592 = vadd.f32 %v3591, 1.0
    %v3593 = vrcp.pop %v3592
    %v3594 = vmul.f32 1.0, %v3593
    %v3595 = vxor.u32 %v3586, 2147483648
    %v3596 = vmul.f32 %v3595, 1.442695
    %v3597 = vpow.pop %v3596
    %v3598 = vadd.f32 %v3597, 1.0
    %v3599 = vrcp.pop %v3598
    %v3600 = vmul.f32 1.0, %v3599
    %v3601 = vtanh.pop %v3587
    %v3602 = vxor.u32 %v3588, 2147483648
    %v3603 = vmul.f32 %v3602, 1.442695
    %v3604 = vpow.pop %v3603
    %v3605 = vadd.f32 %v3604, 1.0
    %v3606 = vrcp.pop %v3605
    %v3607 = vmul.f32 1.0, %v3606
    %v3608 = vmul.f32 %v3600, %v3436
    %v3609 = vmul.f32 %v3594, %v3601
    %v3610 = vadd.f32 %v3608, %v3609
    %v3611 = vtanh.pop %v3610
    %v3612 = vmul.f32 %v3607, %v3611
    %v3613 = vld [vmem:[#allocation2 + $0xa0] sm:$0xff]
    %v3614 = vld [vmem:[#allocation2 + $0xa8] sm:$0xff]
    %v3615 = vld [vmem:[#allocation2 + $0xb0] sm:$0xff]
    %v3616 = vld [vmem:[#allocation2 + $0xb8] sm:$0xff]
    %3617 = vmatprep.subr.mxu0 %v2684
    %3618 = vmatpush1.msra.mxu0 %v2683
    %3619 = vmatprep.subr.mxu0 %v2688
    %3620 = vmatpush1.msra.mxu0 %v2687
    %3621 = vmatprep.subr.mxu0 %v2692
    %3622 = vmatpush1.msra.mxu0 %v2691
    %3623 = vmatprep.subr.mxu0 %v2696
    %3624 = vmatpush1.msra.mxu0 %v2695
    %3625 = vmatprep.subr.mxu0 %v2700
    %3626 = vmatpush1.msra.mxu0 %v2699
    %3627 = vmatprep.subr.mxu0 %v2704
    %3628 = vmatpush1.msra.mxu0 %v2703
    %3629 = vmatprep.subr.mxu0 %v2708
    %3630 = vmatpush1.msra.mxu0 %v2707
    %3631 = vmatprep.subr.mxu0 %v2712
    %3632 = vmatpush1.msra.mxu0 %v2711
    %3633 = vmatprep.subr.mxu0 %v2716
    %3634 = vmatpush1.msra.mxu0 %v2715
    %3635 = vmatprep.subr.mxu0 %v2720
    %3636 = vmatpush1.msra.mxu0 %v2719
    %3637 = vmatprep.subr.mxu0 %v2724
    %3638 = vmatpush1.msra.mxu0 %v2723
    %3639 = vmatprep.subr.mxu0 %v2728
    %3640 = vmatpush1.msra.mxu0 %v2727
    %3641 = vmatprep.subr.mxu0 %v2732
    %3642 = vmatpush1.msra.mxu0 %v2731
    %3643 = vmatprep.subr.mxu0 %v2736
    %3644 = vmatpush1.msra.mxu0 %v2735
    %3645 = vmatprep.subr.mxu0 %v2740
    %3646 = vmatpush1.msra.mxu0 %v2739
    %3647 = vmatprep.subr.mxu0 %v2744
    %3648 = vmatpush1.msra.mxu0 %v2743
    %3649 = vmatprep.subr.mxu0 0.0
    %3650 = vmatpush1.msra.mxu0 0.0
    %3651 = vmatprep.subr.mxu0 0.0
    %3652 = vmatpush1.msra.mxu0 0.0
    %3653 = vmatprep.subr.mxu0 0.0
    %3654 = vmatpush1.msra.mxu0 0.0
    %3655 = vmatprep.subr.mxu0 0.0
    %3656 = vmatpush1.msra.mxu0 0.0
    %3657 = vmatprep.subr.mxu0 0.0
    %3658 = vmatpush1.msra.mxu0 0.0
    %3659 = vmatprep.subr.mxu0 0.0
    %3660 = vmatpush1.msra.mxu0 0.0
    %3661 = vmatprep.subr.mxu0 0.0
    %3662 = vmatpush1.msra.mxu0 0.0
    %3663 = vmatprep.subr.mxu0 0.0
    %3664 = vmatpush1.msra.mxu0 0.0
    %3665 = vmatprep.subr.mxu0 0.0
    %3666 = vmatpush1.msra.mxu0 0.0
    %3667 = vmatprep.subr.mxu0 0.0
    %3668 = vmatpush1.msra.mxu0 0.0
    %3669 = vmatprep.subr.mxu0 0.0
    %3670 = vmatpush1.msra.mxu0 0.0
    %3671 = vmatprep.subr.mxu0 0.0
    %3672 = vmatpush1.msra.mxu0 0.0
    %3673 = vmatprep.subr.mxu0 0.0
    %3674 = vmatpush1.msra.mxu0 0.0
    %3675 = vmatprep.subr.mxu0 0.0
    %3676 = vmatpush1.msra.mxu0 0.0
    %3677 = vmatprep.subr.mxu0 0.0
    %3678 = vmatpush1.msra.mxu0 0.0
    %3679 = vmatprep.subr.mxu0 0.0
    %3680 = vmatpush1.msra.mxu0 0.0
    %3681 = vmatprep.mubr.f32.mxu0 0.0
    %3682 = vmatmul.mubr.f32.gmra.mrb[0].mxu0 %v3612
    %v3683 = vpop.f32.mrb[0].mxu0
    %v3684 = vadd.f32 0.0, %v3683
    %v3685 = vpop.f32.mrb[0].mxu0
    %v3686 = vadd.f32 0.0, %v3685
    %3687 = vdwg.mxu0
    %3688 = vmatprep.subr.mxu0 %v2686
    %3689 = vmatpush1.msra.mxu0 %v2685
    %3690 = vmatprep.subr.mxu0 %v2690
    %3691 = vmatpush1.msra.mxu0 %v2689
    %3692 = vmatprep.subr.mxu0 %v2694
    %3693 = vmatpush1.msra.mxu0 %v2693
    %3694 = vmatprep.subr.mxu0 %v2698
    %3695 = vmatpush1.msra.mxu0 %v2697
    %3696 = vmatprep.subr.mxu0 %v2702
    %3697 = vmatpush1.msra.mxu0 %v2701
    %3698 = vmatprep.subr.mxu0 %v2706
    %3699 = vmatpush1.msra.mxu0 %v2705
    %3700 = vmatprep.subr.mxu0 %v2710
    %3701 = vmatpush1.msra.mxu0 %v2709
    %3702 = vmatprep.subr.mxu0 %v2714
    %3703 = vmatpush1.msra.mxu0 %v2713
    %3704 = vmatprep.subr.mxu0 %v2718
    %3705 = vmatpush1.msra.mxu0 %v2717
    %3706 = vmatprep.subr.mxu0 %v2722
    %3707 = vmatpush1.msra.mxu0 %v2721
    %3708 = vmatprep.subr.mxu0 %v2726
    %3709 = vmatpush1.msra.mxu0 %v2725
    %3710 = vmatprep.subr.mxu0 %v2730
    %3711 = vmatpush1.msra.mxu0 %v2729
    %3712 = vmatprep.subr.mxu0 %v2734
    %3713 = vmatpush1.msra.mxu0 %v2733
    %3714 = vmatprep.subr.mxu0 %v2738
    %3715 = vmatpush1.msra.mxu0 %v2737
    %3716 = vmatprep.subr.mxu0 %v2742
    %3717 = vmatpush1.msra.mxu0 %v2741
    %3718 = vmatprep.subr.mxu0 %v2746
    %3719 = vmatpush1.msra.mxu0 %v2745
    %3720 = vmatprep.subr.mxu0 0.0
    %3721 = vmatpush1.msra.mxu0 0.0
    %3722 = vmatprep.subr.mxu0 0.0
    %3723 = vmatpush1.msra.mxu0 0.0
    %3724 = vmatprep.subr.mxu0 0.0
    %3725 = vmatpush1.msra.mxu0 0.0
    %3726 = vmatprep.subr.mxu0 0.0
    %3727 = vmatpush1.msra.mxu0 0.0
    %3728 = vmatprep.subr.mxu0 0.0
    %3729 = vmatpush1.msra.mxu0 0.0
    %3730 = vmatprep.subr.mxu0 0.0
    %3731 = vmatpush1.msra.mxu0 0.0
    %3732 = vmatprep.subr.mxu0 0.0
    %3733 = vmatpush1.msra.mxu0 0.0
    %3734 = vmatprep.subr.mxu0 0.0
    %3735 = vmatpush1.msra.mxu0 0.0
    %3736 = vmatprep.subr.mxu0 0.0
    %3737 = vmatpush1.msra.mxu0 0.0
    %3738 = vmatprep.subr.mxu0 0.0
    %3739 = vmatpush1.msra.mxu0 0.0
    %3740 = vmatprep.subr.mxu0 0.0
    %3741 = vmatpush1.msra.mxu0 0.0
    %3742 = vmatprep.subr.mxu0 0.0
    %3743 = vmatpush1.msra.mxu0 0.0
    %3744 = vmatprep.subr.mxu0 0.0
    %3745 = vmatpush1.msra.mxu0 0.0
    %3746 = vmatprep.subr.mxu0 0.0
    %3747 = vmatpush1.msra.mxu0 0.0
    %3748 = vmatprep.subr.mxu0 0.0
    %3749 = vmatpush1.msra.mxu0 0.0
    %3750 = vmatprep.subr.mxu0 0.0
    %3751 = vmatpush1.msra.mxu0 0.0
    %3752 = vmatprep.mubr.f32.mxu0 0.0
    %3753 = vmatmul.mubr.f32.gmra.mrb[0].mxu0 %v3612
    %v3754 = vpop.f32.mrb[0].mxu0
    %v3755 = vadd.f32 0.0, %v3754
    %v3756 = vpop.f32.mrb[0].mxu0
    %v3757 = vadd.f32 0.0, %v3756
    %3758 = vdwg.mxu0
    %v3759 = vadd.f32 %v3613, %v3684
    %v3760 = vadd.f32 %v3614, %v3686
    %v3761 = vadd.f32 %v3615, %v3755
    %v3762 = vadd.f32 %v3616, %v3757
    %v3763 = vxor.u32 %v3759, 2147483648
    %v3764 = vmul.f32 %v3763, 1.442695
    %v3765 = vpow.pop %v3764
    %v3766 = vadd.f32 %v3765, 1.0
    %v3767 = vrcp.pop %v3766
    %v3768 = vmul.f32 1.0, %v3767
    %v3769 = vxor.u32 %v3760, 2147483648
    %v3770 = vmul.f32 %v3769, 1.442695
    %v3771 = vpow.pop %v3770
    %v3772 = vadd.f32 %v3771, 1.0
    %v3773 = vrcp.pop %v3772
    %v3774 = vmul.f32 1.0, %v3773
    %v3775 = vtanh.pop %v3761
    %v3776 = vxor.u32 %v3762, 2147483648
    %v3777 = vmul.f32 %v3776, 1.442695
    %v3778 = vpow.pop %v3777
    %v3779 = vadd.f32 %v3778, 1.0
    %v3780 = vrcp.pop %v3779
    %v3781 = vmul.f32 1.0, %v3780
    %v3782 = vmul.f32 %v3774, %v3610
    %v3783 = vmul.f32 %v3768, %v3775
    %v3784 = vadd.f32 %v3782, %v3783
    %v3785 = vtanh.pop %v3784
    %v3786 = vmul.f32 %v3781, %v3785
    %v3787 = vld [vmem:[#allocation2 + $0xc0] sm:$0xff]
    %v3788 = vld [vmem:[#allocation2 + $0xc8] sm:$0xff]
    %v3789 = vld [vmem:[#allocation2 + $0xd0] sm:$0xff]
    %v3790 = vld [vmem:[#allocation2 + $0xd8] sm:$0xff]
    %3791 = vmatprep.subr.mxu0 %v2684
    %3792 = vmatpush1.msra.mxu0 %v2683
    %3793 = vmatprep.subr.mxu0 %v2688
    %3794 = vmatpush1.msra.mxu0 %v2687
    %3795 = vmatprep.subr.mxu0 %v2692
    %3796 = vmatpush1.msra.mxu0 %v2691
    %3797 = vmatprep.subr.mxu0 %v2696
    %3798 = vmatpush1.msra.mxu0 %v2695
    %3799 = vmatprep.subr.mxu0 %v2700
    %3800 = vmatpush1.msra.mxu0 %v2699
    %3801 = vmatprep.subr.mxu0 %v2704
    %3802 = vmatpush1.msra.mxu0 %v2703
    %3803 = vmatprep.subr.mxu0 %v2708
    %3804 = vmatpush1.msra.mxu0 %v2707
    %3805 = vmatprep.subr.mxu0 %v2712
    %3806 = vmatpush1.msra.mxu0 %v2711
    %3807 = vmatprep.subr.mxu0 %v2716
    %3808 = vmatpush1.msra.mxu0 %v2715
    %3809 = vmatprep.subr.mxu0 %v2720
    %3810 = vmatpush1.msra.mxu0 %v2719
    %3811 = vmatprep.subr.mxu0 %v2724
    %3812 = vmatpush1.msra.mxu0 %v2723
    %3813 = vmatprep.subr.mxu0 %v2728
    %3814 = vmatpush1.msra.mxu0 %v2727
    %3815 = vmatprep.subr.mxu0 %v2732
    %3816 = vmatpush1.msra.mxu0 %v2731
    %3817 = vmatprep.subr.mxu0 %v2736
    %3818 = vmatpush1.msra.mxu0 %v2735
    %3819 = vmatprep.subr.mxu0 %v2740
    %3820 = vmatpush1.msra.mxu0 %v2739
    %3821 = vmatprep.subr.mxu0 %v2744
    %3822 = vmatpush1.msra.mxu0 %v2743
    %3823 = vmatprep.subr.mxu0 0.0
    %3824 = vmatpush1.msra.mxu0 0.0
    %3825 = vmatprep.subr.mxu0 0.0
    %3826 = vmatpush1.msra.mxu0 0.0
    %3827 = vmatprep.subr.mxu0 0.0
    %3828 = vmatpush1.msra.mxu0 0.0
    %3829 = vmatprep.subr.mxu0 0.0
    %3830 = vmatpush1.msra.mxu0 0.0
    %3831 = vmatprep.subr.mxu0 0.0
    %3832 = vmatpush1.msra.mxu0 0.0
    %3833 = vmatprep.subr.mxu0 0.0
    %3834 = vmatpush1.msra.mxu0 0.0
    %3835 = vmatprep.subr.mxu0 0.0
    %3836 = vmatpush1.msra.mxu0 0.0
    %3837 = vmatprep.subr.mxu0 0.0
    %3838 = vmatpush1.msra.mxu0 0.0
    %3839 = vmatprep.subr.mxu0 0.0
    %3840 = vmatpush1.msra.mxu0 0.0
    %3841 = vmatprep.subr.mxu0 0.0
    %3842 = vmatpush1.msra.mxu0 0.0
    %3843 = vmatprep.subr.mxu0 0.0
    %3844 = vmatpush1.msra.mxu0 0.0
    %3845 = vmatprep.subr.mxu0 0.0
    %3846 = vmatpush1.msra.mxu0 0.0
    %3847 = vmatprep.subr.mxu0 0.0
    %3848 = vmatpush1.msra.mxu0 0.0
    %3849 = vmatprep.subr.mxu0 0.0
    %3850 = vmatpush1.msra.mxu0 0.0
    %3851 = vmatprep.subr.mxu0 0.0
    %3852 = vmatpush1.msra.mxu0 0.0
    %3853 = vmatprep.subr.mxu0 0.0
    %3854 = vmatpush1.msra.mxu0 0.0
    %3855 = vmatprep.mubr.f32.mxu0 0.0
    %3856 = vmatmul.mubr.f32.gmra.mrb[0].mxu0 %v3786
    %v3857 = vpop.f32.mrb[0].mxu0
    %v3858 = vadd.f32 0.0, %v3857
    %v3859 = vpop.f32.mrb[0].mxu0
    %v3860 = vadd.f32 0.0, %v3859
    %3861 = vdwg.mxu0
    %3862 = vmatprep.subr.mxu0 %v2686
    %3863 = vmatpush1.msra.mxu0 %v2685
    %3864 = vmatprep.subr.mxu0 %v2690
    %3865 = vmatpush1.msra.mxu0 %v2689
    %3866 = vmatprep.subr.mxu0 %v2694
    %3867 = vmatpush1.msra.mxu0 %v2693
    %3868 = vmatprep.subr.mxu0 %v2698
    %3869 = vmatpush1.msra.mxu0 %v2697
    %3870 = vmatprep.subr.mxu0 %v2702
    %3871 = vmatpush1.msra.mxu0 %v2701
    %3872 = vmatprep.subr.mxu0 %v2706
    %3873 = vmatpush1.msra.mxu0 %v2705
    %3874 = vmatprep.subr.mxu0 %v2710
    %3875 = vmatpush1.msra.mxu0 %v2709
    %3876 = vmatprep.subr.mxu0 %v2714
    %3877 = vmatpush1.msra.mxu0 %v2713
    %3878 = vmatprep.subr.mxu0 %v2718
    %3879 = vmatpush1.msra.mxu0 %v2717
    %3880 = vmatprep.subr.mxu0 %v2722
    %3881 = vmatpush1.msra.mxu0 %v2721
    %3882 = vmatprep.subr.mxu0 %v2726
    %3883 = vmatpush1.msra.mxu0 %v2725
    %3884 = vmatprep.subr.mxu0 %v2730
    %3885 = vmatpush1.msra.mxu0 %v2729
    %3886 = vmatprep.subr.mxu0 %v2734
    %3887 = vmatpush1.msra.mxu0 %v2733
    %3888 = vmatprep.subr.mxu0 %v2738
    %3889 = vmatpush1.msra.mxu0 %v2737
    %3890 = vmatprep.subr.mxu0 %v2742
    %3891 = vmatpush1.msra.mxu0 %v2741
    %3892 = vmatprep.subr.mxu0 %v2746
    %3893 = vmatpush1.msra.mxu0 %v2745
    %3894 = vmatprep.subr.mxu0 0.0
    %3895 = vmatpush1.msra.mxu0 0.0
    %3896 = vmatprep.subr.mxu0 0.0
    %3897 = vmatpush1.msra.mxu0 0.0
    %3898 = vmatprep.subr.mxu0 0.0
    %3899 = vmatpush1.msra.mxu0 0.0
    %3900 = vmatprep.subr.mxu0 0.0
    %3901 = vmatpush1.msra.mxu0 0.0
    %3902 = vmatprep.subr.mxu0 0.0
    %3903 = vmatpush1.msra.mxu0 0.0
    %3904 = vmatprep.subr.mxu0 0.0
    %3905 = vmatpush1.msra.mxu0 0.0
    %3906 = vmatprep.subr.mxu0 0.0
    %3907 = vmatpush1.msra.mxu0 0.0
    %3908 = vmatprep.subr.mxu0 0.0
    %3909 = vmatpush1.msra.mxu0 0.0
    %3910 = vmatprep.subr.mxu0 0.0
    %3911 = vmatpush1.msra.mxu0 0.0
    %3912 = vmatprep.subr.mxu0 0.0
    %3913 = vmatpush1.msra.mxu0 0.0
    %3914 = vmatprep.subr.mxu0 0.0
    %3915 = vmatpush1.msra.mxu0 0.0
    %3916 = vmatprep.subr.mxu0 0.0
    %3917 = vmatpush1.msra.mxu0 0.0
    %3918 = vmatprep.subr.mxu0 0.0
    %3919 = vmatpush1.msra.mxu0 0.0
    %3920 = vmatprep.subr.mxu0 0.0
    %3921 = vmatpush1.msra.mxu0 0.0
    %3922 = vmatprep.subr.mxu0 0.0
    %3923 = vmatpush1.msra.mxu0 0.0
    %3924 = vmatprep.subr.mxu0 0.0
    %3925 = vmatpush1.msra.mxu0 0.0
    %3926 = vmatprep.mubr.f32.mxu0 0.0
    %3927 = vmatmul.mubr.f32.gmra.mrb[0].mxu0 %v3786
    %v3928 = vpop.f32.mrb[0].mxu0
    %v3929 = vadd.f32 0.0, %v3928
    %v3930 = vpop.f32.mrb[0].mxu0
    %v3931 = vadd.f32 0.0, %v3930
    %3932 = vdwg.mxu0
    %v3933 = vadd.f32 %v3787, %v3858
    %v3934 = vadd.f32 %v3788, %v3860
    %v3935 = vadd.f32 %v3789, %v3929
    %v3936 = vadd.f32 %v3790, %v3931
    %v3937 = vxor.u32 %v3933, 2147483648
    %v3938 = vmul.f32 %v3937, 1.442695
    %v3939 = vpow.pop %v3938
    %v3940 = vadd.f32 %v3939, 1.0
    %v3941 = vrcp.pop %v3940
    %v3942 = vmul.f32 1.0, %v3941
    %v3943 = vxor.u32 %v3934, 2147483648
    %v3944 = vmul.f32 %v3943, 1.442695
    %v3945 = vpow.pop %v3944
    %v3946 = vadd.f32 %v3945, 1.0
    %v3947 = vrcp.pop %v3946
    %v3948 = vmul.f32 1.0, %v3947
    %v3949 = vtanh.pop %v3935
    %v3950 = vxor.u32 %v3936, 2147483648
    %v3951 = vmul.f32 %v3950, 1.442695
    %v3952 = vpow.pop %v3951
    %v3953 = vadd.f32 %v3952, 1.0
    %v3954 = vrcp.pop %v3953
    %v3955 = vmul.f32 1.0, %v3954
    %v3956 = vmul.f32 %v3948, %v3784
    %v3957 = vmul.f32 %v3942, %v3949
    %v3958 = vadd.f32 %v3956, %v3957
    %v3959 = vtanh.pop %v3958
    %v3960 = vmul.f32 %v3955, %v3959
    %v3961 = vld [vmem:[#allocation2 + $0xe0] sm:$0xff]
    %v3962 = vld [vmem:[#allocation2 + $0xe8] sm:$0xff]
    %v3963 = vld [vmem:[#allocation2 + $0xf0] sm:$0xff]
    %v3964 = vld [vmem:[#allocation2 + $0xf8] sm:$0xff]
    %3965 = vmatprep.subr.mxu0 %v2684
    %3966 = vmatpush1.msra.mxu0 %v2683
    %3967 = vmatprep.subr.mxu0 %v2688
    %3968 = vmatpush1.msra.mxu0 %v2687
    %3969 = vmatprep.subr.mxu0 %v2692
    %3970 = vmatpush1.msra.mxu0 %v2691
    %3971 = vmatprep.subr.mxu0 %v2696
    %3972 = vmatpush1.msra.mxu0 %v2695
    %3973 = vmatprep.subr.mxu0 %v2700
    %3974 = vmatpush1.msra.mxu0 %v2699
    %3975 = vmatprep.subr.mxu0 %v2704
    %3976 = vmatpush1.msra.mxu0 %v2703
    %3977 = vmatprep.subr.mxu0 %v2708
    %3978 = vmatpush1.msra.mxu0 %v2707
    %3979 = vmatprep.subr.mxu0 %v2712
    %3980 = vmatpush1.msra.mxu0 %v2711
    %3981 = vmatprep.subr.mxu0 %v2716
    %3982 = vmatpush1.msra.mxu0 %v2715
    %3983 = vmatprep.subr.mxu0 %v2720
    %3984 = vmatpush1.msra.mxu0 %v2719
    %3985 = vmatprep.subr.mxu0 %v2724
    %3986 = vmatpush1.msra.mxu0 %v2723
    %3987 = vmatprep.subr.mxu0 %v2728
    %3988 = vmatpush1.msra.mxu0 %v2727
    %3989 = vmatprep.subr.mxu0 %v2732
    %3990 = vmatpush1.msra.mxu0 %v2731
    %3991 = vmatprep.subr.mxu0 %v2736
    %3992 = vmatpush1.msra.mxu0 %v2735
    %3993 = vmatprep.subr.mxu0 %v2740
    %3994 = vmatpush1.msra.mxu0 %v2739
    %3995 = vmatprep.subr.mxu0 %v2744
    %3996 = vmatpush1.msra.mxu0 %v2743
    %3997 = vmatprep.subr.mxu0 0.0
    %3998 = vmatpush1.msra.mxu0 0.0
    %3999 = vmatprep.subr.mxu0 0.0
    %4000 = vmatpush1.msra.mxu0 0.0
    %4001 = vmatprep.subr.mxu0 0.0
    %4002 = vmatpush1.msra.mxu0 0.0
    %4003 = vmatprep.subr.mxu0 0.0
    %4004 = vmatpush1.msra.mxu0 0.0
    %4005 = vmatprep.subr.mxu0 0.0
    %4006 = vmatpush1.msra.mxu0 0.0
    %4007 = vmatprep.subr.mxu0 0.0
    %4008 = vmatpush1.msra.mxu0 0.0
    %4009 = vmatprep.subr.mxu0 0.0
    %4010 = vmatpush1.msra.mxu0 0.0
    %4011 = vmatprep.subr.mxu0 0.0
    %4012 = vmatpush1.msra.mxu0 0.0
    %4013 = vmatprep.subr.mxu0 0.0
    %4014 = vmatpush1.msra.mxu0 0.0
    %4015 = vmatprep.subr.mxu0 0.0
    %4016 = vmatpush1.msra.mxu0 0.0
    %4017 = vmatprep.subr.mxu0 0.0
    %4018 = vmatpush1.msra.mxu0 0.0
    %4019 = vmatprep.subr.mxu0 0.0
    %4020 = vmatpush1.msra.mxu0 0.0
    %4021 = vmatprep.subr.mxu0 0.0
    %4022 = vmatpush1.msra.mxu0 0.0
    %4023 = vmatprep.subr.mxu0 0.0
    %4024 = vmatpush1.msra.mxu0 0.0
    %4025 = vmatprep.subr.mxu0 0.0
    %4026 = vmatpush1.msra.mxu0 0.0
    %4027 = vmatprep.subr.mxu0 0.0
    %4028 = vmatpush1.msra.mxu0 0.0
    %4029 = vmatprep.mubr.f32.mxu0 0.0
    %4030 = vmatmul.mubr.f32.gmra.mrb[0].mxu0 %v3960
    %v4031 = vpop.f32.mrb[0].mxu0
    %v4032 = vadd.f32 0.0, %v4031
    %v4033 = vpop.f32.mrb[0].mxu0
    %v4034 = vadd.f32 0.0, %v4033
    %4035 = vdwg.mxu0
    %4036 = vmatprep.subr.mxu0 %v2686
    %4037 = vmatpush1.msra.mxu0 %v2685
    %4038 = vmatprep.subr.mxu0 %v2690
    %4039 = vmatpush1.msra.mxu0 %v2689
    %4040 = vmatprep.subr.mxu0 %v2694
    %4041 = vmatpush1.msra.mxu0 %v2693
    %4042 = vmatprep.subr.mxu0 %v2698
    %4043 = vmatpush1.msra.mxu0 %v2697
    %4044 = vmatprep.subr.mxu0 %v2702
    %4045 = vmatpush1.msra.mxu0 %v2701
    %4046 = vmatprep.subr.mxu0 %v2706
    %4047 = vmatpush1.msra.mxu0 %v2705
    %4048 = vmatprep.subr.mxu0 %v2710
    %4049 = vmatpush1.msra.mxu0 %v2709
    %4050 = vmatprep.subr.mxu0 %v2714
    %4051 = vmatpush1.msra.mxu0 %v2713
    %4052 = vmatprep.subr.mxu0 %v2718
    %4053 = vmatpush1.msra.mxu0 %v2717
    %4054 = vmatprep.subr.mxu0 %v2722
    %4055 = vmatpush1.msra.mxu0 %v2721
    %4056 = vmatprep.subr.mxu0 %v2726
    %4057 = vmatpush1.msra.mxu0 %v2725
    %4058 = vmatprep.subr.mxu0 %v2730
    %4059 = vmatpush1.msra.mxu0 %v2729
    %4060 = vmatprep.subr.mxu0 %v2734
    %4061 = vmatpush1.msra.mxu0 %v2733
    %4062 = vmatprep.subr.mxu0 %v2738
    %4063 = vmatpush1.msra.mxu0 %v2737
    %4064 = vmatprep.subr.mxu0 %v2742
    %4065 = vmatpush1.msra.mxu0 %v2741
    %4066 = vmatprep.subr.mxu0 %v2746
    %4067 = vmatpush1.msra.mxu0 %v2745
    %4068 = vmatprep.subr.mxu0 0.0
    %4069 = vmatpush1.msra.mxu0 0.0
    %4070 = vmatprep.subr.mxu0 0.0
    %4071 = vmatpush1.msra.mxu0 0.0
    %4072 = vmatprep.subr.mxu0 0.0
    %4073 = vmatpush1.msra.mxu0 0.0
    %4074 = vmatprep.subr.mxu0 0.0
    %4075 = vmatpush1.msra.mxu0 0.0
    %4076 = vmatprep.subr.mxu0 0.0
    %4077 = vmatpush1.msra.mxu0 0.0
    %4078 = vmatprep.subr.mxu0 0.0
    %4079 = vmatpush1.msra.mxu0 0.0
    %4080 = vmatprep.subr.mxu0 0.0
    %4081 = vmatpush1.msra.mxu0 0.0
    %4082 = vmatprep.subr.mxu0 0.0
    %4083 = vmatpush1.msra.mxu0 0.0
    %4084 = vmatprep.subr.mxu0 0.0
    %4085 = vmatpush1.msra.mxu0 0.0
    %4086 = vmatprep.subr.mxu0 0.0
    %4087 = vmatpush1.msra.mxu0 0.0
    %4088 = vmatprep.subr.mxu0 0.0
    %4089 = vmatpush1.msra.mxu0 0.0
    %4090 = vmatprep.subr.mxu0 0.0
    %4091 = vmatpush1.msra.mxu0 0.0
    %4092 = vmatprep.subr.mxu0 0.0
    %4093 = vmatpush1.msra.mxu0 0.0
    %4094 = vmatprep.subr.mxu0 0.0
    %4095 = vmatpush1.msra.mxu0 0.0
    %4096 = vmatprep.subr.mxu0 0.0
    %4097 = vmatpush1.msra.mxu0 0.0
    %4098 = vmatprep.subr.mxu0 0.0
    %4099 = vmatpush1.msra.mxu0 0.0
    %4100 = vmatprep.mubr.f32.mxu0 0.0
    %4101 = vmatmul.mubr.f32.gmra.mrb[0].mxu0 %v3960
    %v4102 = vpop.f32.mrb[0].mxu0
    %v4103 = vadd.f32 0.0, %v4102
    %v4104 = vpop.f32.mrb[0].mxu0
    %v4105 = vadd.f32 0.0, %v4104
    %4106 = vdwg.mxu0
    %v4107 = vadd.f32 %v3961, %v4032
    %v4108 = vadd.f32 %v3962, %v4034
    %v4109 = vadd.f32 %v3963, %v4103
    %v4110 = vadd.f32 %v3964, %v4105
    %v4111 = vxor.u32 %v4107, 2147483648
    %v4112 = vmul.f32 %v4111, 1.442695
    %v4113 = vpow.pop %v4112
    %v4114 = vadd.f32 %v4113, 1.0
    %v4115 = vrcp.pop %v4114
    %v4116 = vmul.f32 1.0, %v4115
    %v4117 = vxor.u32 %v4108, 2147483648
    %v4118 = vmul.f32 %v4117, 1.442695
    %v4119 = vpow.pop %v4118
    %v4120 = vadd.f32 %v4119, 1.0
    %v4121 = vrcp.pop %v4120
    %v4122 = vmul.f32 1.0, %v4121
    %v4123 = vtanh.pop %v4109
    %v4124 = vxor.u32 %v4110, 2147483648
    %v4125 = vmul.f32 %v4124, 1.442695
    %v4126 = vpow.pop %v4125
    %v4127 = vadd.f32 %v4126, 1.0
    %v4128 = vrcp.pop %v4127
    %v4129 = vmul.f32 1.0, %v4128
    %v4130 = vmul.f32 %v4122, %v3958
    %v4131 = vmul.f32 %v4116, %v4123
    %v4132 = vadd.f32 %v4130, %v4131
    %v4133 = vtanh.pop %v4132
    %v4134 = vmul.f32 %v4129, %v4133
    %v4135 = vld [vmem:[#allocation9] sm:$0xff]
    %v4136 = vld [vmem:[#allocation9 + $0x8] sm:$0xff]
    %v4137 = vld [vmem:[#allocation9 + $0x10] sm:$0xff]
    %v4138 = vld [vmem:[#allocation9 + $0x18] sm:$0xff]
    %v4139 = vld [vmem:[#allocation9 + $0x20] sm:$0xff]
    %v4140 = vld [vmem:[#allocation9 + $0x28] sm:$0xff]
    %v4141 = vld [vmem:[#allocation9 + $0x30] sm:$0xff]
    %v4142 = vld [vmem:[#allocation9 + $0x38] sm:$0xff]
    %v4143 = vld [vmem:[#allocation9 + $0x40] sm:$0xff]
    %v4144 = vld [vmem:[#allocation9 + $0x48] sm:$0xff]
    %v4145 = vld [vmem:[#allocation9 + $0x50] sm:$0xff]
    %v4146 = vld [vmem:[#allocation9 + $0x58] sm:$0xff]
    %v4147 = vld [vmem:[#allocation9 + $0x60] sm:$0xff]
    %v4148 = vld [vmem:[#allocation9 + $0x68] sm:$0xff]
    %v4149 = vld [vmem:[#allocation9 + $0x70] sm:$0xff]
    %v4150 = vld [vmem:[#allocation9 + $0x78] sm:$0xff]
    %v4151 = vld [vmem:[%s8] sm:$0x1]
    %v4153 = vlaneseq
    %v4154 = vshrl.u32 %v4153, 7
    %v4155 = vsub.s32 0, %v4154
    %v4156 = vrot.slane %v4151, %v4155
    %4158 = vmatprep.subr.mxu0 0.0
    %4159 = vmatpush1.msra.mxu0 %v4135
    %4160 = vmatprep.subr.mxu0 0.0
    %4161 = vmatpush1.msra.mxu0 %v4136
    %4162 = vmatprep.subr.mxu0 0.0
    %4163 = vmatpush1.msra.mxu0 %v4137
    %4164 = vmatprep.subr.mxu0 0.0
    %4165 = vmatpush1.msra.mxu0 %v4138
    %4166 = vmatprep.subr.mxu0 0.0
    %4167 = vmatpush1.msra.mxu0 %v4139
    %4168 = vmatprep.subr.mxu0 0.0
    %4169 = vmatpush1.msra.mxu0 %v4140
    %4170 = vmatprep.subr.mxu0 0.0
    %4171 = vmatpush1.msra.mxu0 %v4141
    %4172 = vmatprep.subr.mxu0 0.0
    %4173 = vmatpush1.msra.mxu0 %v4142
    %4174 = vmatprep.subr.mxu0 0.0
    %4175 = vmatpush1.msra.mxu0 %v4143
    %4176 = vmatprep.subr.mxu0 0.0
    %4177 = vmatpush1.msra.mxu0 %v4144
    %4178 = vmatprep.subr.mxu0 0.0
    %4179 = vmatpush1.msra.mxu0 %v4145
    %4180 = vmatprep.subr.mxu0 0.0
    %4181 = vmatpush1.msra.mxu0 %v4146
    %4182 = vmatprep.subr.mxu0 0.0
    %4183 = vmatpush1.msra.mxu0 %v4147
    %4184 = vmatprep.subr.mxu0 0.0
    %4185 = vmatpush1.msra.mxu0 %v4148
    %4186 = vmatprep.subr.mxu0 0.0
    %4187 = vmatpush1.msra.mxu0 %v4149
    %4188 = vmatprep.subr.mxu0 0.0
    %4189 = vmatpush1.msra.mxu0 %v4150
    %4190 = vmatprep.subr.mxu0 0.0
    %4191 = vmatpush1.msra.mxu0 0.0
    %4192 = vmatprep.subr.mxu0 0.0
    %4193 = vmatpush1.msra.mxu0 0.0
    %4194 = vmatprep.subr.mxu0 0.0
    %4195 = vmatpush1.msra.mxu0 0.0
    %4196 = vmatprep.subr.mxu0 0.0
    %4197 = vmatpush1.msra.mxu0 0.0
    %4198 = vmatprep.subr.mxu0 0.0
    %4199 = vmatpush1.msra.mxu0 0.0
    %4200 = vmatprep.subr.mxu0 0.0
    %4201 = vmatpush1.msra.mxu0 0.0
    %4202 = vmatprep.subr.mxu0 0.0
    %4203 = vmatpush1.msra.mxu0 0.0
    %4204 = vmatprep.subr.mxu0 0.0
    %4205 = vmatpush1.msra.mxu0 0.0
    %4206 = vmatprep.subr.mxu0 0.0
    %4207 = vmatpush1.msra.mxu0 0.0
    %4208 = vmatprep.subr.mxu0 0.0
    %4209 = vmatpush1.msra.mxu0 0.0
    %4210 = vmatprep.subr.mxu0 0.0
    %4211 = vmatpush1.msra.mxu0 0.0
    %4212 = vmatprep.subr.mxu0 0.0
    %4213 = vmatpush1.msra.mxu0 0.0
    %4214 = vmatprep.subr.mxu0 0.0
    %4215 = vmatpush1.msra.mxu0 0.0
    %4216 = vmatprep.subr.mxu0 0.0
    %4217 = vmatpush1.msra.mxu0 0.0
    %4218 = vmatprep.subr.mxu0 0.0
    %4219 = vmatpush1.msra.mxu0 0.0
    %4220 = vmatprep.subr.mxu0 0.0
    %4221 = vmatpush1.msra.mxu0 0.0
    %4222 = vmatprep.mubr.f32.mxu0 0.0
    %4223 = vmatmul.mubr.f32.gmra.mrb[0].mxu0 %v4134
    %v4224 = vpop.f32.mrb[0].mxu0
    %v4225 = vadd.f32 %v4156, %v4224
    %v4226 = vpop.f32.mrb[0].mxu0
    %4227 = vdwg.mxu0
    %4228 = vst [vmem:[%s9] sm:$0xff] %v4225
    // Predicated region
    $region54: #{lstm_model_forward.1} parent=1 // pred_check
      _
    $region55: #{lstm_model_forward.1} parent=1 // pred_check_branch
      %4230 = sbr.rel (0) target = $region57
    $region56: #{lstm_model_forward.1} parent=1 // pred_region
      _
    $region57: #{lstm_model_forward.1} parent=1 // pred_fallthru
      _
    // Predicated region
    $region58: #{lstm_model_forward.1} parent=1 // pred_check
      _
    $region59: #{lstm_model_forward.1} parent=1 // pred_check_branch
      %4232 = sbr.rel (0) target = $region61
    $region60: #{lstm_model_forward.1} parent=1 // pred_region
      _
    $region61: #{lstm_model_forward.1} parent=1 // pred_fallthru
      _
    %4233 = vsyncpa [#allocation5], 1
    %4234 = vsyncpa [#allocation7], 1
    %4235 = vsyncpa [#allocation10], 1

</llo_original>
